<compile_context>
chip_gen: v7x
topology: tpu7x:2x2x1
jax: 0.10.0
libtpu: 0.0.40
codegen_flags: <defaults>
</compile_context>

<pallas_src>
import jax
import jax.numpy as jnp
from jax import lax
from jax.experimental import pallas as pl
from jax.experimental.pallas import tpu as pltpu

LN_EPS = 1e-5     # nn.LayerNorm default
GLN_EPS = 1e-8    # SpEx+ global layer norm


# ---------------------------------------------------------------------------
# in-kernel helpers (operate on loaded (channels, time) values)
# ---------------------------------------------------------------------------
def _prelu(z, a):
    return jnp.where(z >= 0, z, a * z)


def _gln(z, g, b):
    # global layer norm: normalize over channels *and* time, per sample
    mu = jnp.mean(z)
    var = jnp.mean((z - mu) ** 2)
    return (z - mu) * lax.rsqrt(var + GLN_EPS) * g + b


# ---------------------------------------------------------------------------
# BlockSpec helpers
# ---------------------------------------------------------------------------
def _wspec(shape):
    zeros = (0,) * len(shape)
    return pl.BlockSpec(shape, lambda b: zeros)


# ---------------------------------------------------------------------------
# fused forward (first call of the PyTorch module: cache defaults to zeros)
# ---------------------------------------------------------------------------
def speaker_extractor_forward(params, x, ref, cache=None):
    B, C, T = x.shape
    n_blocks, H, _ = params["win"].shape
    n_stacked, _, M = params["wmem"].shape
    n_tcn = n_blocks // n_stacked
    Cc = min(M, C)                       # channels actually stored in the cache update

    if cache is None:
        cache = jnp.zeros((B, n_stacked, M, T), x.dtype)

    # Hoisted / folded parameters (tiny O(C^2) wrapper work, keeps the kernel lean):
    #   rb[b, i] = W0r_i @ ref[b]                    -> (B, n_stacked, H, 1)
    #   conv1(LN(x)*g + beta) == (W1 * g^T) @ LN(x) + (W1 @ beta + b1)
    rb = jnp.einsum("ihr,br->bih", params["w0r"], ref).astype(jnp.float32)[..., None]
    w1_eff = params["conv1_w"] * params["ln1_g"].T
    b1_eff = params["conv1_w"] @ params["ln1_b"] + params["conv1_b"]

    def kernel(alpha_ref, x_ref, cache_ref, rb_ref,
               w1_ref, b1_ref,
               win_ref, wmem_ref, b0_ref, g1_ref, be1_ref, dw_ref, db_ref,
               g2_ref, be2_ref, wo_ref, bo_ref, wm_ref, bm_ref,
               out_ref, ncache_ref):
        xx = x_ref[...]                                          # (C, T)

        # ln1: nn.LayerNorm(n_channels) applied per time step (affine folded into conv1)
        mu = jnp.mean(xx, axis=0, keepdims=True)
        var = jnp.mean((xx - mu) ** 2, axis=0, keepdims=True)
        yn = (xx - mu) * lax.rsqrt(var + LN_EPS)
        # conv1 (1x1 conv) with folded LN affine
        y = jnp.dot(w1_ref[...], yn, preferred_element_type=jnp.float32) + b1_ref[...]

        # hoisted once: time indices shared by every depthwise conv mask
        t_idx = lax.broadcasted_iota(jnp.int32, (H, T), 1)

        def depthwise3(z, blk, dil):
            # depthwise Conv1d, kernel_size=3, dilation=dil, 'same' padding
            zm = pltpu.roll(z, shift=dil, axis=1)                # z[:, t - dil]
            zm = jnp.where(t_idx >= dil, zm, 0.0)
            zp = pltpu.roll(z, shift=T - dil, axis=1)            # z[:, t + dil]
            zp = jnp.where(t_idx < T - dil, zp, 0.0)
            return (dw_ref[blk, 0] * zm + dw_ref[blk, 1] * z + dw_ref[blk, 2] * zp
                    + db_ref[blk])

        blk = 0
        for i in range(n_stacked):
            # PyTorch cache side-effect: first min(M, C) channels of the pre-block y
            ncache_ref[i] = y[:Cc, :]
            for j in range(n_tcn):
                a1 = alpha_ref[2 * blk]                          # SMEM scalars
                a2 = alpha_ref[2 * blk + 1]
                z = jnp.dot(win_ref[blk], y,
                            preferred_element_type=jnp.float32) + b0_ref[blk]
                if j == 0:
                    # ref block: split 1x1 conv over [y ; cache ; ref] channels
                    z = z + jnp.dot(wmem_ref[i], cache_ref[i],
                                    preferred_element_type=jnp.float32) + rb_ref[i]
                z = _gln(_prelu(z, a1), g1_ref[blk], be1_ref[blk])
                z = depthwise3(z, blk, 2 ** j)
                z = _gln(_prelu(z, a2), g2_ref[blk], be2_ref[blk])
                o = jnp.dot(wo_ref[blk], z,
                            preferred_element_type=jnp.float32) + bo_ref[blk]
                y = o if j == 0 else y + o       # residual only for standard blocks
                blk += 1

        # mask1 (1x1 conv) -> ReLU -> multiply with original input
        m = jnp.dot(wm_ref[...], y, preferred_element_type=jnp.float32) + bm_ref[...]
        out_ref[...] = xx * jnp.maximum(m, 0.0)

    weight_args = (w1_eff, b1_eff,
                   params["win"], params["wmem"], params["b0"],
                   params["g1"], params["be1"], params["dw"], params["db"],
                   params["g2"], params["be2"], params["wo"], params["bo"],
                   params["mask1_w"], params["mask1_b"])

    in_specs = ([pl.BlockSpec(memory_space=pltpu.MemorySpace.SMEM),          # alphas
                 pl.BlockSpec((None, C, T), lambda b: (b, 0, 0)),            # x
                 pl.BlockSpec((None, n_stacked, M, T), lambda b: (b, 0, 0, 0)),  # cache
                 pl.BlockSpec((None, n_stacked, H, 1), lambda b: (b, 0, 0, 0))]  # rb
                + [_wspec(a.shape) for a in weight_args])

    out_shape = (jax.ShapeDtypeStruct((B, C, T), x.dtype),
                 jax.ShapeDtypeStruct((B, n_stacked, Cc, T), x.dtype))
    out_specs = (pl.BlockSpec((None, C, T), lambda b: (b, 0, 0)),
                 pl.BlockSpec((None, n_stacked, Cc, T), lambda b: (b, 0, 0, 0)))

    out, new_cache = pl.pallas_call(
        kernel,
        out_shape=out_shape,
        grid=(B,),
        in_specs=in_specs,
        out_specs=out_specs,
        compiler_params=pltpu.CompilerParams(dimension_semantics=("parallel",)),
    )(params["alpha"], x, cache, rb, *weight_args)
    return out, new_cache


# ---------------------------------------------------------------------------
# deterministic parameter initialization (packed layouts for the fused kernel)
# ---------------------------------------------------------------------------
def init_params(key, C, H, R, n_stacked, n_tcn, M):
    n_blocks = n_stacked * n_tcn
    keys = iter(jax.random.split(key, 64))

    def nrm(shape, fan_in):
        return jax.random.normal(next(keys), shape, jnp.float32) / jnp.sqrt(float(fan_in))

    def gammas(shape):
        return 1.0 + 0.1 * jax.random.normal(next(keys), shape, jnp.float32)

    def betas(shape):
        return 0.1 * jax.random.normal(next(keys), shape, jnp.float32)

    return {
        "ln1_g": gammas((C, 1)), "ln1_b": betas((C, 1)),
        "conv1_w": nrm((C, C), C), "conv1_b": nrm((C, 1), C),
        "mask1_w": nrm((C, C), C), "mask1_b": nrm((C, 1), C),
        # per-block 1x1 input conv acting on the C-channel activation
        "win": nrm((n_blocks, H, C), C + M),
        # ref-block-only extra weights: memory (cache) channels and speaker embedding
        "wmem": nrm((n_stacked, H, M), C + M + R),
        "w0r": nrm((n_stacked, H, R), C + M + R),
        "b0": nrm((n_blocks, H, 1), C),
        "g1": gammas((n_blocks, H, 1)), "be1": betas((n_blocks, H, 1)),
        "dw": nrm((n_blocks, 3, H, 1), 3),      # tap-major depthwise taps
        "db": nrm((n_blocks, H, 1), 3),
        "g2": gammas((n_blocks, H, 1)), "be2": betas((n_blocks, H, 1)),
        "wo": nrm((n_blocks, C, H), H), "bo": nrm((n_blocks, C, 1), H),
        # PReLU alphas (nn.PReLU default: single shared parameter), SMEM scalars
        "alpha": jnp.full((2 * n_blocks,), 0.25, jnp.float32),
    }


# ---------------------------------------------------------------------------
if __name__ == "__main__":
    B, C, T = 2, 16, 128          # batch, n_channels, time frames
    H = 32                        # hidden_channels
    R = 16                        # out_channels (speaker embedding / ref dim)
    n_stacked, n_tcn = 2, 3
    M = (2 ** n_tcn) * n_tcn      # default memory_size = 24

    key = jax.random.PRNGKey(0)
    kx, kr, kp = jax.random.split(key, 3)
    x = jax.random.normal(kx, (B, C, T), jnp.float32)
    ref = jax.random.normal(kr, (B, R), jnp.float32)
    params = init_params(kp, C, H, R, n_stacked, n_tcn, M)

    out, new_cache = speaker_extractor_forward(params, x, ref)
    out = jax.block_until_ready(out)
    assert out.shape == (B, C, T) and out.dtype == jnp.float32
    assert new_cache.shape == (B, n_stacked, min(M, C), T)
    print("KERNEL_OK")
</pallas_src>

<mosaic_0001>
module attributes {stable_mosaic.version = 11 : i64} {
  func.func @kernel(%arg0: i32, %arg1: memref<12xf32, #tpu.memory_space<smem>>, %arg2: memref<1x16x128xf32, #tpu.memory_space<vmem>>, %arg3: memref<1x2x24x128xf32, #tpu.memory_space<vmem>>, %arg4: memref<1x2x32x1xf32, #tpu.memory_space<vmem>>, %arg5: memref<16x16xf32, #tpu.memory_space<vmem>>, %arg6: memref<16x1xf32, #tpu.memory_space<vmem>>, %arg7: memref<6x32x16xf32, #tpu.memory_space<vmem>>, %arg8: memref<2x32x24xf32, #tpu.memory_space<vmem>>, %arg9: memref<6x32x1xf32, #tpu.memory_space<vmem>>, %arg10: memref<6x32x1xf32, #tpu.memory_space<vmem>>, %arg11: memref<6x32x1xf32, #tpu.memory_space<vmem>>, %arg12: memref<6x3x32x1xf32, #tpu.memory_space<vmem>>, %arg13: memref<6x32x1xf32, #tpu.memory_space<vmem>>, %arg14: memref<6x32x1xf32, #tpu.memory_space<vmem>>, %arg15: memref<6x32x1xf32, #tpu.memory_space<vmem>>, %arg16: memref<6x16x32xf32, #tpu.memory_space<vmem>>, %arg17: memref<6x16x1xf32, #tpu.memory_space<vmem>>, %arg18: memref<16x16xf32, #tpu.memory_space<vmem>>, %arg19: memref<16x1xf32, #tpu.memory_space<vmem>>, %arg20: memref<1x16x128xf32, #tpu.memory_space<vmem>>, %arg21: memref<1x2x16x128xf32, #tpu.memory_space<vmem>>) attributes {dimension_semantics = [#tpu.dimension_semantics<parallel>], iteration_bounds = array<i64: 2>, scalar_prefetch = 0 : i64, scratch_operands = 0 : i64, tpu.core_type = #tpu.core_type<tc>, window_params = [{transform_indices = @transform_0, window_bounds = array<i64: 12>}, {transform_indices = @transform_1, window_bounds = array<i64: 1, 16, 128>}, {transform_indices = @transform_2, window_bounds = array<i64: 1, 2, 24, 128>}, {transform_indices = @transform_3, window_bounds = array<i64: 1, 2, 32, 1>}, {pipeline_mode = #tpu.pipeline_mode<synchronous>, transform_indices = @transform_4, window_bounds = array<i64: 16, 16>}, {pipeline_mode = #tpu.pipeline_mode<synchronous>, transform_indices = @transform_5, window_bounds = array<i64: 16, 1>}, {pipeline_mode = #tpu.pipeline_mode<synchronous>, transform_indices = @transform_6, window_bounds = array<i64: 6, 32, 16>}, {pipeline_mode = #tpu.pipeline_mode<synchronous>, transform_indices = @transform_7, window_bounds = array<i64: 2, 32, 24>}, {pipeline_mode = #tpu.pipeline_mode<synchronous>, transform_indices = @transform_8, window_bounds = array<i64: 6, 32, 1>}, {pipeline_mode = #tpu.pipeline_mode<synchronous>, transform_indices = @transform_9, window_bounds = array<i64: 6, 32, 1>}, {pipeline_mode = #tpu.pipeline_mode<synchronous>, transform_indices = @transform_10, window_bounds = array<i64: 6, 32, 1>}, {pipeline_mode = #tpu.pipeline_mode<synchronous>, transform_indices = @transform_11, window_bounds = array<i64: 6, 3, 32, 1>}, {pipeline_mode = #tpu.pipeline_mode<synchronous>, transform_indices = @transform_12, window_bounds = array<i64: 6, 32, 1>}, {pipeline_mode = #tpu.pipeline_mode<synchronous>, transform_indices = @transform_13, window_bounds = array<i64: 6, 32, 1>}, {pipeline_mode = #tpu.pipeline_mode<synchronous>, transform_indices = @transform_14, window_bounds = array<i64: 6, 32, 1>}, {pipeline_mode = #tpu.pipeline_mode<synchronous>, transform_indices = @transform_15, window_bounds = array<i64: 6, 16, 32>}, {pipeline_mode = #tpu.pipeline_mode<synchronous>, transform_indices = @transform_16, window_bounds = array<i64: 6, 16, 1>}, {pipeline_mode = #tpu.pipeline_mode<synchronous>, transform_indices = @transform_17, window_bounds = array<i64: 16, 16>}, {pipeline_mode = #tpu.pipeline_mode<synchronous>, transform_indices = @transform_18, window_bounds = array<i64: 16, 1>}, {transform_indices = @transform_19, window_bounds = array<i64: 1, 16, 128>}, {transform_indices = @transform_20, window_bounds = array<i64: 1, 2, 16, 128>}]} {
    %c0 = arith.constant 0 : index
    %c0_0 = arith.constant 0 : index
    %c0_1 = arith.constant 0 : index
    %0 = vector.load %arg2[%c0, %c0_0, %c0_1] : memref<1x16x128xf32, #tpu.memory_space<vmem>>, vector<1x16x128xf32>
    %1 = vector.shape_cast %0 : vector<1x16x128xf32> to vector<16x128xf32>
    %cst = arith.constant dense<0.000000e+00> : vector<128xf32>
    %2 = vector.multi_reduction <add>, %1, %cst [0] : vector<16x128xf32> to vector<128xf32>
    %3 = vector.shape_cast %2 : vector<128xf32> to vector<1x128xf32>
    %cst_2 = arith.constant 1.600000e+01 : f32
    %4 = vector.broadcast %cst_2 : f32 to vector<1x128xf32>
    %5 = arith.divf %3, %4 : vector<1x128xf32>
    %6 = vector.broadcast %5 : vector<1x128xf32> to vector<16x128xf32>
    %7 = arith.subf %1, %6 : vector<16x128xf32>
    %8 = arith.mulf %7, %7 : vector<16x128xf32>
    %cst_3 = arith.constant dense<0.000000e+00> : vector<128xf32>
    %9 = vector.multi_reduction <add>, %8, %cst_3 [0] : vector<16x128xf32> to vector<128xf32>
    %10 = vector.shape_cast %9 : vector<128xf32> to vector<1x128xf32>
    %cst_4 = arith.constant 1.600000e+01 : f32
    %11 = vector.broadcast %cst_4 : f32 to vector<1x128xf32>
    %12 = arith.divf %10, %11 : vector<1x128xf32>
    %13 = vector.broadcast %5 : vector<1x128xf32> to vector<16x128xf32>
    %14 = arith.subf %1, %13 : vector<16x128xf32>
    %cst_5 = arith.constant 9.99999974E-6 : f32
    %15 = vector.broadcast %cst_5 : f32 to vector<1x128xf32>
    %16 = arith.addf %12, %15 : vector<1x128xf32>
    %17 = math.rsqrt %16 : vector<1x128xf32>
    %18 = vector.broadcast %17 : vector<1x128xf32> to vector<16x128xf32>
    %19 = arith.mulf %14, %18 : vector<16x128xf32>
    %c0_6 = arith.constant 0 : index
    %c0_7 = arith.constant 0 : index
    %20 = vector.load %arg5[%c0_6, %c0_7] : memref<16x16xf32, #tpu.memory_space<vmem>>, vector<16x16xf32>
    %cst_8 = arith.constant dense<0.000000e+00> : vector<16x128xf32>
    %21 = tpu.matmul %20, %19, %cst_8 {dimension_numbers = #tpu.dot_dimension_numbers<[1], [0], [0], [1], [0, 0, 1, 1], [], []>} : vector<16x16xf32>, vector<16x128xf32>, vector<16x128xf32> -> vector<16x128xf32>
    %c0_9 = arith.constant 0 : index
    %c0_10 = arith.constant 0 : index
    %22 = vector.load %arg6[%c0_9, %c0_10] : memref<16x1xf32, #tpu.memory_space<vmem>>, vector<16x1xf32>
    %23 = vector.broadcast %22 : vector<16x1xf32> to vector<16x128xf32>
    %24 = arith.addf %21, %23 : vector<16x128xf32>
    %25 = tpu.iota {dimensions = array<i32: 1>} : vector<32x128xi32>
    %c0_11 = arith.constant 0 : index
    %c0_12 = arith.constant 0 : index
    %c0_13 = arith.constant 0 : index
    %c0_14 = arith.constant 0 : index
    %26 = vector.load %arg21[%c0_11, %c0_12, %c0_13, %c0_14] : memref<1x2x16x128xf32, #tpu.memory_space<vmem>>, vector<1x1x16x128xf32>
    %27 = vector.shape_cast %26 : vector<1x1x16x128xf32> to vector<16x128xf32>
    %28 = vector.shape_cast %24 : vector<16x128xf32> to vector<1x1x16x128xf32>
    tpu.vector_store %arg21[%c0_11, %c0_12, %c0_13, %c0_14], %28 {strides = array<i32>} : memref<1x2x16x128xf32, #tpu.memory_space<vmem>>, vector<1x1x16x128xf32>,
    %c0_15 = arith.constant 0 : index
    %29 = memref.load %arg1[%c0_15] : memref<12xf32, #tpu.memory_space<smem>>
    %c1 = arith.constant 1 : index
    %30 = memref.load %arg1[%c1] : memref<12xf32, #tpu.memory_space<smem>>
    %c0_16 = arith.constant 0 : index
    %c0_17 = arith.constant 0 : index
    %c0_18 = arith.constant 0 : index
    %31 = vector.load %arg7[%c0_16, %c0_17, %c0_18] : memref<6x32x16xf32, #tpu.memory_space<vmem>>, vector<1x32x16xf32>
    %32 = vector.shape_cast %31 : vector<1x32x16xf32> to vector<32x16xf32>
    %cst_19 = arith.constant dense<0.000000e+00> : vector<32x128xf32>
    %33 = tpu.matmul %32, %24, %cst_19 {dimension_numbers = #tpu.dot_dimension_numbers<[1], [0], [0], [1], [0, 0, 1, 1], [], []>} : vector<32x16xf32>, vector<16x128xf32>, vector<32x128xf32> -> vector<32x128xf32>
    %c0_20 = arith.constant 0 : index
    %c0_21 = arith.constant 0 : index
    %c0_22 = arith.constant 0 : index
    %34 = vector.load %arg9[%c0_20, %c0_21, %c0_22] : memref<6x32x1xf32, #tpu.memory_space<vmem>>, vector<1x32x1xf32>
    %35 = vector.shape_cast %34 : vector<1x32x1xf32> to vector<32x1xf32>
    %36 = vector.broadcast %35 : vector<32x1xf32> to vector<32x128xf32>
    %37 = arith.addf %33, %36 : vector<32x128xf32>
    %c0_23 = arith.constant 0 : index
    %c0_24 = arith.constant 0 : index
    %c0_25 = arith.constant 0 : index
    %38 = vector.load %arg8[%c0_23, %c0_24, %c0_25] : memref<2x32x24xf32, #tpu.memory_space<vmem>>, vector<1x32x24xf32>
    %39 = vector.shape_cast %38 : vector<1x32x24xf32> to vector<32x24xf32>
    %c0_26 = arith.constant 0 : index
    %c0_27 = arith.constant 0 : index
    %c0_28 = arith.constant 0 : index
    %c0_29 = arith.constant 0 : index
    %40 = vector.load %arg3[%c0_26, %c0_27, %c0_28, %c0_29] : memref<1x2x24x128xf32, #tpu.memory_space<vmem>>, vector<1x1x24x128xf32>
    %41 = vector.shape_cast %40 : vector<1x1x24x128xf32> to vector<24x128xf32>
    %cst_30 = arith.constant dense<0.000000e+00> : vector<32x128xf32>
    %42 = tpu.matmul %39, %41, %cst_30 {dimension_numbers = #tpu.dot_dimension_numbers<[1], [0], [0], [1], [0, 0, 1, 1], [], []>} : vector<32x24xf32>, vector<24x128xf32>, vector<32x128xf32> -> vector<32x128xf32>
    %43 = arith.addf %37, %42 : vector<32x128xf32>
    %c0_31 = arith.constant 0 : index
    %c0_32 = arith.constant 0 : index
    %c0_33 = arith.constant 0 : index
    %c0_34 = arith.constant 0 : index
    %44 = vector.load %arg4[%c0_31, %c0_32, %c0_33, %c0_34] : memref<1x2x32x1xf32, #tpu.memory_space<vmem>>, vector<1x1x32x1xf32>
    %45 = vector.shape_cast %44 : vector<1x1x32x1xf32> to vector<32x1xf32>
    %46 = vector.broadcast %45 : vector<32x1xf32> to vector<32x128xf32>
    %47 = arith.addf %43, %46 : vector<32x128xf32>
    %cst_35 = arith.constant 0.000000e+00 : f32
    %48 = vector.broadcast %cst_35 : f32 to vector<32x128xf32>
    %49 = arith.cmpf oge, %47, %48 : vector<32x128xf32>
    %50 = vector.broadcast %29 : f32 to vector<32x128xf32>
    %51 = arith.mulf %50, %47 : vector<32x128xf32>
    %52 = arith.select %49, %47, %51 : vector<32x128xi1>, vector<32x128xf32>
    %c0_36 = arith.constant 0 : index
    %c0_37 = arith.constant 0 : index
    %c0_38 = arith.constant 0 : index
    %53 = vector.load %arg10[%c0_36, %c0_37, %c0_38] : memref<6x32x1xf32, #tpu.memory_space<vmem>>, vector<1x32x1xf32>
    %54 = vector.shape_cast %53 : vector<1x32x1xf32> to vector<32x1xf32>
    %c0_39 = arith.constant 0 : index
    %c0_40 = arith.constant 0 : index
    %c0_41 = arith.constant 0 : index
    %55 = vector.load %arg11[%c0_39, %c0_40, %c0_41] : memref<6x32x1xf32, #tpu.memory_space<vmem>>, vector<1x32x1xf32>
    %56 = vector.shape_cast %55 : vector<1x32x1xf32> to vector<32x1xf32>
    %57 = vector.shape_cast %52 : vector<32x128xf32> to vector<1x32x128xf32>
    %cst_42 = arith.constant dense<0.000000e+00> : vector<1xf32>
    %58 = vector.multi_reduction <add>, %57, %cst_42 [1, 2] : vector<1x32x128xf32> to vector<1xf32>
    %59 = vector.shape_cast %58 : vector<1xf32> to vector<1x1x1xf32>
    %60 = vector.extract %59[0, 0, 0] : f32 from vector<1x1x1xf32>
    %cst_43 = arith.constant 4.096000e+03 : f32
    %61 = arith.divf %60, %cst_43 : f32
    %62 = vector.broadcast %61 : f32 to vector<32x128xf32>
    %63 = arith.subf %52, %62 : vector<32x128xf32>
    %64 = arith.mulf %63, %63 : vector<32x128xf32>
    %65 = vector.shape_cast %64 : vector<32x128xf32> to vector<1x32x128xf32>
    %cst_44 = arith.constant dense<0.000000e+00> : vector<1xf32>
    %66 = vector.multi_reduction <add>, %65, %cst_44 [1, 2] : vector<1x32x128xf32> to vector<1xf32>
    %67 = vector.shape_cast %66 : vector<1xf32> to vector<1x1x1xf32>
    %68 = vector.extract %67[0, 0, 0] : f32 from vector<1x1x1xf32>
    %cst_45 = arith.constant 4.096000e+03 : f32
    %69 = arith.divf %68, %cst_45 : f32
    %70 = vector.broadcast %61 : f32 to vector<32x128xf32>
    %71 = arith.subf %52, %70 : vector<32x128xf32>
    %cst_46 = arith.constant 9.99999993E-9 : f32
    %72 = arith.addf %69, %cst_46 : f32
    %73 = math.rsqrt %72 : f32
    %74 = vector.broadcast %73 : f32 to vector<32x128xf32>
    %75 = arith.mulf %71, %74 : vector<32x128xf32>
    %76 = vector.broadcast %54 : vector<32x1xf32> to vector<32x128xf32>
    %77 = arith.mulf %75, %76 : vector<32x128xf32>
    %78 = vector.broadcast %56 : vector<32x1xf32> to vector<32x128xf32>
    %79 = arith.addf %77, %78 : vector<32x128xf32>
    %c1_i32 = arith.constant 1 : i32
    %80 = tpu.dynamic_rotate %79 by %c1_i32 dim 1 : vector<32x128xf32>, i32 -> vector<32x128xf32>
    %c1_i32_47 = arith.constant 1 : i32
    %81 = vector.broadcast %c1_i32_47 : i32 to vector<32x128xi32>
    %82 = arith.cmpi sge, %25, %81 : vector<32x128xi32>
    %cst_48 = arith.constant 0.000000e+00 : f32
    %83 = vector.broadcast %cst_48 : f32 to vector<32x128xf32>
    %84 = arith.select %82, %80, %83 : vector<32x128xi1>, vector<32x128xf32>
    %c127_i32 = arith.constant 127 : i32
    %85 = tpu.dynamic_rotate %79 by %c127_i32 dim 1 : vector<32x128xf32>, i32 -> vector<32x128xf32>
    %c127_i32_49 = arith.constant 127 : i32
    %86 = vector.broadcast %c127_i32_49 : i32 to vector<32x128xi32>
    %87 = arith.cmpi slt, %25, %86 : vector<32x128xi32>
    %cst_50 = arith.constant 0.000000e+00 : f32
    %88 = vector.broadcast %cst_50 : f32 to vector<32x128xf32>
    %89 = arith.select %87, %85, %88 : vector<32x128xi1>, vector<32x128xf32>
    %c0_51 = arith.constant 0 : index
    %c0_52 = arith.constant 0 : index
    %c0_53 = arith.constant 0 : index
    %c0_54 = arith.constant 0 : index
    %90 = vector.load %arg12[%c0_51, %c0_52, %c0_53, %c0_54] : memref<6x3x32x1xf32, #tpu.memory_space<vmem>>, vector<1x1x32x1xf32>
    %91 = vector.shape_cast %90 : vector<1x1x32x1xf32> to vector<32x1xf32>
    %92 = vector.broadcast %91 : vector<32x1xf32> to vector<32x128xf32>
    %93 = arith.mulf %92, %84 : vector<32x128xf32>
    %c0_55 = arith.constant 0 : index
    %c1_56 = arith.constant 1 : index
    %c0_57 = arith.constant 0 : index
    %c0_58 = arith.constant 0 : index
    %94 = vector.load %arg12[%c0_55, %c1_56, %c0_57, %c0_58] : memref<6x3x32x1xf32, #tpu.memory_space<vmem>>, vector<1x1x32x1xf32>
    %95 = vector.shape_cast %94 : vector<1x1x32x1xf32> to vector<32x1xf32>
    %96 = vector.broadcast %95 : vector<32x1xf32> to vector<32x128xf32>
    %97 = arith.mulf %96, %79 : vector<32x128xf32>
    %98 = arith.addf %93, %97 : vector<32x128xf32>
    %c0_59 = arith.constant 0 : index
    %c2 = arith.constant 2 : index
    %c0_60 = arith.constant 0 : index
    %c0_61 = arith.constant 0 : index
    %99 = vector.load %arg12[%c0_59, %c2, %c0_60, %c0_61] : memref<6x3x32x1xf32, #tpu.memory_space<vmem>>, vector<1x1x32x1xf32>
    %100 = vector.shape_cast %99 : vector<1x1x32x1xf32> to vector<32x1xf32>
    %101 = vector.broadcast %100 : vector<32x1xf32> to vector<32x128xf32>
    %102 = arith.mulf %101, %89 : vector<32x128xf32>
    %103 = arith.addf %98, %102 : vector<32x128xf32>
    %c0_62 = arith.constant 0 : index
    %c0_63 = arith.constant 0 : index
    %c0_64 = arith.constant 0 : index
    %104 = vector.load %arg13[%c0_62, %c0_63, %c0_64] : memref<6x32x1xf32, #tpu.memory_space<vmem>>, vector<1x32x1xf32>
    %105 = vector.shape_cast %104 : vector<1x32x1xf32> to vector<32x1xf32>
    %106 = vector.broadcast %105 : vector<32x1xf32> to vector<32x128xf32>
    %107 = arith.addf %103, %106 : vector<32x128xf32>
    %cst_65 = arith.constant 0.000000e+00 : f32
    %108 = vector.broadcast %cst_65 : f32 to vector<32x128xf32>
    %109 = arith.cmpf oge, %107, %108 : vector<32x128xf32>
    %110 = vector.broadcast %30 : f32 to vector<32x128xf32>
    %111 = arith.mulf %110, %107 : vector<32x128xf32>
    %112 = arith.select %109, %107, %111 : vector<32x128xi1>, vector<32x128xf32>
    %c0_66 = arith.constant 0 : index
    %c0_67 = arith.constant 0 : index
    %c0_68 = arith.constant 0 : index
    %113 = vector.load %arg14[%c0_66, %c0_67, %c0_68] : memref<6x32x1xf32, #tpu.memory_space<vmem>>, vector<1x32x1xf32>
    %114 = vector.shape_cast %113 : vector<1x32x1xf32> to vector<32x1xf32>
    %c0_69 = arith.constant 0 : index
    %c0_70 = arith.constant 0 : index
    %c0_71 = arith.constant 0 : index
    %115 = vector.load %arg15[%c0_69, %c0_70, %c0_71] : memref<6x32x1xf32, #tpu.memory_space<vmem>>, vector<1x32x1xf32>
    %116 = vector.shape_cast %115 : vector<1x32x1xf32> to vector<32x1xf32>
    %117 = vector.shape_cast %112 : vector<32x128xf32> to vector<1x32x128xf32>
    %cst_72 = arith.constant dense<0.000000e+00> : vector<1xf32>
    %118 = vector.multi_reduction <add>, %117, %cst_72 [1, 2] : vector<1x32x128xf32> to vector<1xf32>
    %119 = vector.shape_cast %118 : vector<1xf32> to vector<1x1x1xf32>
    %120 = vector.extract %119[0, 0, 0] : f32 from vector<1x1x1xf32>
    %cst_73 = arith.constant 4.096000e+03 : f32
    %121 = arith.divf %120, %cst_73 : f32
    %122 = vector.broadcast %121 : f32 to vector<32x128xf32>
    %123 = arith.subf %112, %122 : vector<32x128xf32>
    %124 = arith.mulf %123, %123 : vector<32x128xf32>
    %125 = vector.shape_cast %124 : vector<32x128xf32> to vector<1x32x128xf32>
    %cst_74 = arith.constant dense<0.000000e+00> : vector<1xf32>
    %126 = vector.multi_reduction <add>, %125, %cst_74 [1, 2] : vector<1x32x128xf32> to vector<1xf32>
    %127 = vector.shape_cast %126 : vector<1xf32> to vector<1x1x1xf32>
    %128 = vector.extract %127[0, 0, 0] : f32 from vector<1x1x1xf32>
    %cst_75 = arith.constant 4.096000e+03 : f32
    %129 = arith.divf %128, %cst_75 : f32
    %130 = vector.broadcast %121 : f32 to vector<32x128xf32>
    %131 = arith.subf %112, %130 : vector<32x128xf32>
    %cst_76 = arith.constant 9.99999993E-9 : f32
    %132 = arith.addf %129, %cst_76 : f32
    %133 = math.rsqrt %132 : f32
    %134 = vector.broadcast %133 : f32 to vector<32x128xf32>
    %135 = arith.mulf %131, %134 : vector<32x128xf32>
    %136 = vector.broadcast %114 : vector<32x1xf32> to vector<32x128xf32>
    %137 = arith.mulf %135, %136 : vector<32x128xf32>
    %138 = vector.broadcast %116 : vector<32x1xf32> to vector<32x128xf32>
    %139 = arith.addf %137, %138 : vector<32x128xf32>
    %c0_77 = arith.constant 0 : index
    %c0_78 = arith.constant 0 : index
    %c0_79 = arith.constant 0 : index
    %140 = vector.load %arg16[%c0_77, %c0_78, %c0_79] : memref<6x16x32xf32, #tpu.memory_space<vmem>>, vector<1x16x32xf32>
    %141 = vector.shape_cast %140 : vector<1x16x32xf32> to vector<16x32xf32>
    %cst_80 = arith.constant dense<0.000000e+00> : vector<16x128xf32>
    %142 = tpu.matmul %141, %139, %cst_80 {dimension_numbers = #tpu.dot_dimension_numbers<[1], [0], [0], [1], [0, 0, 1, 1], [], []>} : vector<16x32xf32>, vector<32x128xf32>, vector<16x128xf32> -> vector<16x128xf32>
    %c0_81 = arith.constant 0 : index
    %c0_82 = arith.constant 0 : index
    %c0_83 = arith.constant 0 : index
    %143 = vector.load %arg17[%c0_81, %c0_82, %c0_83] : memref<6x16x1xf32, #tpu.memory_space<vmem>>, vector<1x16x1xf32>
    %144 = vector.shape_cast %143 : vector<1x16x1xf32> to vector<16x1xf32>
    %145 = vector.broadcast %144 : vector<16x1xf32> to vector<16x128xf32>
    %146 = arith.addf %142, %145 : vector<16x128xf32>
    %c2_84 = arith.constant 2 : index
    %147 = memref.load %arg1[%c2_84] : memref<12xf32, #tpu.memory_space<smem>>
    %c3 = arith.constant 3 : index
    %148 = memref.load %arg1[%c3] : memref<12xf32, #tpu.memory_space<smem>>
    %c1_85 = arith.constant 1 : index
    %c0_86 = arith.constant 0 : index
    %c0_87 = arith.constant 0 : index
    %149 = vector.load %arg7[%c1_85, %c0_86, %c0_87] : memref<6x32x16xf32, #tpu.memory_space<vmem>>, vector<1x32x16xf32>
    %150 = vector.shape_cast %149 : vector<1x32x16xf32> to vector<32x16xf32>
    %cst_88 = arith.constant dense<0.000000e+00> : vector<32x128xf32>
    %151 = tpu.matmul %150, %146, %cst_88 {dimension_numbers = #tpu.dot_dimension_numbers<[1], [0], [0], [1], [0, 0, 1, 1], [], []>} : vector<32x16xf32>, vector<16x128xf32>, vector<32x128xf32> -> vector<32x128xf32>
    %c1_89 = arith.constant 1 : index
    %c0_90 = arith.constant 0 : index
    %c0_91 = arith.constant 0 : index
    %152 = vector.load %arg9[%c1_89, %c0_90, %c0_91] : memref<6x32x1xf32, #tpu.memory_space<vmem>>, vector<1x32x1xf32>
    %153 = vector.shape_cast %152 : vector<1x32x1xf32> to vector<32x1xf32>
    %154 = vector.broadcast %153 : vector<32x1xf32> to vector<32x128xf32>
    %155 = arith.addf %151, %154 : vector<32x128xf32>
    %cst_92 = arith.constant 0.000000e+00 : f32
    %156 = vector.broadcast %cst_92 : f32 to vector<32x128xf32>
    %157 = arith.cmpf oge, %155, %156 : vector<32x128xf32>
    %158 = vector.broadcast %147 : f32 to vector<32x128xf32>
    %159 = arith.mulf %158, %155 : vector<32x128xf32>
    %160 = arith.select %157, %155, %159 : vector<32x128xi1>, vector<32x128xf32>
    %c1_93 = arith.constant 1 : index
    %c0_94 = arith.constant 0 : index
    %c0_95 = arith.constant 0 : index
    %161 = vector.load %arg10[%c1_93, %c0_94, %c0_95] : memref<6x32x1xf32, #tpu.memory_space<vmem>>, vector<1x32x1xf32>
    %162 = vector.shape_cast %161 : vector<1x32x1xf32> to vector<32x1xf32>
    %c1_96 = arith.constant 1 : index
    %c0_97 = arith.constant 0 : index
    %c0_98 = arith.constant 0 : index
    %163 = vector.load %arg11[%c1_96, %c0_97, %c0_98] : memref<6x32x1xf32, #tpu.memory_space<vmem>>, vector<1x32x1xf32>
    %164 = vector.shape_cast %163 : vector<1x32x1xf32> to vector<32x1xf32>
    %165 = vector.shape_cast %160 : vector<32x128xf32> to vector<1x32x128xf32>
    %cst_99 = arith.constant dense<0.000000e+00> : vector<1xf32>
    %166 = vector.multi_reduction <add>, %165, %cst_99 [1, 2] : vector<1x32x128xf32> to vector<1xf32>
    %167 = vector.shape_cast %166 : vector<1xf32> to vector<1x1x1xf32>
    %168 = vector.extract %167[0, 0, 0] : f32 from vector<1x1x1xf32>
    %cst_100 = arith.constant 4.096000e+03 : f32
    %169 = arith.divf %168, %cst_100 : f32
    %170 = vector.broadcast %169 : f32 to vector<32x128xf32>
    %171 = arith.subf %160, %170 : vector<32x128xf32>
    %172 = arith.mulf %171, %171 : vector<32x128xf32>
    %173 = vector.shape_cast %172 : vector<32x128xf32> to vector<1x32x128xf32>
    %cst_101 = arith.constant dense<0.000000e+00> : vector<1xf32>
    %174 = vector.multi_reduction <add>, %173, %cst_101 [1, 2] : vector<1x32x128xf32> to vector<1xf32>
    %175 = vector.shape_cast %174 : vector<1xf32> to vector<1x1x1xf32>
    %176 = vector.extract %175[0, 0, 0] : f32 from vector<1x1x1xf32>
    %cst_102 = arith.constant 4.096000e+03 : f32
    %177 = arith.divf %176, %cst_102 : f32
    %178 = vector.broadcast %169 : f32 to vector<32x128xf32>
    %179 = arith.subf %160, %178 : vector<32x128xf32>
    %cst_103 = arith.constant 9.99999993E-9 : f32
    %180 = arith.addf %177, %cst_103 : f32
    %181 = math.rsqrt %180 : f32
    %182 = vector.broadcast %181 : f32 to vector<32x128xf32>
    %183 = arith.mulf %179, %182 : vector<32x128xf32>
    %184 = vector.broadcast %162 : vector<32x1xf32> to vector<32x128xf32>
    %185 = arith.mulf %183, %184 : vector<32x128xf32>
    %186 = vector.broadcast %164 : vector<32x1xf32> to vector<32x128xf32>
    %187 = arith.addf %185, %186 : vector<32x128xf32>
    %c2_i32 = arith.constant 2 : i32
    %188 = tpu.dynamic_rotate %187 by %c2_i32 dim 1 : vector<32x128xf32>, i32 -> vector<32x128xf32>
    %c2_i32_104 = arith.constant 2 : i32
    %189 = vector.broadcast %c2_i32_104 : i32 to vector<32x128xi32>
    %190 = arith.cmpi sge, %25, %189 : vector<32x128xi32>
    %cst_105 = arith.constant 0.000000e+00 : f32
    %191 = vector.broadcast %cst_105 : f32 to vector<32x128xf32>
    %192 = arith.select %190, %188, %191 : vector<32x128xi1>, vector<32x128xf32>
    %c126_i32 = arith.constant 126 : i32
    %193 = tpu.dynamic_rotate %187 by %c126_i32 dim 1 : vector<32x128xf32>, i32 -> vector<32x128xf32>
    %c126_i32_106 = arith.constant 126 : i32
    %194 = vector.broadcast %c126_i32_106 : i32 to vector<32x128xi32>
    %195 = arith.cmpi slt, %25, %194 : vector<32x128xi32>
    %cst_107 = arith.constant 0.000000e+00 : f32
    %196 = vector.broadcast %cst_107 : f32 to vector<32x128xf32>
    %197 = arith.select %195, %193, %196 : vector<32x128xi1>, vector<32x128xf32>
    %c1_108 = arith.constant 1 : index
    %c0_109 = arith.constant 0 : index
    %c0_110 = arith.constant 0 : index
    %c0_111 = arith.constant 0 : index
    %198 = vector.load %arg12[%c1_108, %c0_109, %c0_110, %c0_111] : memref<6x3x32x1xf32, #tpu.memory_space<vmem>>, vector<1x1x32x1xf32>
    %199 = vector.shape_cast %198 : vector<1x1x32x1xf32> to vector<32x1xf32>
    %200 = vector.broadcast %199 : vector<32x1xf32> to vector<32x128xf32>
    %201 = arith.mulf %200, %192 : vector<32x128xf32>
    %c1_112 = arith.constant 1 : index
    %c1_113 = arith.constant 1 : index
    %c0_114 = arith.constant 0 : index
    %c0_115 = arith.constant 0 : index
    %202 = vector.load %arg12[%c1_112, %c1_113, %c0_114, %c0_115] : memref<6x3x32x1xf32, #tpu.memory_space<vmem>>, vector<1x1x32x1xf32>
    %203 = vector.shape_cast %202 : vector<1x1x32x1xf32> to vector<32x1xf32>
    %204 = vector.broadcast %203 : vector<32x1xf32> to vector<32x128xf32>
    %205 = arith.mulf %204, %187 : vector<32x128xf32>
    %206 = arith.addf %201, %205 : vector<32x128xf32>
    %c1_116 = arith.constant 1 : index
    %c2_117 = arith.constant 2 : index
    %c0_118 = arith.constant 0 : index
    %c0_119 = arith.constant 0 : index
    %207 = vector.load %arg12[%c1_116, %c2_117, %c0_118, %c0_119] : memref<6x3x32x1xf32, #tpu.memory_space<vmem>>, vector<1x1x32x1xf32>
    %208 = vector.shape_cast %207 : vector<1x1x32x1xf32> to vector<32x1xf32>
    %209 = vector.broadcast %208 : vector<32x1xf32> to vector<32x128xf32>
    %210 = arith.mulf %209, %197 : vector<32x128xf32>
    %211 = arith.addf %206, %210 : vector<32x128xf32>
    %c1_120 = arith.constant 1 : index
    %c0_121 = arith.constant 0 : index
    %c0_122 = arith.constant 0 : index
    %212 = vector.load %arg13[%c1_120, %c0_121, %c0_122] : memref<6x32x1xf32, #tpu.memory_space<vmem>>, vector<1x32x1xf32>
    %213 = vector.shape_cast %212 : vector<1x32x1xf32> to vector<32x1xf32>
    %214 = vector.broadcast %213 : vector<32x1xf32> to vector<32x128xf32>
    %215 = arith.addf %211, %214 : vector<32x128xf32>
    %cst_123 = arith.constant 0.000000e+00 : f32
    %216 = vector.broadcast %cst_123 : f32 to vector<32x128xf32>
    %217 = arith.cmpf oge, %215, %216 : vector<32x128xf32>
    %218 = vector.broadcast %148 : f32 to vector<32x128xf32>
    %219 = arith.mulf %218, %215 : vector<32x128xf32>
    %220 = arith.select %217, %215, %219 : vector<32x128xi1>, vector<32x128xf32>
    %c1_124 = arith.constant 1 : index
    %c0_125 = arith.constant 0 : index
    %c0_126 = arith.constant 0 : index
    %221 = vector.load %arg14[%c1_124, %c0_125, %c0_126] : memref<6x32x1xf32, #tpu.memory_space<vmem>>, vector<1x32x1xf32>
    %222 = vector.shape_cast %221 : vector<1x32x1xf32> to vector<32x1xf32>
    %c1_127 = arith.constant 1 : index
    %c0_128 = arith.constant 0 : index
    %c0_129 = arith.constant 0 : index
    %223 = vector.load %arg15[%c1_127, %c0_128, %c0_129] : memref<6x32x1xf32, #tpu.memory_space<vmem>>, vector<1x32x1xf32>
    %224 = vector.shape_cast %223 : vector<1x32x1xf32> to vector<32x1xf32>
    %225 = vector.shape_cast %220 : vector<32x128xf32> to vector<1x32x128xf32>
    %cst_130 = arith.constant dense<0.000000e+00> : vector<1xf32>
    %226 = vector.multi_reduction <add>, %225, %cst_130 [1, 2] : vector<1x32x128xf32> to vector<1xf32>
    %227 = vector.shape_cast %226 : vector<1xf32> to vector<1x1x1xf32>
    %228 = vector.extract %227[0, 0, 0] : f32 from vector<1x1x1xf32>
    %cst_131 = arith.constant 4.096000e+03 : f32
    %229 = arith.divf %228, %cst_131 : f32
    %230 = vector.broadcast %229 : f32 to vector<32x128xf32>
    %231 = arith.subf %220, %230 : vector<32x128xf32>
    %232 = arith.mulf %231, %231 : vector<32x128xf32>
    %233 = vector.shape_cast %232 : vector<32x128xf32> to vector<1x32x128xf32>
    %cst_132 = arith.constant dense<0.000000e+00> : vector<1xf32>
    %234 = vector.multi_reduction <add>, %233, %cst_132 [1, 2] : vector<1x32x128xf32> to vector<1xf32>
    %235 = vector.shape_cast %234 : vector<1xf32> to vector<1x1x1xf32>
    %236 = vector.extract %235[0, 0, 0] : f32 from vector<1x1x1xf32>
    %cst_133 = arith.constant 4.096000e+03 : f32
    %237 = arith.divf %236, %cst_133 : f32
    %238 = vector.broadcast %229 : f32 to vector<32x128xf32>
    %239 = arith.subf %220, %238 : vector<32x128xf32>
    %cst_134 = arith.constant 9.99999993E-9 : f32
    %240 = arith.addf %237, %cst_134 : f32
    %241 = math.rsqrt %240 : f32
    %242 = vector.broadcast %241 : f32 to vector<32x128xf32>
    %243 = arith.mulf %239, %242 : vector<32x128xf32>
    %244 = vector.broadcast %222 : vector<32x1xf32> to vector<32x128xf32>
    %245 = arith.mulf %243, %244 : vector<32x128xf32>
    %246 = vector.broadcast %224 : vector<32x1xf32> to vector<32x128xf32>
    %247 = arith.addf %245, %246 : vector<32x128xf32>
    %c1_135 = arith.constant 1 : index
    %c0_136 = arith.constant 0 : index
    %c0_137 = arith.constant 0 : index
    %248 = vector.load %arg16[%c1_135, %c0_136, %c0_137] : memref<6x16x32xf32, #tpu.memory_space<vmem>>, vector<1x16x32xf32>
    %249 = vector.shape_cast %248 : vector<1x16x32xf32> to vector<16x32xf32>
    %cst_138 = arith.constant dense<0.000000e+00> : vector<16x128xf32>
    %250 = tpu.matmul %249, %247, %cst_138 {dimension_numbers = #tpu.dot_dimension_numbers<[1], [0], [0], [1], [0, 0, 1, 1], [], []>} : vector<16x32xf32>, vector<32x128xf32>, vector<16x128xf32> -> vector<16x128xf32>
    %c1_139 = arith.constant 1 : index
    %c0_140 = arith.constant 0 : index
    %c0_141 = arith.constant 0 : index
    %251 = vector.load %arg17[%c1_139, %c0_140, %c0_141] : memref<6x16x1xf32, #tpu.memory_space<vmem>>, vector<1x16x1xf32>
    %252 = vector.shape_cast %251 : vector<1x16x1xf32> to vector<16x1xf32>
    %253 = vector.broadcast %252 : vector<16x1xf32> to vector<16x128xf32>
    %254 = arith.addf %250, %253 : vector<16x128xf32>
    %255 = arith.addf %146, %254 : vector<16x128xf32>
    %c4 = arith.constant 4 : index
    %256 = memref.load %arg1[%c4] : memref<12xf32, #tpu.memory_space<smem>>
    %c5 = arith.constant 5 : index
    %257 = memref.load %arg1[%c5] : memref<12xf32, #tpu.memory_space<smem>>
    %c2_142 = arith.constant 2 : index
    %c0_143 = arith.constant 0 : index
    %c0_144 = arith.constant 0 : index
    %258 = vector.load %arg7[%c2_142, %c0_143, %c0_144] : memref<6x32x16xf32, #tpu.memory_space<vmem>>, vector<1x32x16xf32>
    %259 = vector.shape_cast %258 : vector<1x32x16xf32> to vector<32x16xf32>
    %cst_145 = arith.constant dense<0.000000e+00> : vector<32x128xf32>
    %260 = tpu.matmul %259, %255, %cst_145 {dimension_numbers = #tpu.dot_dimension_numbers<[1], [0], [0], [1], [0, 0, 1, 1], [], []>} : vector<32x16xf32>, vector<16x128xf32>, vector<32x128xf32> -> vector<32x128xf32>
    %c2_146 = arith.constant 2 : index
    %c0_147 = arith.constant 0 : index
    %c0_148 = arith.constant 0 : index
    %261 = vector.load %arg9[%c2_146, %c0_147, %c0_148] : memref<6x32x1xf32, #tpu.memory_space<vmem>>, vector<1x32x1xf32>
    %262 = vector.shape_cast %261 : vector<1x32x1xf32> to vector<32x1xf32>
    %263 = vector.broadcast %262 : vector<32x1xf32> to vector<32x128xf32>
    %264 = arith.addf %260, %263 : vector<32x128xf32>
    %cst_149 = arith.constant 0.000000e+00 : f32
    %265 = vector.broadcast %cst_149 : f32 to vector<32x128xf32>
    %266 = arith.cmpf oge, %264, %265 : vector<32x128xf32>
    %267 = vector.broadcast %256 : f32 to vector<32x128xf32>
    %268 = arith.mulf %267, %264 : vector<32x128xf32>
    %269 = arith.select %266, %264, %268 : vector<32x128xi1>, vector<32x128xf32>
    %c2_150 = arith.constant 2 : index
    %c0_151 = arith.constant 0 : index
    %c0_152 = arith.constant 0 : index
    %270 = vector.load %arg10[%c2_150, %c0_151, %c0_152] : memref<6x32x1xf32, #tpu.memory_space<vmem>>, vector<1x32x1xf32>
    %271 = vector.shape_cast %270 : vector<1x32x1xf32> to vector<32x1xf32>
    %c2_153 = arith.constant 2 : index
    %c0_154 = arith.constant 0 : index
    %c0_155 = arith.constant 0 : index
    %272 = vector.load %arg11[%c2_153, %c0_154, %c0_155] : memref<6x32x1xf32, #tpu.memory_space<vmem>>, vector<1x32x1xf32>
    %273 = vector.shape_cast %272 : vector<1x32x1xf32> to vector<32x1xf32>
    %274 = vector.shape_cast %269 : vector<32x128xf32> to vector<1x32x128xf32>
    %cst_156 = arith.constant dense<0.000000e+00> : vector<1xf32>
    %275 = vector.multi_reduction <add>, %274, %cst_156 [1, 2] : vector<1x32x128xf32> to vector<1xf32>
    %276 = vector.shape_cast %275 : vector<1xf32> to vector<1x1x1xf32>
    %277 = vector.extract %276[0, 0, 0] : f32 from vector<1x1x1xf32>
    %cst_157 = arith.constant 4.096000e+03 : f32
    %278 = arith.divf %277, %cst_157 : f32
    %279 = vector.broadcast %278 : f32 to vector<32x128xf32>
    %280 = arith.subf %269, %279 : vector<32x128xf32>
    %281 = arith.mulf %280, %280 : vector<32x128xf32>
    %282 = vector.shape_cast %281 : vector<32x128xf32> to vector<1x32x128xf32>
    %cst_158 = arith.constant dense<0.000000e+00> : vector<1xf32>
    %283 = vector.multi_reduction <add>, %282, %cst_158 [1, 2] : vector<1x32x128xf32> to vector<1xf32>
    %284 = vector.shape_cast %283 : vector<1xf32> to vector<1x1x1xf32>
    %285 = vector.extract %284[0, 0, 0] : f32 from vector<1x1x1xf32>
    %cst_159 = arith.constant 4.096000e+03 : f32
    %286 = arith.divf %285, %cst_159 : f32
    %287 = vector.broadcast %278 : f32 to vector<32x128xf32>
    %288 = arith.subf %269, %287 : vector<32x128xf32>
    %cst_160 = arith.constant 9.99999993E-9 : f32
    %289 = arith.addf %286, %cst_160 : f32
    %290 = math.rsqrt %289 : f32
    %291 = vector.broadcast %290 : f32 to vector<32x128xf32>
    %292 = arith.mulf %288, %291 : vector<32x128xf32>
    %293 = vector.broadcast %271 : vector<32x1xf32> to vector<32x128xf32>
    %294 = arith.mulf %292, %293 : vector<32x128xf32>
    %295 = vector.broadcast %273 : vector<32x1xf32> to vector<32x128xf32>
    %296 = arith.addf %294, %295 : vector<32x128xf32>
    %c4_i32 = arith.constant 4 : i32
    %297 = tpu.dynamic_rotate %296 by %c4_i32 dim 1 : vector<32x128xf32>, i32 -> vector<32x128xf32>
    %c4_i32_161 = arith.constant 4 : i32
    %298 = vector.broadcast %c4_i32_161 : i32 to vector<32x128xi32>
    %299 = arith.cmpi sge, %25, %298 : vector<32x128xi32>
    %cst_162 = arith.constant 0.000000e+00 : f32
    %300 = vector.broadcast %cst_162 : f32 to vector<32x128xf32>
    %301 = arith.select %299, %297, %300 : vector<32x128xi1>, vector<32x128xf32>
    %c124_i32 = arith.constant 124 : i32
    %302 = tpu.dynamic_rotate %296 by %c124_i32 dim 1 : vector<32x128xf32>, i32 -> vector<32x128xf32>
    %c124_i32_163 = arith.constant 124 : i32
    %303 = vector.broadcast %c124_i32_163 : i32 to vector<32x128xi32>
    %304 = arith.cmpi slt, %25, %303 : vector<32x128xi32>
    %cst_164 = arith.constant 0.000000e+00 : f32
    %305 = vector.broadcast %cst_164 : f32 to vector<32x128xf32>
    %306 = arith.select %304, %302, %305 : vector<32x128xi1>, vector<32x128xf32>
    %c2_165 = arith.constant 2 : index
    %c0_166 = arith.constant 0 : index
    %c0_167 = arith.constant 0 : index
    %c0_168 = arith.constant 0 : index
    %307 = vector.load %arg12[%c2_165, %c0_166, %c0_167, %c0_168] : memref<6x3x32x1xf32, #tpu.memory_space<vmem>>, vector<1x1x32x1xf32>
    %308 = vector.shape_cast %307 : vector<1x1x32x1xf32> to vector<32x1xf32>
    %309 = vector.broadcast %308 : vector<32x1xf32> to vector<32x128xf32>
    %310 = arith.mulf %309, %301 : vector<32x128xf32>
    %c2_169 = arith.constant 2 : index
    %c1_170 = arith.constant 1 : index
    %c0_171 = arith.constant 0 : index
    %c0_172 = arith.constant 0 : index
    %311 = vector.load %arg12[%c2_169, %c1_170, %c0_171, %c0_172] : memref<6x3x32x1xf32, #tpu.memory_space<vmem>>, vector<1x1x32x1xf32>
    %312 = vector.shape_cast %311 : vector<1x1x32x1xf32> to vector<32x1xf32>
    %313 = vector.broadcast %312 : vector<32x1xf32> to vector<32x128xf32>
    %314 = arith.mulf %313, %296 : vector<32x128xf32>
    %315 = arith.addf %310, %314 : vector<32x128xf32>
    %c2_173 = arith.constant 2 : index
    %c2_174 = arith.constant 2 : index
    %c0_175 = arith.constant 0 : index
    %c0_176 = arith.constant 0 : index
    %316 = vector.load %arg12[%c2_173, %c2_174, %c0_175, %c0_176] : memref<6x3x32x1xf32, #tpu.memory_space<vmem>>, vector<1x1x32x1xf32>
    %317 = vector.shape_cast %316 : vector<1x1x32x1xf32> to vector<32x1xf32>
    %318 = vector.broadcast %317 : vector<32x1xf32> to vector<32x128xf32>
    %319 = arith.mulf %318, %306 : vector<32x128xf32>
    %320 = arith.addf %315, %319 : vector<32x128xf32>
    %c2_177 = arith.constant 2 : index
    %c0_178 = arith.constant 0 : index
    %c0_179 = arith.constant 0 : index
    %321 = vector.load %arg13[%c2_177, %c0_178, %c0_179] : memref<6x32x1xf32, #tpu.memory_space<vmem>>, vector<1x32x1xf32>
    %322 = vector.shape_cast %321 : vector<1x32x1xf32> to vector<32x1xf32>
    %323 = vector.broadcast %322 : vector<32x1xf32> to vector<32x128xf32>
    %324 = arith.addf %320, %323 : vector<32x128xf32>
    %cst_180 = arith.constant 0.000000e+00 : f32
    %325 = vector.broadcast %cst_180 : f32 to vector<32x128xf32>
    %326 = arith.cmpf oge, %324, %325 : vector<32x128xf32>
    %327 = vector.broadcast %257 : f32 to vector<32x128xf32>
    %328 = arith.mulf %327, %324 : vector<32x128xf32>
    %329 = arith.select %326, %324, %328 : vector<32x128xi1>, vector<32x128xf32>
    %c2_181 = arith.constant 2 : index
    %c0_182 = arith.constant 0 : index
    %c0_183 = arith.constant 0 : index
    %330 = vector.load %arg14[%c2_181, %c0_182, %c0_183] : memref<6x32x1xf32, #tpu.memory_space<vmem>>, vector<1x32x1xf32>
    %331 = vector.shape_cast %330 : vector<1x32x1xf32> to vector<32x1xf32>
    %c2_184 = arith.constant 2 : index
    %c0_185 = arith.constant 0 : index
    %c0_186 = arith.constant 0 : index
    %332 = vector.load %arg15[%c2_184, %c0_185, %c0_186] : memref<6x32x1xf32, #tpu.memory_space<vmem>>, vector<1x32x1xf32>
    %333 = vector.shape_cast %332 : vector<1x32x1xf32> to vector<32x1xf32>
    %334 = vector.shape_cast %329 : vector<32x128xf32> to vector<1x32x128xf32>
    %cst_187 = arith.constant dense<0.000000e+00> : vector<1xf32>
    %335 = vector.multi_reduction <add>, %334, %cst_187 [1, 2] : vector<1x32x128xf32> to vector<1xf32>
    %336 = vector.shape_cast %335 : vector<1xf32> to vector<1x1x1xf32>
    %337 = vector.extract %336[0, 0, 0] : f32 from vector<1x1x1xf32>
    %cst_188 = arith.constant 4.096000e+03 : f32
    %338 = arith.divf %337, %cst_188 : f32
    %339 = vector.broadcast %338 : f32 to vector<32x128xf32>
    %340 = arith.subf %329, %339 : vector<32x128xf32>
    %341 = arith.mulf %340, %340 : vector<32x128xf32>
    %342 = vector.shape_cast %341 : vector<32x128xf32> to vector<1x32x128xf32>
    %cst_189 = arith.constant dense<0.000000e+00> : vector<1xf32>
    %343 = vector.multi_reduction <add>, %342, %cst_189 [1, 2] : vector<1x32x128xf32> to vector<1xf32>
    %344 = vector.shape_cast %343 : vector<1xf32> to vector<1x1x1xf32>
    %345 = vector.extract %344[0, 0, 0] : f32 from vector<1x1x1xf32>
    %cst_190 = arith.constant 4.096000e+03 : f32
    %346 = arith.divf %345, %cst_190 : f32
    %347 = vector.broadcast %338 : f32 to vector<32x128xf32>
    %348 = arith.subf %329, %347 : vector<32x128xf32>
    %cst_191 = arith.constant 9.99999993E-9 : f32
    %349 = arith.addf %346, %cst_191 : f32
    %350 = math.rsqrt %349 : f32
    %351 = vector.broadcast %350 : f32 to vector<32x128xf32>
    %352 = arith.mulf %348, %351 : vector<32x128xf32>
    %353 = vector.broadcast %331 : vector<32x1xf32> to vector<32x128xf32>
    %354 = arith.mulf %352, %353 : vector<32x128xf32>
    %355 = vector.broadcast %333 : vector<32x1xf32> to vector<32x128xf32>
    %356 = arith.addf %354, %355 : vector<32x128xf32>
    %c2_192 = arith.constant 2 : index
    %c0_193 = arith.constant 0 : index
    %c0_194 = arith.constant 0 : index
    %357 = vector.load %arg16[%c2_192, %c0_193, %c0_194] : memref<6x16x32xf32, #tpu.memory_space<vmem>>, vector<1x16x32xf32>
    %358 = vector.shape_cast %357 : vector<1x16x32xf32> to vector<16x32xf32>
    %cst_195 = arith.constant dense<0.000000e+00> : vector<16x128xf32>
    %359 = tpu.matmul %358, %356, %cst_195 {dimension_numbers = #tpu.dot_dimension_numbers<[1], [0], [0], [1], [0, 0, 1, 1], [], []>} : vector<16x32xf32>, vector<32x128xf32>, vector<16x128xf32> -> vector<16x128xf32>
    %c2_196 = arith.constant 2 : index
    %c0_197 = arith.constant 0 : index
    %c0_198 = arith.constant 0 : index
    %360 = vector.load %arg17[%c2_196, %c0_197, %c0_198] : memref<6x16x1xf32, #tpu.memory_space<vmem>>, vector<1x16x1xf32>
    %361 = vector.shape_cast %360 : vector<1x16x1xf32> to vector<16x1xf32>
    %362 = vector.broadcast %361 : vector<16x1xf32> to vector<16x128xf32>
    %363 = arith.addf %359, %362 : vector<16x128xf32>
    %364 = arith.addf %255, %363 : vector<16x128xf32>
    %c0_199 = arith.constant 0 : index
    %c1_200 = arith.constant 1 : index
    %c0_201 = arith.constant 0 : index
    %c0_202 = arith.constant 0 : index
    %365 = vector.load %arg21[%c0_199, %c1_200, %c0_201, %c0_202] : memref<1x2x16x128xf32, #tpu.memory_space<vmem>>, vector<1x1x16x128xf32>
    %366 = vector.shape_cast %365 : vector<1x1x16x128xf32> to vector<16x128xf32>
    %367 = vector.shape_cast %364 : vector<16x128xf32> to vector<1x1x16x128xf32>
    tpu.vector_store %arg21[%c0_199, %c1_200, %c0_201, %c0_202], %367 {strides = array<i32>} : memref<1x2x16x128xf32, #tpu.memory_space<vmem>>, vector<1x1x16x128xf32>,
    %c6 = arith.constant 6 : index
    %368 = memref.load %arg1[%c6] : memref<12xf32, #tpu.memory_space<smem>>
    %c7 = arith.constant 7 : index
    %369 = memref.load %arg1[%c7] : memref<12xf32, #tpu.memory_space<smem>>
    %c3_203 = arith.constant 3 : index
    %c0_204 = arith.constant 0 : index
    %c0_205 = arith.constant 0 : index
    %370 = vector.load %arg7[%c3_203, %c0_204, %c0_205] : memref<6x32x16xf32, #tpu.memory_space<vmem>>, vector<1x32x16xf32>
    %371 = vector.shape_cast %370 : vector<1x32x16xf32> to vector<32x16xf32>
    %cst_206 = arith.constant dense<0.000000e+00> : vector<32x128xf32>
    %372 = tpu.matmul %371, %364, %cst_206 {dimension_numbers = #tpu.dot_dimension_numbers<[1], [0], [0], [1], [0, 0, 1, 1], [], []>} : vector<32x16xf32>, vector<16x128xf32>, vector<32x128xf32> -> vector<32x128xf32>
    %c3_207 = arith.constant 3 : index
    %c0_208 = arith.constant 0 : index
    %c0_209 = arith.constant 0 : index
    %373 = vector.load %arg9[%c3_207, %c0_208, %c0_209] : memref<6x32x1xf32, #tpu.memory_space<vmem>>, vector<1x32x1xf32>
    %374 = vector.shape_cast %373 : vector<1x32x1xf32> to vector<32x1xf32>
    %375 = vector.broadcast %374 : vector<32x1xf32> to vector<32x128xf32>
    %376 = arith.addf %372, %375 : vector<32x128xf32>
    %c1_210 = arith.constant 1 : index
    %c0_211 = arith.constant 0 : index
    %c0_212 = arith.constant 0 : index
    %377 = vector.load %arg8[%c1_210, %c0_211, %c0_212] : memref<2x32x24xf32, #tpu.memory_space<vmem>>, vector<1x32x24xf32>
    %378 = vector.shape_cast %377 : vector<1x32x24xf32> to vector<32x24xf32>
    %c0_213 = arith.constant 0 : index
    %c1_214 = arith.constant 1 : index
    %c0_215 = arith.constant 0 : index
    %c0_216 = arith.constant 0 : index
    %379 = vector.load %arg3[%c0_213, %c1_214, %c0_215, %c0_216] : memref<1x2x24x128xf32, #tpu.memory_space<vmem>>, vector<1x1x24x128xf32>
    %380 = vector.shape_cast %379 : vector<1x1x24x128xf32> to vector<24x128xf32>
    %cst_217 = arith.constant dense<0.000000e+00> : vector<32x128xf32>
    %381 = tpu.matmul %378, %380, %cst_217 {dimension_numbers = #tpu.dot_dimension_numbers<[1], [0], [0], [1], [0, 0, 1, 1], [], []>} : vector<32x24xf32>, vector<24x128xf32>, vector<32x128xf32> -> vector<32x128xf32>
    %382 = arith.addf %376, %381 : vector<32x128xf32>
    %c0_218 = arith.constant 0 : index
    %c1_219 = arith.constant 1 : index
    %c0_220 = arith.constant 0 : index
    %c0_221 = arith.constant 0 : index
    %383 = vector.load %arg4[%c0_218, %c1_219, %c0_220, %c0_221] : memref<1x2x32x1xf32, #tpu.memory_space<vmem>>, vector<1x1x32x1xf32>
    %384 = vector.shape_cast %383 : vector<1x1x32x1xf32> to vector<32x1xf32>
    %385 = vector.broadcast %384 : vector<32x1xf32> to vector<32x128xf32>
    %386 = arith.addf %382, %385 : vector<32x128xf32>
    %cst_222 = arith.constant 0.000000e+00 : f32
    %387 = vector.broadcast %cst_222 : f32 to vector<32x128xf32>
    %388 = arith.cmpf oge, %386, %387 : vector<32x128xf32>
    %389 = vector.broadcast %368 : f32 to vector<32x128xf32>
    %390 = arith.mulf %389, %386 : vector<32x128xf32>
    %391 = arith.select %388, %386, %390 : vector<32x128xi1>, vector<32x128xf32>
    %c3_223 = arith.constant 3 : index
    %c0_224 = arith.constant 0 : index
    %c0_225 = arith.constant 0 : index
    %392 = vector.load %arg10[%c3_223, %c0_224, %c0_225] : memref<6x32x1xf32, #tpu.memory_space<vmem>>, vector<1x32x1xf32>
    %393 = vector.shape_cast %392 : vector<1x32x1xf32> to vector<32x1xf32>
    %c3_226 = arith.constant 3 : index
    %c0_227 = arith.constant 0 : index
    %c0_228 = arith.constant 0 : index
    %394 = vector.load %arg11[%c3_226, %c0_227, %c0_228] : memref<6x32x1xf32, #tpu.memory_space<vmem>>, vector<1x32x1xf32>
    %395 = vector.shape_cast %394 : vector<1x32x1xf32> to vector<32x1xf32>
    %396 = vector.shape_cast %391 : vector<32x128xf32> to vector<1x32x128xf32>
    %cst_229 = arith.constant dense<0.000000e+00> : vector<1xf32>
    %397 = vector.multi_reduction <add>, %396, %cst_229 [1, 2] : vector<1x32x128xf32> to vector<1xf32>
    %398 = vector.shape_cast %397 : vector<1xf32> to vector<1x1x1xf32>
    %399 = vector.extract %398[0, 0, 0] : f32 from vector<1x1x1xf32>
    %cst_230 = arith.constant 4.096000e+03 : f32
    %400 = arith.divf %399, %cst_230 : f32
    %401 = vector.broadcast %400 : f32 to vector<32x128xf32>
    %402 = arith.subf %391, %401 : vector<32x128xf32>
    %403 = arith.mulf %402, %402 : vector<32x128xf32>
    %404 = vector.shape_cast %403 : vector<32x128xf32> to vector<1x32x128xf32>
    %cst_231 = arith.constant dense<0.000000e+00> : vector<1xf32>
    %405 = vector.multi_reduction <add>, %404, %cst_231 [1, 2] : vector<1x32x128xf32> to vector<1xf32>
    %406 = vector.shape_cast %405 : vector<1xf32> to vector<1x1x1xf32>
    %407 = vector.extract %406[0, 0, 0] : f32 from vector<1x1x1xf32>
    %cst_232 = arith.constant 4.096000e+03 : f32
    %408 = arith.divf %407, %cst_232 : f32
    %409 = vector.broadcast %400 : f32 to vector<32x128xf32>
    %410 = arith.subf %391, %409 : vector<32x128xf32>
    %cst_233 = arith.constant 9.99999993E-9 : f32
    %411 = arith.addf %408, %cst_233 : f32
    %412 = math.rsqrt %411 : f32
    %413 = vector.broadcast %412 : f32 to vector<32x128xf32>
    %414 = arith.mulf %410, %413 : vector<32x128xf32>
    %415 = vector.broadcast %393 : vector<32x1xf32> to vector<32x128xf32>
    %416 = arith.mulf %414, %415 : vector<32x128xf32>
    %417 = vector.broadcast %395 : vector<32x1xf32> to vector<32x128xf32>
    %418 = arith.addf %416, %417 : vector<32x128xf32>
    %c1_i32_234 = arith.constant 1 : i32
    %419 = tpu.dynamic_rotate %418 by %c1_i32_234 dim 1 : vector<32x128xf32>, i32 -> vector<32x128xf32>
    %c1_i32_235 = arith.constant 1 : i32
    %420 = vector.broadcast %c1_i32_235 : i32 to vector<32x128xi32>
    %421 = arith.cmpi sge, %25, %420 : vector<32x128xi32>
    %cst_236 = arith.constant 0.000000e+00 : f32
    %422 = vector.broadcast %cst_236 : f32 to vector<32x128xf32>
    %423 = arith.select %421, %419, %422 : vector<32x128xi1>, vector<32x128xf32>
    %c127_i32_237 = arith.constant 127 : i32
    %424 = tpu.dynamic_rotate %418 by %c127_i32_237 dim 1 : vector<32x128xf32>, i32 -> vector<32x128xf32>
    %c127_i32_238 = arith.constant 127 : i32
    %425 = vector.broadcast %c127_i32_238 : i32 to vector<32x128xi32>
    %426 = arith.cmpi slt, %25, %425 : vector<32x128xi32>
    %cst_239 = arith.constant 0.000000e+00 : f32
    %427 = vector.broadcast %cst_239 : f32 to vector<32x128xf32>
    %428 = arith.select %426, %424, %427 : vector<32x128xi1>, vector<32x128xf32>
    %c3_240 = arith.constant 3 : index
    %c0_241 = arith.constant 0 : index
    %c0_242 = arith.constant 0 : index
    %c0_243 = arith.constant 0 : index
    %429 = vector.load %arg12[%c3_240, %c0_241, %c0_242, %c0_243] : memref<6x3x32x1xf32, #tpu.memory_space<vmem>>, vector<1x1x32x1xf32>
    %430 = vector.shape_cast %429 : vector<1x1x32x1xf32> to vector<32x1xf32>
    %431 = vector.broadcast %430 : vector<32x1xf32> to vector<32x128xf32>
    %432 = arith.mulf %431, %423 : vector<32x128xf32>
    %c3_244 = arith.constant 3 : index
    %c1_245 = arith.constant 1 : index
    %c0_246 = arith.constant 0 : index
    %c0_247 = arith.constant 0 : index
    %433 = vector.load %arg12[%c3_244, %c1_245, %c0_246, %c0_247] : memref<6x3x32x1xf32, #tpu.memory_space<vmem>>, vector<1x1x32x1xf32>
    %434 = vector.shape_cast %433 : vector<1x1x32x1xf32> to vector<32x1xf32>
    %435 = vector.broadcast %434 : vector<32x1xf32> to vector<32x128xf32>
    %436 = arith.mulf %435, %418 : vector<32x128xf32>
    %437 = arith.addf %432, %436 : vector<32x128xf32>
    %c3_248 = arith.constant 3 : index
    %c2_249 = arith.constant 2 : index
    %c0_250 = arith.constant 0 : index
    %c0_251 = arith.constant 0 : index
    %438 = vector.load %arg12[%c3_248, %c2_249, %c0_250, %c0_251] : memref<6x3x32x1xf32, #tpu.memory_space<vmem>>, vector<1x1x32x1xf32>
    %439 = vector.shape_cast %438 : vector<1x1x32x1xf32> to vector<32x1xf32>
    %440 = vector.broadcast %439 : vector<32x1xf32> to vector<32x128xf32>
    %441 = arith.mulf %440, %428 : vector<32x128xf32>
    %442 = arith.addf %437, %441 : vector<32x128xf32>
    %c3_252 = arith.constant 3 : index
    %c0_253 = arith.constant 0 : index
    %c0_254 = arith.constant 0 : index
    %443 = vector.load %arg13[%c3_252, %c0_253, %c0_254] : memref<6x32x1xf32, #tpu.memory_space<vmem>>, vector<1x32x1xf32>
    %444 = vector.shape_cast %443 : vector<1x32x1xf32> to vector<32x1xf32>
    %445 = vector.broadcast %444 : vector<32x1xf32> to vector<32x128xf32>
    %446 = arith.addf %442, %445 : vector<32x128xf32>
    %cst_255 = arith.constant 0.000000e+00 : f32
    %447 = vector.broadcast %cst_255 : f32 to vector<32x128xf32>
    %448 = arith.cmpf oge, %446, %447 : vector<32x128xf32>
    %449 = vector.broadcast %369 : f32 to vector<32x128xf32>
    %450 = arith.mulf %449, %446 : vector<32x128xf32>
    %451 = arith.select %448, %446, %450 : vector<32x128xi1>, vector<32x128xf32>
    %c3_256 = arith.constant 3 : index
    %c0_257 = arith.constant 0 : index
    %c0_258 = arith.constant 0 : index
    %452 = vector.load %arg14[%c3_256, %c0_257, %c0_258] : memref<6x32x1xf32, #tpu.memory_space<vmem>>, vector<1x32x1xf32>
    %453 = vector.shape_cast %452 : vector<1x32x1xf32> to vector<32x1xf32>
    %c3_259 = arith.constant 3 : index
    %c0_260 = arith.constant 0 : index
    %c0_261 = arith.constant 0 : index
    %454 = vector.load %arg15[%c3_259, %c0_260, %c0_261] : memref<6x32x1xf32, #tpu.memory_space<vmem>>, vector<1x32x1xf32>
    %455 = vector.shape_cast %454 : vector<1x32x1xf32> to vector<32x1xf32>
    %456 = vector.shape_cast %451 : vector<32x128xf32> to vector<1x32x128xf32>
    %cst_262 = arith.constant dense<0.000000e+00> : vector<1xf32>
    %457 = vector.multi_reduction <add>, %456, %cst_262 [1, 2] : vector<1x32x128xf32> to vector<1xf32>
    %458 = vector.shape_cast %457 : vector<1xf32> to vector<1x1x1xf32>
    %459 = vector.extract %458[0, 0, 0] : f32 from vector<1x1x1xf32>
    %cst_263 = arith.constant 4.096000e+03 : f32
    %460 = arith.divf %459, %cst_263 : f32
    %461 = vector.broadcast %460 : f32 to vector<32x128xf32>
    %462 = arith.subf %451, %461 : vector<32x128xf32>
    %463 = arith.mulf %462, %462 : vector<32x128xf32>
    %464 = vector.shape_cast %463 : vector<32x128xf32> to vector<1x32x128xf32>
    %cst_264 = arith.constant dense<0.000000e+00> : vector<1xf32>
    %465 = vector.multi_reduction <add>, %464, %cst_264 [1, 2] : vector<1x32x128xf32> to vector<1xf32>
    %466 = vector.shape_cast %465 : vector<1xf32> to vector<1x1x1xf32>
    %467 = vector.extract %466[0, 0, 0] : f32 from vector<1x1x1xf32>
    %cst_265 = arith.constant 4.096000e+03 : f32
    %468 = arith.divf %467, %cst_265 : f32
    %469 = vector.broadcast %460 : f32 to vector<32x128xf32>
    %470 = arith.subf %451, %469 : vector<32x128xf32>
    %cst_266 = arith.constant 9.99999993E-9 : f32
    %471 = arith.addf %468, %cst_266 : f32
    %472 = math.rsqrt %471 : f32
    %473 = vector.broadcast %472 : f32 to vector<32x128xf32>
    %474 = arith.mulf %470, %473 : vector<32x128xf32>
    %475 = vector.broadcast %453 : vector<32x1xf32> to vector<32x128xf32>
    %476 = arith.mulf %474, %475 : vector<32x128xf32>
    %477 = vector.broadcast %455 : vector<32x1xf32> to vector<32x128xf32>
    %478 = arith.addf %476, %477 : vector<32x128xf32>
    %c3_267 = arith.constant 3 : index
    %c0_268 = arith.constant 0 : index
    %c0_269 = arith.constant 0 : index
    %479 = vector.load %arg16[%c3_267, %c0_268, %c0_269] : memref<6x16x32xf32, #tpu.memory_space<vmem>>, vector<1x16x32xf32>
    %480 = vector.shape_cast %479 : vector<1x16x32xf32> to vector<16x32xf32>
    %cst_270 = arith.constant dense<0.000000e+00> : vector<16x128xf32>
    %481 = tpu.matmul %480, %478, %cst_270 {dimension_numbers = #tpu.dot_dimension_numbers<[1], [0], [0], [1], [0, 0, 1, 1], [], []>} : vector<16x32xf32>, vector<32x128xf32>, vector<16x128xf32> -> vector<16x128xf32>
    %c3_271 = arith.constant 3 : index
    %c0_272 = arith.constant 0 : index
    %c0_273 = arith.constant 0 : index
    %482 = vector.load %arg17[%c3_271, %c0_272, %c0_273] : memref<6x16x1xf32, #tpu.memory_space<vmem>>, vector<1x16x1xf32>
    %483 = vector.shape_cast %482 : vector<1x16x1xf32> to vector<16x1xf32>
    %484 = vector.broadcast %483 : vector<16x1xf32> to vector<16x128xf32>
    %485 = arith.addf %481, %484 : vector<16x128xf32>
    %c8 = arith.constant 8 : index
    %486 = memref.load %arg1[%c8] : memref<12xf32, #tpu.memory_space<smem>>
    %c9 = arith.constant 9 : index
    %487 = memref.load %arg1[%c9] : memref<12xf32, #tpu.memory_space<smem>>
    %c4_274 = arith.constant 4 : index
    %c0_275 = arith.constant 0 : index
    %c0_276 = arith.constant 0 : index
    %488 = vector.load %arg7[%c4_274, %c0_275, %c0_276] : memref<6x32x16xf32, #tpu.memory_space<vmem>>, vector<1x32x16xf32>
    %489 = vector.shape_cast %488 : vector<1x32x16xf32> to vector<32x16xf32>
    %cst_277 = arith.constant dense<0.000000e+00> : vector<32x128xf32>
    %490 = tpu.matmul %489, %485, %cst_277 {dimension_numbers = #tpu.dot_dimension_numbers<[1], [0], [0], [1], [0, 0, 1, 1], [], []>} : vector<32x16xf32>, vector<16x128xf32>, vector<32x128xf32> -> vector<32x128xf32>
    %c4_278 = arith.constant 4 : index
    %c0_279 = arith.constant 0 : index
    %c0_280 = arith.constant 0 : index
    %491 = vector.load %arg9[%c4_278, %c0_279, %c0_280] : memref<6x32x1xf32, #tpu.memory_space<vmem>>, vector<1x32x1xf32>
    %492 = vector.shape_cast %491 : vector<1x32x1xf32> to vector<32x1xf32>
    %493 = vector.broadcast %492 : vector<32x1xf32> to vector<32x128xf32>
    %494 = arith.addf %490, %493 : vector<32x128xf32>
    %cst_281 = arith.constant 0.000000e+00 : f32
    %495 = vector.broadcast %cst_281 : f32 to vector<32x128xf32>
    %496 = arith.cmpf oge, %494, %495 : vector<32x128xf32>
    %497 = vector.broadcast %486 : f32 to vector<32x128xf32>
    %498 = arith.mulf %497, %494 : vector<32x128xf32>
    %499 = arith.select %496, %494, %498 : vector<32x128xi1>, vector<32x128xf32>
    %c4_282 = arith.constant 4 : index
    %c0_283 = arith.constant 0 : index
    %c0_284 = arith.constant 0 : index
    %500 = vector.load %arg10[%c4_282, %c0_283, %c0_284] : memref<6x32x1xf32, #tpu.memory_space<vmem>>, vector<1x32x1xf32>
    %501 = vector.shape_cast %500 : vector<1x32x1xf32> to vector<32x1xf32>
    %c4_285 = arith.constant 4 : index
    %c0_286 = arith.constant 0 : index
    %c0_287 = arith.constant 0 : index
    %502 = vector.load %arg11[%c4_285, %c0_286, %c0_287] : memref<6x32x1xf32, #tpu.memory_space<vmem>>, vector<1x32x1xf32>
    %503 = vector.shape_cast %502 : vector<1x32x1xf32> to vector<32x1xf32>
    %504 = vector.shape_cast %499 : vector<32x128xf32> to vector<1x32x128xf32>
    %cst_288 = arith.constant dense<0.000000e+00> : vector<1xf32>
    %505 = vector.multi_reduction <add>, %504, %cst_288 [1, 2] : vector<1x32x128xf32> to vector<1xf32>
    %506 = vector.shape_cast %505 : vector<1xf32> to vector<1x1x1xf32>
    %507 = vector.extract %506[0, 0, 0] : f32 from vector<1x1x1xf32>
    %cst_289 = arith.constant 4.096000e+03 : f32
    %508 = arith.divf %507, %cst_289 : f32
    %509 = vector.broadcast %508 : f32 to vector<32x128xf32>
    %510 = arith.subf %499, %509 : vector<32x128xf32>
    %511 = arith.mulf %510, %510 : vector<32x128xf32>
    %512 = vector.shape_cast %511 : vector<32x128xf32> to vector<1x32x128xf32>
    %cst_290 = arith.constant dense<0.000000e+00> : vector<1xf32>
    %513 = vector.multi_reduction <add>, %512, %cst_290 [1, 2] : vector<1x32x128xf32> to vector<1xf32>
    %514 = vector.shape_cast %513 : vector<1xf32> to vector<1x1x1xf32>
    %515 = vector.extract %514[0, 0, 0] : f32 from vector<1x1x1xf32>
    %cst_291 = arith.constant 4.096000e+03 : f32
    %516 = arith.divf %515, %cst_291 : f32
    %517 = vector.broadcast %508 : f32 to vector<32x128xf32>
    %518 = arith.subf %499, %517 : vector<32x128xf32>
    %cst_292 = arith.constant 9.99999993E-9 : f32
    %519 = arith.addf %516, %cst_292 : f32
    %520 = math.rsqrt %519 : f32
    %521 = vector.broadcast %520 : f32 to vector<32x128xf32>
    %522 = arith.mulf %518, %521 : vector<32x128xf32>
    %523 = vector.broadcast %501 : vector<32x1xf32> to vector<32x128xf32>
    %524 = arith.mulf %522, %523 : vector<32x128xf32>
    %525 = vector.broadcast %503 : vector<32x1xf32> to vector<32x128xf32>
    %526 = arith.addf %524, %525 : vector<32x128xf32>
    %c2_i32_293 = arith.constant 2 : i32
    %527 = tpu.dynamic_rotate %526 by %c2_i32_293 dim 1 : vector<32x128xf32>, i32 -> vector<32x128xf32>
    %c2_i32_294 = arith.constant 2 : i32
    %528 = vector.broadcast %c2_i32_294 : i32 to vector<32x128xi32>
    %529 = arith.cmpi sge, %25, %528 : vector<32x128xi32>
    %cst_295 = arith.constant 0.000000e+00 : f32
    %530 = vector.broadcast %cst_295 : f32 to vector<32x128xf32>
    %531 = arith.select %529, %527, %530 : vector<32x128xi1>, vector<32x128xf32>
    %c126_i32_296 = arith.constant 126 : i32
    %532 = tpu.dynamic_rotate %526 by %c126_i32_296 dim 1 : vector<32x128xf32>, i32 -> vector<32x128xf32>
    %c126_i32_297 = arith.constant 126 : i32
    %533 = vector.broadcast %c126_i32_297 : i32 to vector<32x128xi32>
    %534 = arith.cmpi slt, %25, %533 : vector<32x128xi32>
    %cst_298 = arith.constant 0.000000e+00 : f32
    %535 = vector.broadcast %cst_298 : f32 to vector<32x128xf32>
    %536 = arith.select %534, %532, %535 : vector<32x128xi1>, vector<32x128xf32>
    %c4_299 = arith.constant 4 : index
    %c0_300 = arith.constant 0 : index
    %c0_301 = arith.constant 0 : index
    %c0_302 = arith.constant 0 : index
    %537 = vector.load %arg12[%c4_299, %c0_300, %c0_301, %c0_302] : memref<6x3x32x1xf32, #tpu.memory_space<vmem>>, vector<1x1x32x1xf32>
    %538 = vector.shape_cast %537 : vector<1x1x32x1xf32> to vector<32x1xf32>
    %539 = vector.broadcast %538 : vector<32x1xf32> to vector<32x128xf32>
    %540 = arith.mulf %539, %531 : vector<32x128xf32>
    %c4_303 = arith.constant 4 : index
    %c1_304 = arith.constant 1 : index
    %c0_305 = arith.constant 0 : index
    %c0_306 = arith.constant 0 : index
    %541 = vector.load %arg12[%c4_303, %c1_304, %c0_305, %c0_306] : memref<6x3x32x1xf32, #tpu.memory_space<vmem>>, vector<1x1x32x1xf32>
    %542 = vector.shape_cast %541 : vector<1x1x32x1xf32> to vector<32x1xf32>
    %543 = vector.broadcast %542 : vector<32x1xf32> to vector<32x128xf32>
    %544 = arith.mulf %543, %526 : vector<32x128xf32>
    %545 = arith.addf %540, %544 : vector<32x128xf32>
    %c4_307 = arith.constant 4 : index
    %c2_308 = arith.constant 2 : index
    %c0_309 = arith.constant 0 : index
    %c0_310 = arith.constant 0 : index
    %546 = vector.load %arg12[%c4_307, %c2_308, %c0_309, %c0_310] : memref<6x3x32x1xf32, #tpu.memory_space<vmem>>, vector<1x1x32x1xf32>
    %547 = vector.shape_cast %546 : vector<1x1x32x1xf32> to vector<32x1xf32>
    %548 = vector.broadcast %547 : vector<32x1xf32> to vector<32x128xf32>
    %549 = arith.mulf %548, %536 : vector<32x128xf32>
    %550 = arith.addf %545, %549 : vector<32x128xf32>
    %c4_311 = arith.constant 4 : index
    %c0_312 = arith.constant 0 : index
    %c0_313 = arith.constant 0 : index
    %551 = vector.load %arg13[%c4_311, %c0_312, %c0_313] : memref<6x32x1xf32, #tpu.memory_space<vmem>>, vector<1x32x1xf32>
    %552 = vector.shape_cast %551 : vector<1x32x1xf32> to vector<32x1xf32>
    %553 = vector.broadcast %552 : vector<32x1xf32> to vector<32x128xf32>
    %554 = arith.addf %550, %553 : vector<32x128xf32>
    %cst_314 = arith.constant 0.000000e+00 : f32
    %555 = vector.broadcast %cst_314 : f32 to vector<32x128xf32>
    %556 = arith.cmpf oge, %554, %555 : vector<32x128xf32>
    %557 = vector.broadcast %487 : f32 to vector<32x128xf32>
    %558 = arith.mulf %557, %554 : vector<32x128xf32>
    %559 = arith.select %556, %554, %558 : vector<32x128xi1>, vector<32x128xf32>
    %c4_315 = arith.constant 4 : index
    %c0_316 = arith.constant 0 : index
    %c0_317 = arith.constant 0 : index
    %560 = vector.load %arg14[%c4_315, %c0_316, %c0_317] : memref<6x32x1xf32, #tpu.memory_space<vmem>>, vector<1x32x1xf32>
    %561 = vector.shape_cast %560 : vector<1x32x1xf32> to vector<32x1xf32>
    %c4_318 = arith.constant 4 : index
    %c0_319 = arith.constant 0 : index
    %c0_320 = arith.constant 0 : index
    %562 = vector.load %arg15[%c4_318, %c0_319, %c0_320] : memref<6x32x1xf32, #tpu.memory_space<vmem>>, vector<1x32x1xf32>
    %563 = vector.shape_cast %562 : vector<1x32x1xf32> to vector<32x1xf32>
    %564 = vector.shape_cast %559 : vector<32x128xf32> to vector<1x32x128xf32>
    %cst_321 = arith.constant dense<0.000000e+00> : vector<1xf32>
    %565 = vector.multi_reduction <add>, %564, %cst_321 [1, 2] : vector<1x32x128xf32> to vector<1xf32>
    %566 = vector.shape_cast %565 : vector<1xf32> to vector<1x1x1xf32>
    %567 = vector.extract %566[0, 0, 0] : f32 from vector<1x1x1xf32>
    %cst_322 = arith.constant 4.096000e+03 : f32
    %568 = arith.divf %567, %cst_322 : f32
    %569 = vector.broadcast %568 : f32 to vector<32x128xf32>
    %570 = arith.subf %559, %569 : vector<32x128xf32>
    %571 = arith.mulf %570, %570 : vector<32x128xf32>
    %572 = vector.shape_cast %571 : vector<32x128xf32> to vector<1x32x128xf32>
    %cst_323 = arith.constant dense<0.000000e+00> : vector<1xf32>
    %573 = vector.multi_reduction <add>, %572, %cst_323 [1, 2] : vector<1x32x128xf32> to vector<1xf32>
    %574 = vector.shape_cast %573 : vector<1xf32> to vector<1x1x1xf32>
    %575 = vector.extract %574[0, 0, 0] : f32 from vector<1x1x1xf32>
    %cst_324 = arith.constant 4.096000e+03 : f32
    %576 = arith.divf %575, %cst_324 : f32
    %577 = vector.broadcast %568 : f32 to vector<32x128xf32>
    %578 = arith.subf %559, %577 : vector<32x128xf32>
    %cst_325 = arith.constant 9.99999993E-9 : f32
    %579 = arith.addf %576, %cst_325 : f32
    %580 = math.rsqrt %579 : f32
    %581 = vector.broadcast %580 : f32 to vector<32x128xf32>
    %582 = arith.mulf %578, %581 : vector<32x128xf32>
    %583 = vector.broadcast %561 : vector<32x1xf32> to vector<32x128xf32>
    %584 = arith.mulf %582, %583 : vector<32x128xf32>
    %585 = vector.broadcast %563 : vector<32x1xf32> to vector<32x128xf32>
    %586 = arith.addf %584, %585 : vector<32x128xf32>
    %c4_326 = arith.constant 4 : index
    %c0_327 = arith.constant 0 : index
    %c0_328 = arith.constant 0 : index
    %587 = vector.load %arg16[%c4_326, %c0_327, %c0_328] : memref<6x16x32xf32, #tpu.memory_space<vmem>>, vector<1x16x32xf32>
    %588 = vector.shape_cast %587 : vector<1x16x32xf32> to vector<16x32xf32>
    %cst_329 = arith.constant dense<0.000000e+00> : vector<16x128xf32>
    %589 = tpu.matmul %588, %586, %cst_329 {dimension_numbers = #tpu.dot_dimension_numbers<[1], [0], [0], [1], [0, 0, 1, 1], [], []>} : vector<16x32xf32>, vector<32x128xf32>, vector<16x128xf32> -> vector<16x128xf32>
    %c4_330 = arith.constant 4 : index
    %c0_331 = arith.constant 0 : index
    %c0_332 = arith.constant 0 : index
    %590 = vector.load %arg17[%c4_330, %c0_331, %c0_332] : memref<6x16x1xf32, #tpu.memory_space<vmem>>, vector<1x16x1xf32>
    %591 = vector.shape_cast %590 : vector<1x16x1xf32> to vector<16x1xf32>
    %592 = vector.broadcast %591 : vector<16x1xf32> to vector<16x128xf32>
    %593 = arith.addf %589, %592 : vector<16x128xf32>
    %594 = arith.addf %485, %593 : vector<16x128xf32>
    %c10 = arith.constant 10 : index
    %595 = memref.load %arg1[%c10] : memref<12xf32, #tpu.memory_space<smem>>
    %c11 = arith.constant 11 : index
    %596 = memref.load %arg1[%c11] : memref<12xf32, #tpu.memory_space<smem>>
    %c5_333 = arith.constant 5 : index
    %c0_334 = arith.constant 0 : index
    %c0_335 = arith.constant 0 : index
    %597 = vector.load %arg7[%c5_333, %c0_334, %c0_335] : memref<6x32x16xf32, #tpu.memory_space<vmem>>, vector<1x32x16xf32>
    %598 = vector.shape_cast %597 : vector<1x32x16xf32> to vector<32x16xf32>
    %cst_336 = arith.constant dense<0.000000e+00> : vector<32x128xf32>
    %599 = tpu.matmul %598, %594, %cst_336 {dimension_numbers = #tpu.dot_dimension_numbers<[1], [0], [0], [1], [0, 0, 1, 1], [], []>} : vector<32x16xf32>, vector<16x128xf32>, vector<32x128xf32> -> vector<32x128xf32>
    %c5_337 = arith.constant 5 : index
    %c0_338 = arith.constant 0 : index
    %c0_339 = arith.constant 0 : index
    %600 = vector.load %arg9[%c5_337, %c0_338, %c0_339] : memref<6x32x1xf32, #tpu.memory_space<vmem>>, vector<1x32x1xf32>
    %601 = vector.shape_cast %600 : vector<1x32x1xf32> to vector<32x1xf32>
    %602 = vector.broadcast %601 : vector<32x1xf32> to vector<32x128xf32>
    %603 = arith.addf %599, %602 : vector<32x128xf32>
    %cst_340 = arith.constant 0.000000e+00 : f32
    %604 = vector.broadcast %cst_340 : f32 to vector<32x128xf32>
    %605 = arith.cmpf oge, %603, %604 : vector<32x128xf32>
    %606 = vector.broadcast %595 : f32 to vector<32x128xf32>
    %607 = arith.mulf %606, %603 : vector<32x128xf32>
    %608 = arith.select %605, %603, %607 : vector<32x128xi1>, vector<32x128xf32>
    %c5_341 = arith.constant 5 : index
    %c0_342 = arith.constant 0 : index
    %c0_343 = arith.constant 0 : index
    %609 = vector.load %arg10[%c5_341, %c0_342, %c0_343] : memref<6x32x1xf32, #tpu.memory_space<vmem>>, vector<1x32x1xf32>
    %610 = vector.shape_cast %609 : vector<1x32x1xf32> to vector<32x1xf32>
    %c5_344 = arith.constant 5 : index
    %c0_345 = arith.constant 0 : index
    %c0_346 = arith.constant 0 : index
    %611 = vector.load %arg11[%c5_344, %c0_345, %c0_346] : memref<6x32x1xf32, #tpu.memory_space<vmem>>, vector<1x32x1xf32>
    %612 = vector.shape_cast %611 : vector<1x32x1xf32> to vector<32x1xf32>
    %613 = vector.shape_cast %608 : vector<32x128xf32> to vector<1x32x128xf32>
    %cst_347 = arith.constant dense<0.000000e+00> : vector<1xf32>
    %614 = vector.multi_reduction <add>, %613, %cst_347 [1, 2] : vector<1x32x128xf32> to vector<1xf32>
    %615 = vector.shape_cast %614 : vector<1xf32> to vector<1x1x1xf32>
    %616 = vector.extract %615[0, 0, 0] : f32 from vector<1x1x1xf32>
    %cst_348 = arith.constant 4.096000e+03 : f32
    %617 = arith.divf %616, %cst_348 : f32
    %618 = vector.broadcast %617 : f32 to vector<32x128xf32>
    %619 = arith.subf %608, %618 : vector<32x128xf32>
    %620 = arith.mulf %619, %619 : vector<32x128xf32>
    %621 = vector.shape_cast %620 : vector<32x128xf32> to vector<1x32x128xf32>
    %cst_349 = arith.constant dense<0.000000e+00> : vector<1xf32>
    %622 = vector.multi_reduction <add>, %621, %cst_349 [1, 2] : vector<1x32x128xf32> to vector<1xf32>
    %623 = vector.shape_cast %622 : vector<1xf32> to vector<1x1x1xf32>
    %624 = vector.extract %623[0, 0, 0] : f32 from vector<1x1x1xf32>
    %cst_350 = arith.constant 4.096000e+03 : f32
    %625 = arith.divf %624, %cst_350 : f32
    %626 = vector.broadcast %617 : f32 to vector<32x128xf32>
    %627 = arith.subf %608, %626 : vector<32x128xf32>
    %cst_351 = arith.constant 9.99999993E-9 : f32
    %628 = arith.addf %625, %cst_351 : f32
    %629 = math.rsqrt %628 : f32
    %630 = vector.broadcast %629 : f32 to vector<32x128xf32>
    %631 = arith.mulf %627, %630 : vector<32x128xf32>
    %632 = vector.broadcast %610 : vector<32x1xf32> to vector<32x128xf32>
    %633 = arith.mulf %631, %632 : vector<32x128xf32>
    %634 = vector.broadcast %612 : vector<32x1xf32> to vector<32x128xf32>
    %635 = arith.addf %633, %634 : vector<32x128xf32>
    %c4_i32_352 = arith.constant 4 : i32
    %636 = tpu.dynamic_rotate %635 by %c4_i32_352 dim 1 : vector<32x128xf32>, i32 -> vector<32x128xf32>
    %c4_i32_353 = arith.constant 4 : i32
    %637 = vector.broadcast %c4_i32_353 : i32 to vector<32x128xi32>
    %638 = arith.cmpi sge, %25, %637 : vector<32x128xi32>
    %cst_354 = arith.constant 0.000000e+00 : f32
    %639 = vector.broadcast %cst_354 : f32 to vector<32x128xf32>
    %640 = arith.select %638, %636, %639 : vector<32x128xi1>, vector<32x128xf32>
    %c124_i32_355 = arith.constant 124 : i32
    %641 = tpu.dynamic_rotate %635 by %c124_i32_355 dim 1 : vector<32x128xf32>, i32 -> vector<32x128xf32>
    %c124_i32_356 = arith.constant 124 : i32
    %642 = vector.broadcast %c124_i32_356 : i32 to vector<32x128xi32>
    %643 = arith.cmpi slt, %25, %642 : vector<32x128xi32>
    %cst_357 = arith.constant 0.000000e+00 : f32
    %644 = vector.broadcast %cst_357 : f32 to vector<32x128xf32>
    %645 = arith.select %643, %641, %644 : vector<32x128xi1>, vector<32x128xf32>
    %c5_358 = arith.constant 5 : index
    %c0_359 = arith.constant 0 : index
    %c0_360 = arith.constant 0 : index
    %c0_361 = arith.constant 0 : index
    %646 = vector.load %arg12[%c5_358, %c0_359, %c0_360, %c0_361] : memref<6x3x32x1xf32, #tpu.memory_space<vmem>>, vector<1x1x32x1xf32>
    %647 = vector.shape_cast %646 : vector<1x1x32x1xf32> to vector<32x1xf32>
    %648 = vector.broadcast %647 : vector<32x1xf32> to vector<32x128xf32>
    %649 = arith.mulf %648, %640 : vector<32x128xf32>
    %c5_362 = arith.constant 5 : index
    %c1_363 = arith.constant 1 : index
    %c0_364 = arith.constant 0 : index
    %c0_365 = arith.constant 0 : index
    %650 = vector.load %arg12[%c5_362, %c1_363, %c0_364, %c0_365] : memref<6x3x32x1xf32, #tpu.memory_space<vmem>>, vector<1x1x32x1xf32>
    %651 = vector.shape_cast %650 : vector<1x1x32x1xf32> to vector<32x1xf32>
    %652 = vector.broadcast %651 : vector<32x1xf32> to vector<32x128xf32>
    %653 = arith.mulf %652, %635 : vector<32x128xf32>
    %654 = arith.addf %649, %653 : vector<32x128xf32>
    %c5_366 = arith.constant 5 : index
    %c2_367 = arith.constant 2 : index
    %c0_368 = arith.constant 0 : index
    %c0_369 = arith.constant 0 : index
    %655 = vector.load %arg12[%c5_366, %c2_367, %c0_368, %c0_369] : memref<6x3x32x1xf32, #tpu.memory_space<vmem>>, vector<1x1x32x1xf32>
    %656 = vector.shape_cast %655 : vector<1x1x32x1xf32> to vector<32x1xf32>
    %657 = vector.broadcast %656 : vector<32x1xf32> to vector<32x128xf32>
    %658 = arith.mulf %657, %645 : vector<32x128xf32>
    %659 = arith.addf %654, %658 : vector<32x128xf32>
    %c5_370 = arith.constant 5 : index
    %c0_371 = arith.constant 0 : index
    %c0_372 = arith.constant 0 : index
    %660 = vector.load %arg13[%c5_370, %c0_371, %c0_372] : memref<6x32x1xf32, #tpu.memory_space<vmem>>, vector<1x32x1xf32>
    %661 = vector.shape_cast %660 : vector<1x32x1xf32> to vector<32x1xf32>
    %662 = vector.broadcast %661 : vector<32x1xf32> to vector<32x128xf32>
    %663 = arith.addf %659, %662 : vector<32x128xf32>
    %cst_373 = arith.constant 0.000000e+00 : f32
    %664 = vector.broadcast %cst_373 : f32 to vector<32x128xf32>
    %665 = arith.cmpf oge, %663, %664 : vector<32x128xf32>
    %666 = vector.broadcast %596 : f32 to vector<32x128xf32>
    %667 = arith.mulf %666, %663 : vector<32x128xf32>
    %668 = arith.select %665, %663, %667 : vector<32x128xi1>, vector<32x128xf32>
    %c5_374 = arith.constant 5 : index
    %c0_375 = arith.constant 0 : index
    %c0_376 = arith.constant 0 : index
    %669 = vector.load %arg14[%c5_374, %c0_375, %c0_376] : memref<6x32x1xf32, #tpu.memory_space<vmem>>, vector<1x32x1xf32>
    %670 = vector.shape_cast %669 : vector<1x32x1xf32> to vector<32x1xf32>
    %c5_377 = arith.constant 5 : index
    %c0_378 = arith.constant 0 : index
    %c0_379 = arith.constant 0 : index
    %671 = vector.load %arg15[%c5_377, %c0_378, %c0_379] : memref<6x32x1xf32, #tpu.memory_space<vmem>>, vector<1x32x1xf32>
    %672 = vector.shape_cast %671 : vector<1x32x1xf32> to vector<32x1xf32>
    %673 = vector.shape_cast %668 : vector<32x128xf32> to vector<1x32x128xf32>
    %cst_380 = arith.constant dense<0.000000e+00> : vector<1xf32>
    %674 = vector.multi_reduction <add>, %673, %cst_380 [1, 2] : vector<1x32x128xf32> to vector<1xf32>
    %675 = vector.shape_cast %674 : vector<1xf32> to vector<1x1x1xf32>
    %676 = vector.extract %675[0, 0, 0] : f32 from vector<1x1x1xf32>
    %cst_381 = arith.constant 4.096000e+03 : f32
    %677 = arith.divf %676, %cst_381 : f32
    %678 = vector.broadcast %677 : f32 to vector<32x128xf32>
    %679 = arith.subf %668, %678 : vector<32x128xf32>
    %680 = arith.mulf %679, %679 : vector<32x128xf32>
    %681 = vector.shape_cast %680 : vector<32x128xf32> to vector<1x32x128xf32>
    %cst_382 = arith.constant dense<0.000000e+00> : vector<1xf32>
    %682 = vector.multi_reduction <add>, %681, %cst_382 [1, 2] : vector<1x32x128xf32> to vector<1xf32>
    %683 = vector.shape_cast %682 : vector<1xf32> to vector<1x1x1xf32>
    %684 = vector.extract %683[0, 0, 0] : f32 from vector<1x1x1xf32>
    %cst_383 = arith.constant 4.096000e+03 : f32
    %685 = arith.divf %684, %cst_383 : f32
    %686 = vector.broadcast %677 : f32 to vector<32x128xf32>
    %687 = arith.subf %668, %686 : vector<32x128xf32>
    %cst_384 = arith.constant 9.99999993E-9 : f32
    %688 = arith.addf %685, %cst_384 : f32
    %689 = math.rsqrt %688 : f32
    %690 = vector.broadcast %689 : f32 to vector<32x128xf32>
    %691 = arith.mulf %687, %690 : vector<32x128xf32>
    %692 = vector.broadcast %670 : vector<32x1xf32> to vector<32x128xf32>
    %693 = arith.mulf %691, %692 : vector<32x128xf32>
    %694 = vector.broadcast %672 : vector<32x1xf32> to vector<32x128xf32>
    %695 = arith.addf %693, %694 : vector<32x128xf32>
    %c5_385 = arith.constant 5 : index
    %c0_386 = arith.constant 0 : index
    %c0_387 = arith.constant 0 : index
    %696 = vector.load %arg16[%c5_385, %c0_386, %c0_387] : memref<6x16x32xf32, #tpu.memory_space<vmem>>, vector<1x16x32xf32>
    %697 = vector.shape_cast %696 : vector<1x16x32xf32> to vector<16x32xf32>
    %cst_388 = arith.constant dense<0.000000e+00> : vector<16x128xf32>
    %698 = tpu.matmul %697, %695, %cst_388 {dimension_numbers = #tpu.dot_dimension_numbers<[1], [0], [0], [1], [0, 0, 1, 1], [], []>} : vector<16x32xf32>, vector<32x128xf32>, vector<16x128xf32> -> vector<16x128xf32>
    %c5_389 = arith.constant 5 : index
    %c0_390 = arith.constant 0 : index
    %c0_391 = arith.constant 0 : index
    %699 = vector.load %arg17[%c5_389, %c0_390, %c0_391] : memref<6x16x1xf32, #tpu.memory_space<vmem>>, vector<1x16x1xf32>
    %700 = vector.shape_cast %699 : vector<1x16x1xf32> to vector<16x1xf32>
    %701 = vector.broadcast %700 : vector<16x1xf32> to vector<16x128xf32>
    %702 = arith.addf %698, %701 : vector<16x128xf32>
    %703 = arith.addf %594, %702 : vector<16x128xf32>
    %c0_392 = arith.constant 0 : index
    %c0_393 = arith.constant 0 : index
    %704 = vector.load %arg18[%c0_392, %c0_393] : memref<16x16xf32, #tpu.memory_space<vmem>>, vector<16x16xf32>
    %cst_394 = arith.constant dense<0.000000e+00> : vector<16x128xf32>
    %705 = tpu.matmul %704, %703, %cst_394 {dimension_numbers = #tpu.dot_dimension_numbers<[1], [0], [0], [1], [0, 0, 1, 1], [], []>} : vector<16x16xf32>, vector<16x128xf32>, vector<16x128xf32> -> vector<16x128xf32>
    %c0_395 = arith.constant 0 : index
    %c0_396 = arith.constant 0 : index
    %706 = vector.load %arg19[%c0_395, %c0_396] : memref<16x1xf32, #tpu.memory_space<vmem>>, vector<16x1xf32>
    %707 = vector.broadcast %706 : vector<16x1xf32> to vector<16x128xf32>
    %708 = arith.addf %705, %707 : vector<16x128xf32>
    %cst_397 = arith.constant 0.000000e+00 : f32
    %709 = vector.broadcast %cst_397 : f32 to vector<16x128xf32>
    %710 = arith.maximumf %708, %709 : vector<16x128xf32>
    %711 = arith.mulf %1, %710 : vector<16x128xf32>
    %c0_398 = arith.constant 0 : index
    %c0_399 = arith.constant 0 : index
    %c0_400 = arith.constant 0 : index
    %712 = vector.load %arg20[%c0_398, %c0_399, %c0_400] : memref<1x16x128xf32, #tpu.memory_space<vmem>>, vector<1x16x128xf32>
    %713 = vector.shape_cast %712 : vector<1x16x128xf32> to vector<16x128xf32>
    %714 = vector.shape_cast %711 : vector<16x128xf32> to vector<1x16x128xf32>
    tpu.vector_store %arg20[%c0_398, %c0_399, %c0_400], %714 {strides = array<i32>} : memref<1x16x128xf32, #tpu.memory_space<vmem>>, vector<1x16x128xf32>,
    return
  }
  func.func @transform_0(%arg0: i32) -> i32 {
    %c0_i32 = arith.constant 0 : i32
    %c0_i32_0 = arith.constant 0 : i32
    return %c0_i32 : i32
  }
  func.func @transform_1(%arg0: i32) -> (i32, i32, i32) {
    %c0_i32 = arith.constant 0 : i32
    %c0_i32_0 = arith.constant 0 : i32
    %c0_i32_1 = arith.constant 0 : i32
    return %arg0, %c0_i32, %c0_i32_0 : i32, i32, i32
  }
  func.func @transform_2(%arg0: i32) -> (i32, i32, i32, i32) {
    %c0_i32 = arith.constant 0 : i32
    %c0_i32_0 = arith.constant 0 : i32
    %c0_i32_1 = arith.constant 0 : i32
    %c0_i32_2 = arith.constant 0 : i32
    return %arg0, %c0_i32, %c0_i32_0, %c0_i32_1 : i32, i32, i32, i32
  }
  func.func @transform_3(%arg0: i32) -> (i32, i32, i32, i32) {
    %c0_i32 = arith.constant 0 : i32
    %c0_i32_0 = arith.constant 0 : i32
    %c0_i32_1 = arith.constant 0 : i32
    %c0_i32_2 = arith.constant 0 : i32
    return %arg0, %c0_i32, %c0_i32_0, %c0_i32_1 : i32, i32, i32, i32
  }
  func.func @transform_4(%arg0: i32) -> (i32, i32) {
    %c0_i32 = arith.constant 0 : i32
    %c0_i32_0 = arith.constant 0 : i32
    %c0_i32_1 = arith.constant 0 : i32
    return %c0_i32, %c0_i32_0 : i32, i32
  }
  func.func @transform_5(%arg0: i32) -> (i32, i32) {
    %c0_i32 = arith.constant 0 : i32
    %c0_i32_0 = arith.constant 0 : i32
    %c0_i32_1 = arith.constant 0 : i32
    return %c0_i32, %c0_i32_0 : i32, i32
  }
  func.func @transform_6(%arg0: i32) -> (i32, i32, i32) {
    %c0_i32 = arith.constant 0 : i32
    %c0_i32_0 = arith.constant 0 : i32
    %c0_i32_1 = arith.constant 0 : i32
    %c0_i32_2 = arith.constant 0 : i32
    return %c0_i32, %c0_i32_0, %c0_i32_1 : i32, i32, i32
  }
  func.func @transform_7(%arg0: i32) -> (i32, i32, i32) {
    %c0_i32 = arith.constant 0 : i32
    %c0_i32_0 = arith.constant 0 : i32
    %c0_i32_1 = arith.constant 0 : i32
    %c0_i32_2 = arith.constant 0 : i32
    return %c0_i32, %c0_i32_0, %c0_i32_1 : i32, i32, i32
  }
  func.func @transform_8(%arg0: i32) -> (i32, i32, i32) {
    %c0_i32 = arith.constant 0 : i32
    %c0_i32_0 = arith.constant 0 : i32
    %c0_i32_1 = arith.constant 0 : i32
    %c0_i32_2 = arith.constant 0 : i32
    return %c0_i32, %c0_i32_0, %c0_i32_1 : i32, i32, i32
  }
  func.func @transform_9(%arg0: i32) -> (i32, i32, i32) {
    %c0_i32 = arith.constant 0 : i32
    %c0_i32_0 = arith.constant 0 : i32
    %c0_i32_1 = arith.constant 0 : i32
    %c0_i32_2 = arith.constant 0 : i32
    return %c0_i32, %c0_i32_0, %c0_i32_1 : i32, i32, i32
  }
  func.func @transform_10(%arg0: i32) -> (i32, i32, i32) {
    %c0_i32 = arith.constant 0 : i32
    %c0_i32_0 = arith.constant 0 : i32
    %c0_i32_1 = arith.constant 0 : i32
    %c0_i32_2 = arith.constant 0 : i32
    return %c0_i32, %c0_i32_0, %c0_i32_1 : i32, i32, i32
  }
  func.func @transform_11(%arg0: i32) -> (i32, i32, i32, i32) {
    %c0_i32 = arith.constant 0 : i32
    %c0_i32_0 = arith.constant 0 : i32
    %c0_i32_1 = arith.constant 0 : i32
    %c0_i32_2 = arith.constant 0 : i32
    %c0_i32_3 = arith.constant 0 : i32
    return %c0_i32, %c0_i32_0, %c0_i32_1, %c0_i32_2 : i32, i32, i32, i32
  }
  func.func @transform_12(%arg0: i32) -> (i32, i32, i32) {
    %c0_i32 = arith.constant 0 : i32
    %c0_i32_0 = arith.constant 0 : i32
    %c0_i32_1 = arith.constant 0 : i32
    %c0_i32_2 = arith.constant 0 : i32
    return %c0_i32, %c0_i32_0, %c0_i32_1 : i32, i32, i32
  }
  func.func @transform_13(%arg0: i32) -> (i32, i32, i32) {
    %c0_i32 = arith.constant 0 : i32
    %c0_i32_0 = arith.constant 0 : i32
    %c0_i32_1 = arith.constant 0 : i32
    %c0_i32_2 = arith.constant 0 : i32
    return %c0_i32, %c0_i32_0, %c0_i32_1 : i32, i32, i32
  }
  func.func @transform_14(%arg0: i32) -> (i32, i32, i32) {
    %c0_i32 = arith.constant 0 : i32
    %c0_i32_0 = arith.constant 0 : i32
    %c0_i32_1 = arith.constant 0 : i32
    %c0_i32_2 = arith.constant 0 : i32
    return %c0_i32, %c0_i32_0, %c0_i32_1 : i32, i32, i32
  }
  func.func @transform_15(%arg0: i32) -> (i32, i32, i32) {
    %c0_i32 = arith.constant 0 : i32
    %c0_i32_0 = arith.constant 0 : i32
    %c0_i32_1 = arith.constant 0 : i32
    %c0_i32_2 = arith.constant 0 : i32
    return %c0_i32, %c0_i32_0, %c0_i32_1 : i32, i32, i32
  }
  func.func @transform_16(%arg0: i32) -> (i32, i32, i32) {
    %c0_i32 = arith.constant 0 : i32
    %c0_i32_0 = arith.constant 0 : i32
    %c0_i32_1 = arith.constant 0 : i32
    %c0_i32_2 = arith.constant 0 : i32
    return %c0_i32, %c0_i32_0, %c0_i32_1 : i32, i32, i32
  }
  func.func @transform_17(%arg0: i32) -> (i32, i32) {
    %c0_i32 = arith.constant 0 : i32
    %c0_i32_0 = arith.constant 0 : i32
    %c0_i32_1 = arith.constant 0 : i32
    return %c0_i32, %c0_i32_0 : i32, i32
  }
  func.func @transform_18(%arg0: i32) -> (i32, i32) {
    %c0_i32 = arith.constant 0 : i32
    %c0_i32_0 = arith.constant 0 : i32
    %c0_i32_1 = arith.constant 0 : i32
    return %c0_i32, %c0_i32_0 : i32, i32
  }
  func.func @transform_19(%arg0: i32) -> (i32, i32, i32) {
    %c0_i32 = arith.constant 0 : i32
    %c0_i32_0 = arith.constant 0 : i32
    %c0_i32_1 = arith.constant 0 : i32
    return %arg0, %c0_i32, %c0_i32_0 : i32, i32, i32
  }
  func.func @transform_20(%arg0: i32) -> (i32, i32, i32, i32) {
    %c0_i32 = arith.constant 0 : i32
    %c0_i32_0 = arith.constant 0 : i32
    %c0_i32_1 = arith.constant 0 : i32
    %c0_i32_2 = arith.constant 0 : i32
    return %arg0, %c0_i32, %c0_i32_0, %c0_i32_1 : i32, i32, i32, i32
  }
}

</mosaic_0001>

<llo_original>
// kernel: tpu_custom_call.1
$region0: #{tpu_custom_call.1}
  #allocation0 [shape = 'u32[]', space=smem, size = 0x4, offset = 0x4, fixed_abs, tag = 'smem constant byte address 0x4 - core index']
  #allocation1 [shape = 'u32[144,128]{1,0:T(1,128)}', space=vmem, size = 0x12000, scoped, tag = 'internal scratch']
  %s0 = inlined_call_operand.vmem [shape: f32[12], index: 0, kind: input, shape index: {}]
  %s1 = inlined_call_operand.vmem [shape: f32[2,16,128], index: 1, kind: input, shape index: {}]
  %s2 = inlined_call_operand.vmem [shape: f32[2,2,24,128], index: 2, kind: input, shape index: {}]
  %s3 = inlined_call_operand.vmem [shape: f32[2,2,32,1], index: 3, kind: input, shape index: {}]
  %s4 = inlined_call_operand.vmem [shape: f32[16,16], index: 4, kind: input, shape index: {}]
  %s5 = inlined_call_operand.vmem [shape: f32[16,1], index: 5, kind: input, shape index: {}]
  %s6 = inlined_call_operand.vmem [shape: f32[6,32,16], index: 6, kind: input, shape index: {}]
  %s7 = inlined_call_operand.vmem [shape: f32[2,32,24], index: 7, kind: input, shape index: {}]
  %s8 = inlined_call_operand.vmem [shape: f32[6,32,1], index: 8, kind: input, shape index: {}]
  %s9 = inlined_call_operand.vmem [shape: f32[6,32,1], index: 9, kind: input, shape index: {}]
  %s10 = inlined_call_operand.vmem [shape: f32[6,32,1], index: 10, kind: input, shape index: {}]
  %s11 = inlined_call_operand.vmem [shape: f32[6,3,32,1], index: 11, kind: input, shape index: {}]
  %s12 = inlined_call_operand.vmem [shape: f32[6,32,1], index: 12, kind: input, shape index: {}]
  %s13 = inlined_call_operand.vmem [shape: f32[6,32,1], index: 13, kind: input, shape index: {}]
  %s14 = inlined_call_operand.vmem [shape: f32[6,32,1], index: 14, kind: input, shape index: {}]
  %s15 = inlined_call_operand.vmem [shape: f32[6,16,32], index: 15, kind: input, shape index: {}]
  %s16 = inlined_call_operand.vmem [shape: f32[6,16,1], index: 16, kind: input, shape index: {}]
  %s17 = inlined_call_operand.vmem [shape: f32[16,16], index: 17, kind: input, shape index: {}]
  %s18 = inlined_call_operand.vmem [shape: f32[16,1], index: 18, kind: input, shape index: {}]
  %s19 = inlined_call_operand.hbm [shape: f32[2,16,128], index: 19, kind: output, shape index: {0}]
  %s20 = inlined_call_operand.hbm [shape: f32[2,2,16,128], index: 20, kind: output, shape index: {1}]
  %21 = xla_tuple %s19, %s20
  %s22 = sld [smem:[#allocation0]]
  $region121: #{tpu_custom_call.1} parent=0
    _
  %s24 = ssub.s32 1, %s22
  %s25 = scalar_select 0, %s24, %s22
  $region1: #{tpu_custom_call.1} parent=0
    #allocation2 [shape = 'u8[512]{0}', space=smem, size = 0x200, scoped, tag = 'input window, operand 0, single buffered']
    #allocation3 [shape = 's32[2]{0}', space=sflag, size = 0x8, scoped, tag = 'scoped memory for tpu_custom_call.1']
    #allocation4 [shape = 's32[2]{0}', space=sflag, size = 0x8, scoped, tag = 'scoped memory for tpu_custom_call.1']
    #allocation5 [shape = 'u8[16384]{0}', space=vmem, size = 0x4000, scoped, tag = 'output window, operand 0']
    #allocation6 [shape = 'u8[32768]{0}', space=vmem, size = 0x8000, scoped, tag = 'output window, operand 1']
    #allocation7 [shape = 's32[2]{0}', space=sflag, size = 0x8, scoped, tag = 'scoped memory for tpu_custom_call.1']
    %26 = vsyncpa [#allocation4], 0
    %27 = vsyncpa [#allocation3], 0
    %s28 = scalar_lea.sflag [#allocation3], 1
    %29 = vsyncpa %s28, 0
    %30 = vsyncpa [#allocation7], 0
    %s31 = scalar_lea.sflag [#allocation7], 1
    %32 = vsyncpa %s31, 0
    loop: start=0, step=1, limit=4
    $region2: #{tpu_custom_call.1} parent=1 // loop_pre_header
      _
    $region3: #{tpu_custom_call.1} parent=1 // loop_header
      %s34 = sphi 0, %s38
      %p35 = scmp.ge.s32.totalorder %s34, 4
      %s42 = sphi 0, %s42
      %s44 = sphi 0, %s42
      %s45 = sphi 0, %s44
      %s59 = sphi 0, %s45
      %s65 = sphi 0, %s67
      %s68 = sphi 0, %s65
      %s69 = sphi 0, %s68
      %s85 = sphi 0, %s69
      %s91 = sphi 0, %s93
      %s94 = sphi 0, %s91
      %s95 = sphi 0, %s94
      %s111 = sphi 0, %s95
      %s117 = sphi 0, %s119
      %s120 = sphi 0, %s117
      %s121 = sphi 0, %s120
      %s137 = sphi 0, %s121
      %s141 = sphi 0, %s141
      %s143 = sphi 0, %s141
      %s144 = sphi 0, %s143
      %s158 = sphi 0, %s144
      %s162 = sphi 0, %s162
      %s164 = sphi 0, %s162
      %s165 = sphi 0, %s164
      %s179 = sphi 0, %s165
      %s183 = sphi 0, %s183
      %s185 = sphi 0, %s183
      %s186 = sphi 0, %s185
      %s200 = sphi 0, %s186
      %s204 = sphi 0, %s204
      %s206 = sphi 0, %s204
      %s207 = sphi 0, %s206
      %s221 = sphi 0, %s207
      %s225 = sphi 0, %s225
      %s227 = sphi 0, %s225
      %s228 = sphi 0, %s227
      %s242 = sphi 0, %s228
      %s246 = sphi 0, %s246
      %s248 = sphi 0, %s246
      %s249 = sphi 0, %s248
      %s263 = sphi 0, %s249
      %s267 = sphi 0, %s267
      %s269 = sphi 0, %s267
      %s270 = sphi 0, %s269
      %s284 = sphi 0, %s270
      %s288 = sphi 0, %s288
      %s290 = sphi 0, %s288
      %s291 = sphi 0, %s290
      %s305 = sphi 0, %s291
      %s309 = sphi 0, %s309
      %s311 = sphi 0, %s309
      %s312 = sphi 0, %s311
      %s326 = sphi 0, %s312
      %s330 = sphi 0, %s330
      %s332 = sphi 0, %s330
      %s333 = sphi 0, %s332
      %s347 = sphi 0, %s333
      %s351 = sphi 0, %s351
      %s353 = sphi 0, %s351
      %s354 = sphi 0, %s353
      %s368 = sphi 0, %s354
      %s372 = sphi 0, %s372
      %s374 = sphi 0, %s372
      %s375 = sphi 0, %s374
      %s389 = sphi 0, %s375
      %s393 = sphi 0, %s393
      %s395 = sphi 0, %s393
      %s396 = sphi 0, %s395
      %s410 = sphi 0, %s396
      %s414 = sphi 0, %s414
      %s416 = sphi 0, %s414
      %s417 = sphi 0, %s416
      %s431 = sphi 0, %s417
      %s435 = sphi 0, %s435
      %s437 = sphi 0, %s435
      %s438 = sphi 0, %s437
      %s452 = sphi 0, %s438
      %s458 = sphi 0, %s460
      %s461 = sphi 0, %s458
      %s462 = sphi 0, %s461
      %s478 = sphi 0, %s462
      %s484 = sphi 0, %s486
      %s487 = sphi 0, %s484
      %s488 = sphi 0, %s487
      %s504 = sphi 0, %s488
    $region4: #{tpu_custom_call.1} parent=1 // loop_header_branch
      %37 = sbr.rel (%p35) target = $region8
    $region5: #{tpu_custom_call.1} parent=1 // loop_body
      %s39 = ssub.s32 %s34, 1
      %s40 = ssub.s32 %s34, 2
      %s41 = sadd.s32 %s34, 1
      %s43 = sadd.s32 %s42, 1
      %p46 = scmp.eq.s32.totalorder %s34, 1
      %p47 = scmp.ne.s32.totalorder %s42, %s44
      %p48 = scmp.eq.s32.totalorder %s34, 0
      %p49 = por %p47, %p48
      %p50 = scmp.ne.s32.totalorder %s42, %s44
      %p51 = scmp.eq.s32.totalorder %s39, 1
      %p52 = por %p50, %p51
      %p53 = scmp.ne.s32.totalorder %s44, %s45
      %p54 = scmp.eq.s32.totalorder %s39, 0
      %p55 = por %p53, %p54
      %p56 = scmp.ne.s32.totalorder %s44, %s45
      %p57 = scmp.eq.s32.totalorder %s40, 1
      %p58 = por %p56, %p57
      %p60 = scmp.ne.s32.totalorder %s45, %s59
      %p61 = scmp.eq.s32.totalorder %s40, 0
      %p62 = por %p60, %p61
      %s63 = ssub.s32 %s34, %s41
      %p64 = scmp.eq.s32.totalorder %s63, 0
      %s66 = sadd.s32 %s65, 1
      %s67 = scalar_select %p64, %s65, %s66
      %p70 = pneg %p64
      %p71 = scmp.eq.s32.totalorder %s34, 1
      %p72 = por %p70, %p71
      %p73 = scmp.ne.s32.totalorder %s65, %s68
      %p74 = scmp.eq.s32.totalorder %s34, 0
      %p75 = por %p73, %p74
      %p76 = scmp.ne.s32.totalorder %s65, %s68
      %p77 = scmp.eq.s32.totalorder %s39, 1
      %p78 = por %p76, %p77
      %p79 = scmp.ne.s32.totalorder %s68, %s69
      %p80 = scmp.eq.s32.totalorder %s39, 0
      %p81 = por %p79, %p80
      %p82 = scmp.ne.s32.totalorder %s68, %s69
      %p83 = scmp.eq.s32.totalorder %s40, 1
      %p84 = por %p82, %p83
      %p86 = scmp.ne.s32.totalorder %s69, %s85
      %p87 = scmp.eq.s32.totalorder %s40, 0
      %p88 = por %p86, %p87
      %s89 = ssub.s32 %s34, %s41
      %p90 = scmp.eq.s32.totalorder %s89, 0
      %s92 = sadd.s32 %s91, 1
      %s93 = scalar_select %p90, %s91, %s92
      %p96 = pneg %p90
      %p97 = scmp.eq.s32.totalorder %s34, 1
      %p98 = por %p96, %p97
      %p99 = scmp.ne.s32.totalorder %s91, %s94
      %p100 = scmp.eq.s32.totalorder %s34, 0
      %p101 = por %p99, %p100
      %p102 = scmp.ne.s32.totalorder %s91, %s94
      %p103 = scmp.eq.s32.totalorder %s39, 1
      %p104 = por %p102, %p103
      %p105 = scmp.ne.s32.totalorder %s94, %s95
      %p106 = scmp.eq.s32.totalorder %s39, 0
      %p107 = por %p105, %p106
      %p108 = scmp.ne.s32.totalorder %s94, %s95
      %p109 = scmp.eq.s32.totalorder %s40, 1
      %p110 = por %p108, %p109
      %p112 = scmp.ne.s32.totalorder %s95, %s111
      %p113 = scmp.eq.s32.totalorder %s40, 0
      %p114 = por %p112, %p113
      %s115 = ssub.s32 %s34, %s41
      %p116 = scmp.eq.s32.totalorder %s115, 0
      %s118 = sadd.s32 %s117, 1
      %s119 = scalar_select %p116, %s117, %s118
      %p122 = pneg %p116
      %p123 = scmp.eq.s32.totalorder %s34, 1
      %p124 = por %p122, %p123
      %p125 = scmp.ne.s32.totalorder %s117, %s120
      %p126 = scmp.eq.s32.totalorder %s34, 0
      %p127 = por %p125, %p126
      %p128 = scmp.ne.s32.totalorder %s117, %s120
      %p129 = scmp.eq.s32.totalorder %s39, 1
      %p130 = por %p128, %p129
      %p131 = scmp.ne.s32.totalorder %s120, %s121
      %p132 = scmp.eq.s32.totalorder %s39, 0
      %p133 = por %p131, %p132
      %p134 = scmp.ne.s32.totalorder %s120, %s121
      %p135 = scmp.eq.s32.totalorder %s40, 1
      %p136 = por %p134, %p135
      %p138 = scmp.ne.s32.totalorder %s121, %s137
      %p139 = scmp.eq.s32.totalorder %s40, 0
      %p140 = por %p138, %p139
      %s142 = sadd.s32 %s141, 1
      %p145 = scmp.eq.s32.totalorder %s34, 1
      %p146 = scmp.ne.s32.totalorder %s141, %s143
      %p147 = scmp.eq.s32.totalorder %s34, 0
      %p148 = por %p146, %p147
      %p149 = scmp.ne.s32.totalorder %s141, %s143
      %p150 = scmp.eq.s32.totalorder %s39, 1
      %p151 = por %p149, %p150
      %p152 = scmp.ne.s32.totalorder %s143, %s144
      %p153 = scmp.eq.s32.totalorder %s39, 0
      %p154 = por %p152, %p153
      %p155 = scmp.ne.s32.totalorder %s143, %s144
      %p156 = scmp.eq.s32.totalorder %s40, 1
      %p157 = por %p155, %p156
      %p159 = scmp.ne.s32.totalorder %s144, %s158
      %p160 = scmp.eq.s32.totalorder %s40, 0
      %p161 = por %p159, %p160
      %s163 = sadd.s32 %s162, 1
      %p166 = scmp.eq.s32.totalorder %s34, 1
      %p167 = scmp.ne.s32.totalorder %s162, %s164
      %p168 = scmp.eq.s32.totalorder %s34, 0
      %p169 = por %p167, %p168
      %p170 = scmp.ne.s32.totalorder %s162, %s164
      %p171 = scmp.eq.s32.totalorder %s39, 1
      %p172 = por %p170, %p171
      %p173 = scmp.ne.s32.totalorder %s164, %s165
      %p174 = scmp.eq.s32.totalorder %s39, 0
      %p175 = por %p173, %p174
      %p176 = scmp.ne.s32.totalorder %s164, %s165
      %p177 = scmp.eq.s32.totalorder %s40, 1
      %p178 = por %p176, %p177
      %p180 = scmp.ne.s32.totalorder %s165, %s179
      %p181 = scmp.eq.s32.totalorder %s40, 0
      %p182 = por %p180, %p181
      %s184 = sadd.s32 %s183, 1
      %p187 = scmp.eq.s32.totalorder %s34, 1
      %p188 = scmp.ne.s32.totalorder %s183, %s185
      %p189 = scmp.eq.s32.totalorder %s34, 0
      %p190 = por %p188, %p189
      %p191 = scmp.ne.s32.totalorder %s183, %s185
      %p192 = scmp.eq.s32.totalorder %s39, 1
      %p193 = por %p191, %p192
      %p194 = scmp.ne.s32.totalorder %s185, %s186
      %p195 = scmp.eq.s32.totalorder %s39, 0
      %p196 = por %p194, %p195
      %p197 = scmp.ne.s32.totalorder %s185, %s186
      %p198 = scmp.eq.s32.totalorder %s40, 1
      %p199 = por %p197, %p198
      %p201 = scmp.ne.s32.totalorder %s186, %s200
      %p202 = scmp.eq.s32.totalorder %s40, 0
      %p203 = por %p201, %p202
      %s205 = sadd.s32 %s204, 1
      %p208 = scmp.eq.s32.totalorder %s34, 1
      %p209 = scmp.ne.s32.totalorder %s204, %s206
      %p210 = scmp.eq.s32.totalorder %s34, 0
      %p211 = por %p209, %p210
      %p212 = scmp.ne.s32.totalorder %s204, %s206
      %p213 = scmp.eq.s32.totalorder %s39, 1
      %p214 = por %p212, %p213
      %p215 = scmp.ne.s32.totalorder %s206, %s207
      %p216 = scmp.eq.s32.totalorder %s39, 0
      %p217 = por %p215, %p216
      %p218 = scmp.ne.s32.totalorder %s206, %s207
      %p219 = scmp.eq.s32.totalorder %s40, 1
      %p220 = por %p218, %p219
      %p222 = scmp.ne.s32.totalorder %s207, %s221
      %p223 = scmp.eq.s32.totalorder %s40, 0
      %p224 = por %p222, %p223
      %s226 = sadd.s32 %s225, 1
      %p229 = scmp.eq.s32.totalorder %s34, 1
      %p230 = scmp.ne.s32.totalorder %s225, %s227
      %p231 = scmp.eq.s32.totalorder %s34, 0
      %p232 = por %p230, %p231
      %p233 = scmp.ne.s32.totalorder %s225, %s227
      %p234 = scmp.eq.s32.totalorder %s39, 1
      %p235 = por %p233, %p234
      %p236 = scmp.ne.s32.totalorder %s227, %s228
      %p237 = scmp.eq.s32.totalorder %s39, 0
      %p238 = por %p236, %p237
      %p239 = scmp.ne.s32.totalorder %s227, %s228
      %p240 = scmp.eq.s32.totalorder %s40, 1
      %p241 = por %p239, %p240
      %p243 = scmp.ne.s32.totalorder %s228, %s242
      %p244 = scmp.eq.s32.totalorder %s40, 0
      %p245 = por %p243, %p244
      %s247 = sadd.s32 %s246, 1
      %p250 = scmp.eq.s32.totalorder %s34, 1
      %p251 = scmp.ne.s32.totalorder %s246, %s248
      %p252 = scmp.eq.s32.totalorder %s34, 0
      %p253 = por %p251, %p252
      %p254 = scmp.ne.s32.totalorder %s246, %s248
      %p255 = scmp.eq.s32.totalorder %s39, 1
      %p256 = por %p254, %p255
      %p257 = scmp.ne.s32.totalorder %s248, %s249
      %p258 = scmp.eq.s32.totalorder %s39, 0
      %p259 = por %p257, %p258
      %p260 = scmp.ne.s32.totalorder %s248, %s249
      %p261 = scmp.eq.s32.totalorder %s40, 1
      %p262 = por %p260, %p261
      %p264 = scmp.ne.s32.totalorder %s249, %s263
      %p265 = scmp.eq.s32.totalorder %s40, 0
      %p266 = por %p264, %p265
      %s268 = sadd.s32 %s267, 1
      %p271 = scmp.eq.s32.totalorder %s34, 1
      %p272 = scmp.ne.s32.totalorder %s267, %s269
      %p273 = scmp.eq.s32.totalorder %s34, 0
      %p274 = por %p272, %p273
      %p275 = scmp.ne.s32.totalorder %s267, %s269
      %p276 = scmp.eq.s32.totalorder %s39, 1
      %p277 = por %p275, %p276
      %p278 = scmp.ne.s32.totalorder %s269, %s270
      %p279 = scmp.eq.s32.totalorder %s39, 0
      %p280 = por %p278, %p279
      %p281 = scmp.ne.s32.totalorder %s269, %s270
      %p282 = scmp.eq.s32.totalorder %s40, 1
      %p283 = por %p281, %p282
      %p285 = scmp.ne.s32.totalorder %s270, %s284
      %p286 = scmp.eq.s32.totalorder %s40, 0
      %p287 = por %p285, %p286
      %s289 = sadd.s32 %s288, 1
      %p292 = scmp.eq.s32.totalorder %s34, 1
      %p293 = scmp.ne.s32.totalorder %s288, %s290
      %p294 = scmp.eq.s32.totalorder %s34, 0
      %p295 = por %p293, %p294
      %p296 = scmp.ne.s32.totalorder %s288, %s290
      %p297 = scmp.eq.s32.totalorder %s39, 1
      %p298 = por %p296, %p297
      %p299 = scmp.ne.s32.totalorder %s290, %s291
      %p300 = scmp.eq.s32.totalorder %s39, 0
      %p301 = por %p299, %p300
      %p302 = scmp.ne.s32.totalorder %s290, %s291
      %p303 = scmp.eq.s32.totalorder %s40, 1
      %p304 = por %p302, %p303
      %p306 = scmp.ne.s32.totalorder %s291, %s305
      %p307 = scmp.eq.s32.totalorder %s40, 0
      %p308 = por %p306, %p307
      %s310 = sadd.s32 %s309, 1
      %p313 = scmp.eq.s32.totalorder %s34, 1
      %p314 = scmp.ne.s32.totalorder %s309, %s311
      %p315 = scmp.eq.s32.totalorder %s34, 0
      %p316 = por %p314, %p315
      %p317 = scmp.ne.s32.totalorder %s309, %s311
      %p318 = scmp.eq.s32.totalorder %s39, 1
      %p319 = por %p317, %p318
      %p320 = scmp.ne.s32.totalorder %s311, %s312
      %p321 = scmp.eq.s32.totalorder %s39, 0
      %p322 = por %p320, %p321
      %p323 = scmp.ne.s32.totalorder %s311, %s312
      %p324 = scmp.eq.s32.totalorder %s40, 1
      %p325 = por %p323, %p324
      %p327 = scmp.ne.s32.totalorder %s312, %s326
      %p328 = scmp.eq.s32.totalorder %s40, 0
      %p329 = por %p327, %p328
      %s331 = sadd.s32 %s330, 1
      %p334 = scmp.eq.s32.totalorder %s34, 1
      %p335 = scmp.ne.s32.totalorder %s330, %s332
      %p336 = scmp.eq.s32.totalorder %s34, 0
      %p337 = por %p335, %p336
      %p338 = scmp.ne.s32.totalorder %s330, %s332
      %p339 = scmp.eq.s32.totalorder %s39, 1
      %p340 = por %p338, %p339
      %p341 = scmp.ne.s32.totalorder %s332, %s333
      %p342 = scmp.eq.s32.totalorder %s39, 0
      %p343 = por %p341, %p342
      %p344 = scmp.ne.s32.totalorder %s332, %s333
      %p345 = scmp.eq.s32.totalorder %s40, 1
      %p346 = por %p344, %p345
      %p348 = scmp.ne.s32.totalorder %s333, %s347
      %p349 = scmp.eq.s32.totalorder %s40, 0
      %p350 = por %p348, %p349
      %s352 = sadd.s32 %s351, 1
      %p355 = scmp.eq.s32.totalorder %s34, 1
      %p356 = scmp.ne.s32.totalorder %s351, %s353
      %p357 = scmp.eq.s32.totalorder %s34, 0
      %p358 = por %p356, %p357
      %p359 = scmp.ne.s32.totalorder %s351, %s353
      %p360 = scmp.eq.s32.totalorder %s39, 1
      %p361 = por %p359, %p360
      %p362 = scmp.ne.s32.totalorder %s353, %s354
      %p363 = scmp.eq.s32.totalorder %s39, 0
      %p364 = por %p362, %p363
      %p365 = scmp.ne.s32.totalorder %s353, %s354
      %p366 = scmp.eq.s32.totalorder %s40, 1
      %p367 = por %p365, %p366
      %p369 = scmp.ne.s32.totalorder %s354, %s368
      %p370 = scmp.eq.s32.totalorder %s40, 0
      %p371 = por %p369, %p370
      %s373 = sadd.s32 %s372, 1
      %p376 = scmp.eq.s32.totalorder %s34, 1
      %p377 = scmp.ne.s32.totalorder %s372, %s374
      %p378 = scmp.eq.s32.totalorder %s34, 0
      %p379 = por %p377, %p378
      %p380 = scmp.ne.s32.totalorder %s372, %s374
      %p381 = scmp.eq.s32.totalorder %s39, 1
      %p382 = por %p380, %p381
      %p383 = scmp.ne.s32.totalorder %s374, %s375
      %p384 = scmp.eq.s32.totalorder %s39, 0
      %p385 = por %p383, %p384
      %p386 = scmp.ne.s32.totalorder %s374, %s375
      %p387 = scmp.eq.s32.totalorder %s40, 1
      %p388 = por %p386, %p387
      %p390 = scmp.ne.s32.totalorder %s375, %s389
      %p391 = scmp.eq.s32.totalorder %s40, 0
      %p392 = por %p390, %p391
      %s394 = sadd.s32 %s393, 1
      %p397 = scmp.eq.s32.totalorder %s34, 1
      %p398 = scmp.ne.s32.totalorder %s393, %s395
      %p399 = scmp.eq.s32.totalorder %s34, 0
      %p400 = por %p398, %p399
      %p401 = scmp.ne.s32.totalorder %s393, %s395
      %p402 = scmp.eq.s32.totalorder %s39, 1
      %p403 = por %p401, %p402
      %p404 = scmp.ne.s32.totalorder %s395, %s396
      %p405 = scmp.eq.s32.totalorder %s39, 0
      %p406 = por %p404, %p405
      %p407 = scmp.ne.s32.totalorder %s395, %s396
      %p408 = scmp.eq.s32.totalorder %s40, 1
      %p409 = por %p407, %p408
      %p411 = scmp.ne.s32.totalorder %s396, %s410
      %p412 = scmp.eq.s32.totalorder %s40, 0
      %p413 = por %p411, %p412
      %s415 = sadd.s32 %s414, 1
      %p418 = scmp.eq.s32.totalorder %s34, 1
      %p419 = scmp.ne.s32.totalorder %s414, %s416
      %p420 = scmp.eq.s32.totalorder %s34, 0
      %p421 = por %p419, %p420
      %p422 = scmp.ne.s32.totalorder %s414, %s416
      %p423 = scmp.eq.s32.totalorder %s39, 1
      %p424 = por %p422, %p423
      %p425 = scmp.ne.s32.totalorder %s416, %s417
      %p426 = scmp.eq.s32.totalorder %s39, 0
      %p427 = por %p425, %p426
      %p428 = scmp.ne.s32.totalorder %s416, %s417
      %p429 = scmp.eq.s32.totalorder %s40, 1
      %p430 = por %p428, %p429
      %p432 = scmp.ne.s32.totalorder %s417, %s431
      %p433 = scmp.eq.s32.totalorder %s40, 0
      %p434 = por %p432, %p433
      %s436 = sadd.s32 %s435, 1
      %p439 = scmp.eq.s32.totalorder %s34, 1
      %p440 = scmp.ne.s32.totalorder %s435, %s437
      %p441 = scmp.eq.s32.totalorder %s34, 0
      %p442 = por %p440, %p441
      %p443 = scmp.ne.s32.totalorder %s435, %s437
      %p444 = scmp.eq.s32.totalorder %s39, 1
      %p445 = por %p443, %p444
      %p446 = scmp.ne.s32.totalorder %s437, %s438
      %p447 = scmp.eq.s32.totalorder %s39, 0
      %p448 = por %p446, %p447
      %p449 = scmp.ne.s32.totalorder %s437, %s438
      %p450 = scmp.eq.s32.totalorder %s40, 1
      %p451 = por %p449, %p450
      %p453 = scmp.ne.s32.totalorder %s438, %s452
      %p454 = scmp.eq.s32.totalorder %s40, 0
      %p455 = por %p453, %p454
      %s456 = ssub.s32 %s34, %s41
      %p457 = scmp.eq.s32.totalorder %s456, 0
      %s459 = sadd.s32 %s458, 1
      %s460 = scalar_select %p457, %s458, %s459
      %p463 = pneg %p457
      %p464 = scmp.eq.s32.totalorder %s34, 1
      %p465 = por %p463, %p464
      %p466 = scmp.ne.s32.totalorder %s458, %s461
      %p467 = scmp.eq.s32.totalorder %s34, 0
      %p468 = por %p466, %p467
      %p469 = scmp.ne.s32.totalorder %s458, %s461
      %p470 = scmp.eq.s32.totalorder %s39, 1
      %p471 = por %p469, %p470
      %p472 = scmp.ne.s32.totalorder %s461, %s462
      %p473 = scmp.eq.s32.totalorder %s39, 0
      %p474 = por %p472, %p473
      %p475 = scmp.ne.s32.totalorder %s461, %s462
      %p476 = scmp.eq.s32.totalorder %s40, 1
      %p477 = por %p475, %p476
      %p479 = scmp.ne.s32.totalorder %s462, %s478
      %p480 = scmp.eq.s32.totalorder %s40, 0
      %p481 = por %p479, %p480
      %s482 = ssub.s32 %s34, %s41
      %p483 = scmp.eq.s32.totalorder %s482, 0
      %s485 = sadd.s32 %s484, 1
      %s486 = scalar_select %p483, %s484, %s485
      %p489 = pneg %p483
      %p490 = scmp.eq.s32.totalorder %s34, 1
      %p491 = por %p489, %p490
      %p492 = scmp.ne.s32.totalorder %s484, %s487
      %p493 = scmp.eq.s32.totalorder %s34, 0
      %p494 = por %p492, %p493
      %p495 = scmp.ne.s32.totalorder %s484, %s487
      %p496 = scmp.eq.s32.totalorder %s39, 1
      %p497 = por %p495, %p496
      %p498 = scmp.ne.s32.totalorder %s487, %s488
      %p499 = scmp.eq.s32.totalorder %s39, 0
      %p500 = por %p498, %p499
      %p501 = scmp.ne.s32.totalorder %s487, %s488
      %p502 = scmp.eq.s32.totalorder %s40, 1
      %p503 = por %p501, %p502
      %p505 = scmp.ne.s32.totalorder %s488, %s504
      %p506 = scmp.eq.s32.totalorder %s40, 0
      %p507 = por %p505, %p506
      %p508 = scmp.le.s32.totalorder 1, %s34
      %p509 = scmp.lt.s32.totalorder %s34, 3
      %p510 = pnand %p508, %p509
      %p511 = pneg %p510
      // Predicated region
      $region9: #{tpu_custom_call.1} parent=5 // pred_check
        _
      $region10: #{tpu_custom_call.1} parent=5 // pred_check_branch
        %513 = sbr.rel (%p510) target = $region12
      $region11: #{tpu_custom_call.1} parent=5 // pred_region
        %s514 = ssub.s32 %s34, 1
        // Predicated region
        $region13: #{tpu_custom_call.1} parent=11 // pred_check
          %p515 = pneg %p55
        $region14: #{tpu_custom_call.1} parent=11 // pred_check_branch
          %517 = sbr.rel (%p515) target = $region16
        $region15: #{tpu_custom_call.1} parent=11 // pred_region
          %s519 = ssub.s32 16, 16
          %520 = vsyncadd [#allocation4], %s519
          %s522 = sshll.u32 %s0, 4
          %s523 = int_to_ptr.vmem [resolvable:$true] %s522
          %525 = dma.vmem_to_smem %s523, 16, [#allocation2], [#allocation4]
        $region16: #{tpu_custom_call.1} parent=11 // pred_fallthru
          _
        // Predicated region
        $region17: #{tpu_custom_call.1} parent=11 // pred_check
          %p526 = pneg %p154
        $region18: #{tpu_custom_call.1} parent=11 // pred_check_branch
          %528 = sbr.rel (%p526) target = $region20
        $region19: #{tpu_custom_call.1} parent=11 // pred_region
          _
        $region20: #{tpu_custom_call.1} parent=11 // pred_fallthru
          _
        // Predicated region
        $region21: #{tpu_custom_call.1} parent=11 // pred_check
          %p529 = pneg %p175
        $region22: #{tpu_custom_call.1} parent=11 // pred_check_branch
          %531 = sbr.rel (%p529) target = $region24
        $region23: #{tpu_custom_call.1} parent=11 // pred_region
          _
        $region24: #{tpu_custom_call.1} parent=11 // pred_fallthru
          _
        // Predicated region
        $region25: #{tpu_custom_call.1} parent=11 // pred_check
          %p532 = pneg %p196
        $region26: #{tpu_custom_call.1} parent=11 // pred_check_branch
          %534 = sbr.rel (%p532) target = $region28
        $region27: #{tpu_custom_call.1} parent=11 // pred_region
          _
        $region28: #{tpu_custom_call.1} parent=11 // pred_fallthru
          _
        // Predicated region
        $region29: #{tpu_custom_call.1} parent=11 // pred_check
          %p535 = pneg %p217
        $region30: #{tpu_custom_call.1} parent=11 // pred_check_branch
          %537 = sbr.rel (%p535) target = $region32
        $region31: #{tpu_custom_call.1} parent=11 // pred_region
          _
        $region32: #{tpu_custom_call.1} parent=11 // pred_fallthru
          _
        // Predicated region
        $region33: #{tpu_custom_call.1} parent=11 // pred_check
          %p538 = pneg %p238
        $region34: #{tpu_custom_call.1} parent=11 // pred_check_branch
          %540 = sbr.rel (%p538) target = $region36
        $region35: #{tpu_custom_call.1} parent=11 // pred_region
          _
        $region36: #{tpu_custom_call.1} parent=11 // pred_fallthru
          _
        // Predicated region
        $region37: #{tpu_custom_call.1} parent=11 // pred_check
          %p541 = pneg %p259
        $region38: #{tpu_custom_call.1} parent=11 // pred_check_branch
          %543 = sbr.rel (%p541) target = $region40
        $region39: #{tpu_custom_call.1} parent=11 // pred_region
          _
        $region40: #{tpu_custom_call.1} parent=11 // pred_fallthru
          _
        // Predicated region
        $region41: #{tpu_custom_call.1} parent=11 // pred_check
          %p544 = pneg %p280
        $region42: #{tpu_custom_call.1} parent=11 // pred_check_branch
          %546 = sbr.rel (%p544) target = $region44
        $region43: #{tpu_custom_call.1} parent=11 // pred_region
          _
        $region44: #{tpu_custom_call.1} parent=11 // pred_fallthru
          _
        // Predicated region
        $region45: #{tpu_custom_call.1} parent=11 // pred_check
          %p547 = pneg %p301
        $region46: #{tpu_custom_call.1} parent=11 // pred_check_branch
          %549 = sbr.rel (%p547) target = $region48
        $region47: #{tpu_custom_call.1} parent=11 // pred_region
          _
        $region48: #{tpu_custom_call.1} parent=11 // pred_fallthru
          _
        // Predicated region
        $region49: #{tpu_custom_call.1} parent=11 // pred_check
          %p550 = pneg %p322
        $region50: #{tpu_custom_call.1} parent=11 // pred_check_branch
          %552 = sbr.rel (%p550) target = $region52
        $region51: #{tpu_custom_call.1} parent=11 // pred_region
          _
        $region52: #{tpu_custom_call.1} parent=11 // pred_fallthru
          _
        // Predicated region
        $region53: #{tpu_custom_call.1} parent=11 // pred_check
          %p553 = pneg %p343
        $region54: #{tpu_custom_call.1} parent=11 // pred_check_branch
          %555 = sbr.rel (%p553) target = $region56
        $region55: #{tpu_custom_call.1} parent=11 // pred_region
          _
        $region56: #{tpu_custom_call.1} parent=11 // pred_fallthru
          _
        // Predicated region
        $region57: #{tpu_custom_call.1} parent=11 // pred_check
          %p556 = pneg %p364
        $region58: #{tpu_custom_call.1} parent=11 // pred_check_branch
          %558 = sbr.rel (%p556) target = $region60
        $region59: #{tpu_custom_call.1} parent=11 // pred_region
          _
        $region60: #{tpu_custom_call.1} parent=11 // pred_fallthru
          _
        // Predicated region
        $region61: #{tpu_custom_call.1} parent=11 // pred_check
          %p559 = pneg %p385
        $region62: #{tpu_custom_call.1} parent=11 // pred_check_branch
          %561 = sbr.rel (%p559) target = $region64
        $region63: #{tpu_custom_call.1} parent=11 // pred_region
          _
        $region64: #{tpu_custom_call.1} parent=11 // pred_fallthru
          _
        // Predicated region
        $region65: #{tpu_custom_call.1} parent=11 // pred_check
          %p562 = pneg %p406
        $region66: #{tpu_custom_call.1} parent=11 // pred_check_branch
          %564 = sbr.rel (%p562) target = $region68
        $region67: #{tpu_custom_call.1} parent=11 // pred_region
          _
        $region68: #{tpu_custom_call.1} parent=11 // pred_fallthru
          _
        // Predicated region
        $region69: #{tpu_custom_call.1} parent=11 // pred_check
          %p565 = pneg %p427
        $region70: #{tpu_custom_call.1} parent=11 // pred_check_branch
          %567 = sbr.rel (%p565) target = $region72
        $region71: #{tpu_custom_call.1} parent=11 // pred_region
          _
        $region72: #{tpu_custom_call.1} parent=11 // pred_fallthru
          _
        // Predicated region
        $region73: #{tpu_custom_call.1} parent=11 // pred_check
          %p568 = pneg %p448
        $region74: #{tpu_custom_call.1} parent=11 // pred_check_branch
          %570 = sbr.rel (%p568) target = $region76
        $region75: #{tpu_custom_call.1} parent=11 // pred_region
          _
        $region76: #{tpu_custom_call.1} parent=11 // pred_fallthru
          _
      $region12: #{tpu_custom_call.1} parent=5 // pred_fallthru
        _
      %p571 = scmp.lt.s32.totalorder %s34, 2
      // Predicated region
      $region77: #{tpu_custom_call.1} parent=5 // pred_check
        %p572 = pneg %p571
      $region78: #{tpu_custom_call.1} parent=5 // pred_check_branch
        %574 = sbr.rel (%p572) target = $region80
      $region79: #{tpu_custom_call.1} parent=5 // pred_region
        // Predicated region
        $region81: #{tpu_custom_call.1} parent=79 // pred_check
          %p575 = pneg %p75
        $region82: #{tpu_custom_call.1} parent=79 // pred_check_branch
          %577 = sbr.rel (%p575) target = $region84
        $region83: #{tpu_custom_call.1} parent=79 // pred_region
          %p578 = scmp.lt.s32.totalorder %s34, 1
          %s579 = scalar_select %p578, %s34, 1
          %s580 = smul.addr %s579, 2
          %s581 = smul.addr %s580, 8
          %s582 = scalar_lea.vmem %s1, %s581
        $region84: #{tpu_custom_call.1} parent=79 // pred_fallthru
          _
        // Predicated region
        $region85: #{tpu_custom_call.1} parent=79 // pred_check
          %p583 = pneg %p101
        $region86: #{tpu_custom_call.1} parent=79 // pred_check_branch
          %585 = sbr.rel (%p583) target = $region88
        $region87: #{tpu_custom_call.1} parent=79 // pred_region
          %p586 = scmp.lt.s32.totalorder %s34, 1
          %s587 = scalar_select %p586, %s34, 1
          %s588 = smul.addr %s587, 6
          %s589 = smul.addr %s588, 8
          %s590 = scalar_lea.vmem %s2, %s589
        $region88: #{tpu_custom_call.1} parent=79 // pred_fallthru
          _
        // Predicated region
        $region89: #{tpu_custom_call.1} parent=79 // pred_check
          %p591 = pneg %p127
        $region90: #{tpu_custom_call.1} parent=79 // pred_check_branch
          %593 = sbr.rel (%p591) target = $region92
        $region91: #{tpu_custom_call.1} parent=79 // pred_region
          %p594 = scmp.lt.s32.totalorder %s34, 1
          %s595 = scalar_select %p594, %s34, 1
          %s596 = smul.addr %s595, 8
          %s597 = smul.addr %s596, 8
          %s598 = scalar_lea.vmem %s3, %s597
        $region92: #{tpu_custom_call.1} parent=79 // pred_fallthru
          _
      $region80: #{tpu_custom_call.1} parent=5 // pred_fallthru
        _
      %p599 = scmp.le.s32.totalorder 1, %s34
      %p600 = scmp.lt.s32.totalorder %s34, 3
      %p601 = pnand %p599, %p600
      %p602 = pneg %p601
      // Predicated region
      $region93: #{tpu_custom_call.1} parent=5 // pred_check
        _
      $region94: #{tpu_custom_call.1} parent=5 // pred_check_branch
        %604 = sbr.rel (%p601) target = $region96
      $region95: #{tpu_custom_call.1} parent=5 // pred_region
        %s605 = ssub.s32 %s34, 1
        // Predicated region
        $region97: #{tpu_custom_call.1} parent=95 // pred_check
          %p606 = pneg %p55
        $region98: #{tpu_custom_call.1} parent=95 // pred_check_branch
          %608 = sbr.rel (%p606) target = $region100
        $region99: #{tpu_custom_call.1} parent=95 // pred_region
          %609 = dma.done [#allocation4], 16
        $region100: #{tpu_custom_call.1} parent=95 // pred_fallthru
          _
        %610 = sfence
        %p611 = pneg %p55
        %p612 = pneg %p52
        %p613 = scmp.lt.s32.totalorder %s39, 1
        %s614 = scalar_select %p613, %s39, 1
        %s615 = smul.addr %s614, 2
        %s616 = smul.addr %s615, 8
        %s617 = scalar_lea.vmem %s1, %s616
        %p618 = pneg %p81
        %p619 = pneg %p78
        %p620 = scmp.lt.s32.totalorder %s39, 1
        %s621 = scalar_select %p620, %s39, 1
        %s622 = smul.addr %s621, 6
        %s623 = smul.addr %s622, 8
        %s624 = scalar_lea.vmem %s2, %s623
        %p625 = pneg %p107
        %p626 = pneg %p104
        %p627 = scmp.lt.s32.totalorder %s39, 1
        %s628 = scalar_select %p627, %s39, 1
        %s629 = smul.addr %s628, 8
        %s630 = smul.addr %s629, 8
        %s631 = scalar_lea.vmem %s3, %s630
        %p632 = pneg %p133
        %p633 = pneg %p130
        %p634 = pneg %p154
        %p635 = pneg %p151
        %p636 = pneg %p175
        %p637 = pneg %p172
        %p638 = pneg %p196
        %p639 = pneg %p193
        %p640 = pneg %p217
        %p641 = pneg %p214
        %p642 = pneg %p238
        %p643 = pneg %p235
        %p644 = pneg %p259
        %p645 = pneg %p256
        %p646 = pneg %p280
        %p647 = pneg %p277
        %p648 = pneg %p301
        %p649 = pneg %p298
        %p650 = pneg %p322
        %p651 = pneg %p319
        %p652 = pneg %p343
        %p653 = pneg %p340
        %p654 = pneg %p364
        %p655 = pneg %p361
        %p656 = pneg %p385
        %p657 = pneg %p382
        %p658 = pneg %p406
        %p659 = pneg %p403
        %p660 = pneg %p427
        %p661 = pneg %p424
        %p662 = pneg %p448
        %p663 = pneg %p445
        %p664 = pneg %p474
        %p665 = pneg %p471
        %s666 = sand.u32 %s461, 1
        %s667 = scalar_lea.sflag [#allocation3], %s666
        %s668 = sand.u32 %s461, 1
        %s669 = smul.addr %s668, 16
        %s670 = scalar_lea.vmem [#allocation5], %s669
        %p671 = pneg %p500
        %p672 = pneg %p497
        %s673 = sand.u32 %s487, 1
        %s674 = scalar_lea.sflag [#allocation7], %s673
        %s675 = sand.u32 %s487, 1
        %s676 = smul.addr %s675, 32
        %s677 = scalar_lea.vmem [#allocation6], %s676
        %p678 = scmp.lt.s32.totalorder %s39, 1
        %s679 = scalar_select %p678, %s39, 1
        %s680 = smul.addr %s679, 2
        %s681 = smul.addr %s680, 8
        %s682 = scalar_lea.vmem %s1, %s681
        %p683 = scmp.lt.s32.totalorder %s39, 1
        %s684 = scalar_select %p683, %s39, 1
        %s685 = smul.addr %s684, 6
        %s686 = smul.addr %s685, 8
        %s687 = scalar_lea.vmem %s2, %s686
        %p688 = scmp.lt.s32.totalorder %s39, 1
        %s689 = scalar_select %p688, %s39, 1
        %s690 = smul.addr %s689, 8
        %s691 = smul.addr %s690, 8
        %s692 = scalar_lea.vmem %s3, %s691
        %v693 = vld [vmem:[%s682] sm:$0xff]
        %v694 = vld [vmem:[%s682 + $0x8] sm:$0xff]
        %v695 = vadd.f32 %v693, %v694
        %v696 = vrot.slane %v695, 4
        %v697 = vadd.f32 %v695, %v696
        %v698 = vrot.slane %v697, 2
        %v699 = vadd.f32 %v697, %v698
        %v700 = vrot.slane %v699, 1
        %v701 = vadd.f32 %v699, %v700
        %v702 = vrcp.pop 16.0
        %v703 = vmul.f32 %v701, %v702
        %v704 = vsub.f32 %v693, %v703
        %v705 = vsub.f32 %v694, %v703
        %v706 = vmul.f32 %v704, %v704
        %v707 = vmul.f32 %v705, %v705
        %v708 = vadd.f32 %v706, %v707
        %v709 = vrot.slane %v708, 4
        %v710 = vadd.f32 %v708, %v709
        %v711 = vrot.slane %v710, 2
        %v712 = vadd.f32 %v710, %v711
        %v713 = vrot.slane %v712, 1
        %v714 = vadd.f32 %v712, %v713
        %v715 = vmul.f32 %v714, %v702
        %v716 = vadd.f32 %v715, 1e-05
        %v717 = vrsqrt.pop %v716
        %v718 = vmul.f32 %v704, %v717
        %v719 = vmul.f32 %v705, %v717
        %v720 = vld [vmem:[%s4] sm:$0xff]
        %v721 = vld [vmem:[%s4 + $0x8] sm:$0xff]
        %v722 = vld [vmem:[%s5] sm:$0xff]
        %v723 = vld [vmem:[%s5 + $0x8] sm:$0xff]
        %725 = vset.pattern.permute.xlu0 0
        %726 = vperm.xlu0 %725, %v722
        %v727 = vpop.permute.xlu0 %726
        %730 = vset.pattern.permute.xlu0 0
        %731 = vperm.xlu0 %730, %v723
        %v732 = vpop.permute.xlu0 %731
        %vm734 = vcmask 130048
        %v736 = vsel %vm734, %v720, 0
        %v739 = vsel %vm734, %v721, 0
        %741 = vmatprep.subr.mxu0 0.0
        %742 = vmatpush1.msra.mxu0 %v718
        %743 = vmatprep.subr.mxu0 0.0
        %744 = vmatpush1.msra.mxu0 %v719
        %745 = vmatprep.subr.mxu0 0.0
        %746 = vmatpush1.msra.mxu0 0.0
        %747 = vmatprep.subr.mxu0 0.0
        %748 = vmatpush1.msra.mxu0 0.0
        %749 = vmatprep.subr.mxu0 0.0
        %750 = vmatpush1.msra.mxu0 0.0
        %751 = vmatprep.subr.mxu0 0.0
        %752 = vmatpush1.msra.mxu0 0.0
        %753 = vmatprep.subr.mxu0 0.0
        %754 = vmatpush1.msra.mxu0 0.0
        %755 = vmatprep.subr.mxu0 0.0
        %756 = vmatpush1.msra.mxu0 0.0
        %757 = vmatprep.subr.mxu0 0.0
        %758 = vmatpush1.msra.mxu0 0.0
        %759 = vmatprep.subr.mxu0 0.0
        %760 = vmatpush1.msra.mxu0 0.0
        %761 = vmatprep.subr.mxu0 0.0
        %762 = vmatpush1.msra.mxu0 0.0
        %763 = vmatprep.subr.mxu0 0.0
        %764 = vmatpush1.msra.mxu0 0.0
        %765 = vmatprep.subr.mxu0 0.0
        %766 = vmatpush1.msra.mxu0 0.0
        %767 = vmatprep.subr.mxu0 0.0
        %768 = vmatpush1.msra.mxu0 0.0
        %769 = vmatprep.subr.mxu0 0.0
        %770 = vmatpush1.msra.mxu0 0.0
        %771 = vmatprep.subr.mxu0 0.0
        %772 = vmatpush1.msra.mxu0 0.0
        %773 = vmatprep.subr.mxu0 0.0
        %774 = vmatpush1.msra.mxu0 0.0
        %775 = vmatprep.subr.mxu0 0.0
        %776 = vmatpush1.msra.mxu0 0.0
        %777 = vmatprep.subr.mxu0 0.0
        %778 = vmatpush1.msra.mxu0 0.0
        %779 = vmatprep.subr.mxu0 0.0
        %780 = vmatpush1.msra.mxu0 0.0
        %781 = vmatprep.subr.mxu0 0.0
        %782 = vmatpush1.msra.mxu0 0.0
        %783 = vmatprep.subr.mxu0 0.0
        %784 = vmatpush1.msra.mxu0 0.0
        %785 = vmatprep.subr.mxu0 0.0
        %786 = vmatpush1.msra.mxu0 0.0
        %787 = vmatprep.subr.mxu0 0.0
        %788 = vmatpush1.msra.mxu0 0.0
        %789 = vmatprep.subr.mxu0 0.0
        %790 = vmatpush1.msra.mxu0 0.0
        %791 = vmatprep.subr.mxu0 0.0
        %792 = vmatpush1.msra.mxu0 0.0
        %793 = vmatprep.subr.mxu0 0.0
        %794 = vmatpush1.msra.mxu0 0.0
        %795 = vmatprep.subr.mxu0 0.0
        %796 = vmatpush1.msra.mxu0 0.0
        %797 = vmatprep.subr.mxu0 0.0
        %798 = vmatpush1.msra.mxu0 0.0
        %799 = vmatprep.subr.mxu0 0.0
        %800 = vmatpush1.msra.mxu0 0.0
        %801 = vmatprep.subr.mxu0 0.0
        %802 = vmatpush1.msra.mxu0 0.0
        %803 = vmatprep.subr.mxu0 0.0
        %804 = vmatpush1.msra.mxu0 0.0
        %805 = vmatprep.mubr.f32.mxu0 0.0
        %806 = vmatmul.mubr.f32.gmra.mrb[0].mxu0 %v736
        %v807 = vpop.f32.mrb[0].mxu0
        %v808 = vadd.f32 %v727, %v807
        %v809 = vpop.f32.mrb[0].mxu0
        %810 = vmatprep.mubr.f32.mxu0 0.0
        %811 = vmatmul.mubr.f32.gmra.mrb[0].mxu0 %v739
        %v812 = vpop.f32.mrb[0].mxu0
        %v813 = vadd.f32 %v732, %v812
        %v814 = vpop.f32.mrb[0].mxu0
        %815 = vdwg.mxu0
        %v816 = vlaneseq
        %v817 = vand.u32 %v816, 127
        %818 = vst [vmem:[%s677] sm:$0xff] %v808
        %819 = vst [vmem:[%s677 + $0x8] sm:$0xff] %v813
        %s820 = sld [smem:[#allocation2]]
        %s821 = sld [smem:[#allocation2 + $0x1]]
        %v822 = vld [vmem:[%s6] sm:$0xff]
        %v823 = vld [vmem:[%s6 + $0x8] sm:$0xff]
        %v824 = vld [vmem:[%s6 + $0x10] sm:$0xff]
        %v825 = vld [vmem:[%s6 + $0x18] sm:$0xff]
        %v826 = vld [vmem:[%s8] sm:$0xff]
        %v827 = vld [vmem:[%s8 + $0x8] sm:$0xff]
        %v828 = vld [vmem:[%s8 + $0x10] sm:$0xff]
        %v829 = vld [vmem:[%s8 + $0x18] sm:$0xff]
        %831 = vset.pattern.permute.xlu0 0
        %832 = vperm.xlu0 %831, %v826
        %v833 = vpop.permute.xlu0 %832
        %836 = vset.pattern.permute.xlu0 0
        %837 = vperm.xlu0 %836, %v827
        %v838 = vpop.permute.xlu0 %837
        %841 = vset.pattern.permute.xlu0 0
        %842 = vperm.xlu0 %841, %v828
        %v843 = vpop.permute.xlu0 %842
        %846 = vset.pattern.permute.xlu0 0
        %847 = vperm.xlu0 %846, %v829
        %v848 = vpop.permute.xlu0 %847
        %v851 = vsel %vm734, %v822, 0
        %v854 = vsel %vm734, %v823, 0
        %v857 = vsel %vm734, %v824, 0
        %v860 = vsel %vm734, %v825, 0
        %862 = vmatprep.subr.mxu0 0.0
        %863 = vmatpush1.msra.mxu0 %v808
        %864 = vmatprep.subr.mxu0 0.0
        %865 = vmatpush1.msra.mxu0 %v813
        %866 = vmatprep.subr.mxu0 0.0
        %867 = vmatpush1.msra.mxu0 0.0
        %868 = vmatprep.subr.mxu0 0.0
        %869 = vmatpush1.msra.mxu0 0.0
        %870 = vmatprep.subr.mxu0 0.0
        %871 = vmatpush1.msra.mxu0 0.0
        %872 = vmatprep.subr.mxu0 0.0
        %873 = vmatpush1.msra.mxu0 0.0
        %874 = vmatprep.subr.mxu0 0.0
        %875 = vmatpush1.msra.mxu0 0.0
        %876 = vmatprep.subr.mxu0 0.0
        %877 = vmatpush1.msra.mxu0 0.0
        %878 = vmatprep.subr.mxu0 0.0
        %879 = vmatpush1.msra.mxu0 0.0
        %880 = vmatprep.subr.mxu0 0.0
        %881 = vmatpush1.msra.mxu0 0.0
        %882 = vmatprep.subr.mxu0 0.0
        %883 = vmatpush1.msra.mxu0 0.0
        %884 = vmatprep.subr.mxu0 0.0
        %885 = vmatpush1.msra.mxu0 0.0
        %886 = vmatprep.subr.mxu0 0.0
        %887 = vmatpush1.msra.mxu0 0.0
        %888 = vmatprep.subr.mxu0 0.0
        %889 = vmatpush1.msra.mxu0 0.0
        %890 = vmatprep.subr.mxu0 0.0
        %891 = vmatpush1.msra.mxu0 0.0
        %892 = vmatprep.subr.mxu0 0.0
        %893 = vmatpush1.msra.mxu0 0.0
        %894 = vmatprep.subr.mxu0 0.0
        %895 = vmatpush1.msra.mxu0 0.0
        %896 = vmatprep.subr.mxu0 0.0
        %897 = vmatpush1.msra.mxu0 0.0
        %898 = vmatprep.subr.mxu0 0.0
        %899 = vmatpush1.msra.mxu0 0.0
        %900 = vmatprep.subr.mxu0 0.0
        %901 = vmatpush1.msra.mxu0 0.0
        %902 = vmatprep.subr.mxu0 0.0
        %903 = vmatpush1.msra.mxu0 0.0
        %904 = vmatprep.subr.mxu0 0.0
        %905 = vmatpush1.msra.mxu0 0.0
        %906 = vmatprep.subr.mxu0 0.0
        %907 = vmatpush1.msra.mxu0 0.0
        %908 = vmatprep.subr.mxu0 0.0
        %909 = vmatpush1.msra.mxu0 0.0
        %910 = vmatprep.subr.mxu0 0.0
        %911 = vmatpush1.msra.mxu0 0.0
        %912 = vmatprep.subr.mxu0 0.0
        %913 = vmatpush1.msra.mxu0 0.0
        %914 = vmatprep.subr.mxu0 0.0
        %915 = vmatpush1.msra.mxu0 0.0
        %916 = vmatprep.subr.mxu0 0.0
        %917 = vmatpush1.msra.mxu0 0.0
        %918 = vmatprep.subr.mxu0 0.0
        %919 = vmatpush1.msra.mxu0 0.0
        %920 = vmatprep.subr.mxu0 0.0
        %921 = vmatpush1.msra.mxu0 0.0
        %922 = vmatprep.subr.mxu0 0.0
        %923 = vmatpush1.msra.mxu0 0.0
        %924 = vmatprep.subr.mxu0 0.0
        %925 = vmatpush1.msra.mxu0 0.0
        %926 = vmatprep.mubr.f32.mxu0 0.0
        %927 = vmatmul.mubr.f32.gmra.mrb[0].mxu0 %v851
        %v928 = vpop.f32.mrb[0].mxu0
        %v929 = vadd.f32 %v833, %v928
        %v930 = vpop.f32.mrb[0].mxu0
        %931 = vmatprep.mubr.f32.mxu0 0.0
        %932 = vmatmul.mubr.f32.gmra.mrb[0].mxu0 %v854
        %v933 = vpop.f32.mrb[0].mxu0
        %v934 = vadd.f32 %v838, %v933
        %v935 = vpop.f32.mrb[0].mxu0
        %936 = vmatprep.mubr.f32.mxu0 0.0
        %937 = vmatmul.mubr.f32.gmra.mrb[0].mxu0 %v857
        %v938 = vpop.f32.mrb[0].mxu0
        %v939 = vadd.f32 %v843, %v938
        %v940 = vpop.f32.mrb[0].mxu0
        %941 = vmatprep.mubr.f32.mxu0 0.0
        %942 = vmatmul.mubr.f32.gmra.mrb[0].mxu0 %v860
        %v943 = vpop.f32.mrb[0].mxu0
        %v944 = vadd.f32 %v848, %v943
        %v945 = vpop.f32.mrb[0].mxu0
        %946 = vdwg.mxu0
        %v947 = vld [vmem:[%s7] sm:$0xff]
        %v948 = vld [vmem:[%s7 + $0x8] sm:$0xff]
        %v949 = vld [vmem:[%s7 + $0x10] sm:$0xff]
        %v950 = vld [vmem:[%s7 + $0x18] sm:$0xff]
        %v951 = vld [vmem:[%s687] sm:$0xff]
        %v952 = vld [vmem:[%s687 + $0x8] sm:$0xff]
        %v953 = vld [vmem:[%s687 + $0x10] sm:$0xff]
        %vm954 = vcmask 195584
        %v956 = vsel %vm954, %v947, 0
        %v959 = vsel %vm954, %v948, 0
        %v962 = vsel %vm954, %v949, 0
        %v965 = vsel %vm954, %v950, 0
        %967 = vmatprep.subr.mxu0 0.0
        %968 = vmatpush1.msra.mxu0 %v951
        %969 = vmatprep.subr.mxu0 0.0
        %970 = vmatpush1.msra.mxu0 %v952
        %971 = vmatprep.subr.mxu0 0.0
        %972 = vmatpush1.msra.mxu0 %v953
        %973 = vmatprep.subr.mxu0 0.0
        %974 = vmatpush1.msra.mxu0 0.0
        %975 = vmatprep.subr.mxu0 0.0
        %976 = vmatpush1.msra.mxu0 0.0
        %977 = vmatprep.subr.mxu0 0.0
        %978 = vmatpush1.msra.mxu0 0.0
        %979 = vmatprep.subr.mxu0 0.0
        %980 = vmatpush1.msra.mxu0 0.0
        %981 = vmatprep.subr.mxu0 0.0
        %982 = vmatpush1.msra.mxu0 0.0
        %983 = vmatprep.subr.mxu0 0.0
        %984 = vmatpush1.msra.mxu0 0.0
        %985 = vmatprep.subr.mxu0 0.0
        %986 = vmatpush1.msra.mxu0 0.0
        %987 = vmatprep.subr.mxu0 0.0
        %988 = vmatpush1.msra.mxu0 0.0
        %989 = vmatprep.subr.mxu0 0.0
        %990 = vmatpush1.msra.mxu0 0.0
        %991 = vmatprep.subr.mxu0 0.0
        %992 = vmatpush1.msra.mxu0 0.0
        %993 = vmatprep.subr.mxu0 0.0
        %994 = vmatpush1.msra.mxu0 0.0
        %995 = vmatprep.subr.mxu0 0.0
        %996 = vmatpush1.msra.mxu0 0.0
        %997 = vmatprep.subr.mxu0 0.0
        %998 = vmatpush1.msra.mxu0 0.0
        %999 = vmatprep.subr.mxu0 0.0
        %1000 = vmatpush1.msra.mxu0 0.0
        %1001 = vmatprep.subr.mxu0 0.0
        %1002 = vmatpush1.msra.mxu0 0.0
        %1003 = vmatprep.subr.mxu0 0.0
        %1004 = vmatpush1.msra.mxu0 0.0
        %1005 = vmatprep.subr.mxu0 0.0
        %1006 = vmatpush1.msra.mxu0 0.0
        %1007 = vmatprep.subr.mxu0 0.0
        %1008 = vmatpush1.msra.mxu0 0.0
        %1009 = vmatprep.subr.mxu0 0.0
        %1010 = vmatpush1.msra.mxu0 0.0
        %1011 = vmatprep.subr.mxu0 0.0
        %1012 = vmatpush1.msra.mxu0 0.0
        %1013 = vmatprep.subr.mxu0 0.0
        %1014 = vmatpush1.msra.mxu0 0.0
        %1015 = vmatprep.subr.mxu0 0.0
        %1016 = vmatpush1.msra.mxu0 0.0
        %1017 = vmatprep.subr.mxu0 0.0
        %1018 = vmatpush1.msra.mxu0 0.0
        %1019 = vmatprep.subr.mxu0 0.0
        %1020 = vmatpush1.msra.mxu0 0.0
        %1021 = vmatprep.subr.mxu0 0.0
        %1022 = vmatpush1.msra.mxu0 0.0
        %1023 = vmatprep.subr.mxu0 0.0
        %1024 = vmatpush1.msra.mxu0 0.0
        %1025 = vmatprep.subr.mxu0 0.0
        %1026 = vmatpush1.msra.mxu0 0.0
        %1027 = vmatprep.subr.mxu0 0.0
        %1028 = vmatpush1.msra.mxu0 0.0
        %1029 = vmatprep.subr.mxu0 0.0
        %1030 = vmatpush1.msra.mxu0 0.0
        %1031 = vmatprep.mubr.f32.mxu0 0.0
        %1032 = vmatmul.mubr.f32.gmra.mrb[0].mxu0 %v956
        %v1033 = vpop.f32.mrb[0].mxu0
        %v1034 = vadd.f32 0.0, %v1033
        %v1035 = vpop.f32.mrb[0].mxu0
        %1036 = vmatprep.mubr.f32.mxu0 0.0
        %1037 = vmatmul.mubr.f32.gmra.mrb[0].mxu0 %v959
        %v1038 = vpop.f32.mrb[0].mxu0
        %v1039 = vadd.f32 0.0, %v1038
        %v1040 = vpop.f32.mrb[0].mxu0
        %1041 = vmatprep.mubr.f32.mxu0 0.0
        %1042 = vmatmul.mubr.f32.gmra.mrb[0].mxu0 %v962
        %v1043 = vpop.f32.mrb[0].mxu0
        %v1044 = vadd.f32 0.0, %v1043
        %v1045 = vpop.f32.mrb[0].mxu0
        %1046 = vmatprep.mubr.f32.mxu0 0.0
        %1047 = vmatmul.mubr.f32.gmra.mrb[0].mxu0 %v965
        %v1048 = vpop.f32.mrb[0].mxu0
        %v1049 = vadd.f32 0.0, %v1048
        %v1050 = vpop.f32.mrb[0].mxu0
        %1051 = vdwg.mxu0
        %v1052 = vadd.f32 %v929, %v1034
        %v1053 = vadd.f32 %v934, %v1039
        %v1054 = vadd.f32 %v939, %v1044
        %v1055 = vadd.f32 %v944, %v1049
        %v1056 = vld [vmem:[%s692] sm:$0xff]
        %v1057 = vld [vmem:[%s692 + $0x8] sm:$0xff]
        %v1058 = vld [vmem:[%s692 + $0x10] sm:$0xff]
        %v1059 = vld [vmem:[%s692 + $0x18] sm:$0xff]
        %1061 = vset.pattern.permute.xlu0 0
        %1062 = vperm.xlu0 %1061, %v1056
        %v1063 = vpop.permute.xlu0 %1062
        %1066 = vset.pattern.permute.xlu0 0
        %1067 = vperm.xlu0 %1066, %v1057
        %v1068 = vpop.permute.xlu0 %1067
        %1071 = vset.pattern.permute.xlu0 0
        %1072 = vperm.xlu0 %1071, %v1058
        %v1073 = vpop.permute.xlu0 %1072
        %1076 = vset.pattern.permute.xlu0 0
        %1077 = vperm.xlu0 %1076, %v1059
        %v1078 = vpop.permute.xlu0 %1077
        %v1080 = vadd.f32 %v1052, %v1063
        %v1081 = vadd.f32 %v1053, %v1068
        %v1082 = vadd.f32 %v1054, %v1073
        %v1083 = vadd.f32 %v1055, %v1078
        %vm1084 = vcmp.ge.f32.partialorder %v1080, 0.0
        %vm1085 = vcmp.ge.f32.partialorder %v1081, 0.0
        %vm1086 = vcmp.ge.f32.partialorder %v1082, 0.0
        %vm1087 = vcmp.ge.f32.partialorder %v1083, 0.0
        %v1088 = vstv %s820
        %v1089 = vmul.f32 %v1088, %v1080
        %v1090 = vmul.f32 %v1088, %v1081
        %v1091 = vmul.f32 %v1088, %v1082
        %v1092 = vmul.f32 %v1088, %v1083
        %v1093 = vsel %vm1084, %v1080, %v1089
        %v1094 = vsel %vm1085, %v1081, %v1090
        %v1095 = vsel %vm1086, %v1082, %v1091
        %v1096 = vsel %vm1087, %v1083, %v1092
        %v1097 = vld [vmem:[%s9] sm:$0xff]
        %v1098 = vld [vmem:[%s9 + $0x8] sm:$0xff]
        %v1099 = vld [vmem:[%s9 + $0x10] sm:$0xff]
        %v1100 = vld [vmem:[%s9 + $0x18] sm:$0xff]
        %v1101 = vld [vmem:[%s10] sm:$0xff]
        %v1102 = vld [vmem:[%s10 + $0x8] sm:$0xff]
        %v1103 = vld [vmem:[%s10 + $0x10] sm:$0xff]
        %v1104 = vld [vmem:[%s10 + $0x18] sm:$0xff]
        %v1105 = vadd.f32 %v1093, %v1094
        %v1106 = vadd.f32 %v1105, %v1095
        %v1107 = vadd.f32 %v1106, %v1096
        %1108 = vadd.xlane.f32.xlu0 %v1107
        %v1109 = vpop.xlane.xlu0 %1108
        %v1110 = vrot.slane %v1109, 4
        %v1111 = vadd.f32 %v1109, %v1110
        %v1112 = vrot.slane %v1111, 2
        %v1113 = vadd.f32 %v1111, %v1112
        %v1114 = vrot.slane %v1113, 1
        %v1115 = vadd.f32 %v1113, %v1114
        %s1116 = vtos %v1115
        %v1117 = vrcp.pop 4096.0
        %s1118 = vtos %v1117
        %s1119 = smul.f32 %s1116, %s1118
        %v1120 = vstv %s1119
        %v1121 = vsub.f32 %v1093, %v1120
        %v1122 = vsub.f32 %v1094, %v1120
        %v1123 = vsub.f32 %v1095, %v1120
        %v1124 = vsub.f32 %v1096, %v1120
        %v1125 = vmul.f32 %v1121, %v1121
        %v1126 = vmul.f32 %v1122, %v1122
        %v1127 = vmul.f32 %v1123, %v1123
        %v1128 = vmul.f32 %v1124, %v1124
        %v1129 = vadd.f32 %v1125, %v1126
        %v1130 = vadd.f32 %v1129, %v1127
        %v1131 = vadd.f32 %v1130, %v1128
        %1132 = vadd.xlane.f32.xlu0 %v1131
        %v1133 = vpop.xlane.xlu0 %1132
        %v1134 = vrot.slane %v1133, 4
        %v1135 = vadd.f32 %v1133, %v1134
        %v1136 = vrot.slane %v1135, 2
        %v1137 = vadd.f32 %v1135, %v1136
        %v1138 = vrot.slane %v1137, 1
        %v1139 = vadd.f32 %v1137, %v1138
        %s1140 = vtos %v1139
        %v1141 = vrcp.pop 4096.0
        %s1142 = vtos %v1141
        %s1143 = smul.f32 %s1140, %s1142
        %s1144 = sadd.f32 %s1143, 1e-08
        %v1145 = vstv %s1144
        %v1146 = vrsqrt.pop %v1145
        %s1147 = vtos %v1146
        %v1148 = vstv %s1147
        %v1149 = vmul.f32 %v1121, %v1148
        %v1150 = vmul.f32 %v1122, %v1148
        %v1151 = vmul.f32 %v1123, %v1148
        %v1152 = vmul.f32 %v1124, %v1148
        %1154 = vset.pattern.permute.xlu0 0
        %1155 = vperm.xlu0 %1154, %v1097
        %v1156 = vpop.permute.xlu0 %1155
        %1159 = vset.pattern.permute.xlu0 0
        %1160 = vperm.xlu0 %1159, %v1098
        %v1161 = vpop.permute.xlu0 %1160
        %1164 = vset.pattern.permute.xlu0 0
        %1165 = vperm.xlu0 %1164, %v1099
        %v1166 = vpop.permute.xlu0 %1165
        %1169 = vset.pattern.permute.xlu0 0
        %1170 = vperm.xlu0 %1169, %v1100
        %v1171 = vpop.permute.xlu0 %1170
        %v1173 = vmul.f32 %v1149, %v1156
        %v1174 = vmul.f32 %v1150, %v1161
        %v1175 = vmul.f32 %v1151, %v1166
        %v1176 = vmul.f32 %v1152, %v1171
        %1178 = vset.pattern.permute.xlu0 0
        %1179 = vperm.xlu0 %1178, %v1101
        %v1180 = vpop.permute.xlu0 %1179
        %1183 = vset.pattern.permute.xlu0 0
        %1184 = vperm.xlu0 %1183, %v1102
        %v1185 = vpop.permute.xlu0 %1184
        %1188 = vset.pattern.permute.xlu0 0
        %1189 = vperm.xlu0 %1188, %v1103
        %v1190 = vpop.permute.xlu0 %1189
        %1193 = vset.pattern.permute.xlu0 0
        %1194 = vperm.xlu0 %1193, %v1104
        %v1195 = vpop.permute.xlu0 %1194
        %v1197 = vadd.f32 %v1173, %v1180
        %v1198 = vadd.f32 %v1174, %v1185
        %v1199 = vadd.f32 %v1175, %v1190
        %v1200 = vadd.f32 %v1176, %v1195
        %1201 = vrot.lane.b32.xlu0 %v1197, 1
        %v1202 = vpop.permute.xlu0 %1201
        %1203 = vrot.lane.b32.xlu0 %v1198, 1
        %v1204 = vpop.permute.xlu0 %1203
        %1205 = vrot.lane.b32.xlu0 %v1199, 1
        %v1206 = vpop.permute.xlu0 %1205
        %1207 = vrot.lane.b32.xlu0 %v1200, 1
        %v1208 = vpop.permute.xlu0 %1207
        %vm1209 = vcmp.ge.s32.totalorder %v817, 1
        %v1210 = vsel %vm1209, %v1202, 0.0
        %v1211 = vsel %vm1209, %v1204, 0.0
        %v1212 = vsel %vm1209, %v1206, 0.0
        %v1213 = vsel %vm1209, %v1208, 0.0
        %1214 = vrot.lane.b32.xlu0 %v1197, 127
        %v1215 = vpop.permute.xlu0 %1214
        %1216 = vrot.lane.b32.xlu0 %v1198, 127
        %v1217 = vpop.permute.xlu0 %1216
        %1218 = vrot.lane.b32.xlu0 %v1199, 127
        %v1219 = vpop.permute.xlu0 %1218
        %1220 = vrot.lane.b32.xlu0 %v1200, 127
        %v1221 = vpop.permute.xlu0 %1220
        %vm1222 = vcmp.lt.s32.totalorder %v817, 127
        %v1223 = vsel %vm1222, %v1215, 0.0
        %v1224 = vsel %vm1222, %v1217, 0.0
        %v1225 = vsel %vm1222, %v1219, 0.0
        %v1226 = vsel %vm1222, %v1221, 0.0
        %v1227 = vld [vmem:[%s11] sm:$0xff]
        %v1228 = vld [vmem:[%s11 + $0x8] sm:$0xff]
        %v1229 = vld [vmem:[%s11 + $0x10] sm:$0xff]
        %v1230 = vld [vmem:[%s11 + $0x18] sm:$0xff]
        %1232 = vset.pattern.permute.xlu0 0
        %1233 = vperm.xlu0 %1232, %v1227
        %v1234 = vpop.permute.xlu0 %1233
        %1237 = vset.pattern.permute.xlu0 0
        %1238 = vperm.xlu0 %1237, %v1228
        %v1239 = vpop.permute.xlu0 %1238
        %1242 = vset.pattern.permute.xlu0 0
        %1243 = vperm.xlu0 %1242, %v1229
        %v1244 = vpop.permute.xlu0 %1243
        %1247 = vset.pattern.permute.xlu0 0
        %1248 = vperm.xlu0 %1247, %v1230
        %v1249 = vpop.permute.xlu0 %1248
        %v1251 = vmul.f32 %v1234, %v1210
        %v1252 = vmul.f32 %v1239, %v1211
        %v1253 = vmul.f32 %v1244, %v1212
        %v1254 = vmul.f32 %v1249, %v1213
        %s1255 = scalar_lea.vmem %s11, 32
        %v1256 = vld [vmem:[%s1255] sm:$0xff]
        %v1257 = vld [vmem:[%s1255 + $0x8] sm:$0xff]
        %v1258 = vld [vmem:[%s1255 + $0x10] sm:$0xff]
        %v1259 = vld [vmem:[%s1255 + $0x18] sm:$0xff]
        %1261 = vset.pattern.permute.xlu0 0
        %1262 = vperm.xlu0 %1261, %v1256
        %v1263 = vpop.permute.xlu0 %1262
        %1266 = vset.pattern.permute.xlu0 0
        %1267 = vperm.xlu0 %1266, %v1257
        %v1268 = vpop.permute.xlu0 %1267
        %1271 = vset.pattern.permute.xlu0 0
        %1272 = vperm.xlu0 %1271, %v1258
        %v1273 = vpop.permute.xlu0 %1272
        %1276 = vset.pattern.permute.xlu0 0
        %1277 = vperm.xlu0 %1276, %v1259
        %v1278 = vpop.permute.xlu0 %1277
        %v1280 = vmul.f32 %v1263, %v1197
        %v1281 = vmul.f32 %v1268, %v1198
        %v1282 = vmul.f32 %v1273, %v1199
        %v1283 = vmul.f32 %v1278, %v1200
        %v1284 = vadd.f32 %v1251, %v1280
        %v1285 = vadd.f32 %v1252, %v1281
        %v1286 = vadd.f32 %v1253, %v1282
        %v1287 = vadd.f32 %v1254, %v1283
        %s1288 = scalar_lea.vmem %s11, 64
        %v1289 = vld [vmem:[%s1288] sm:$0xff]
        %v1290 = vld [vmem:[%s1288 + $0x8] sm:$0xff]
        %v1291 = vld [vmem:[%s1288 + $0x10] sm:$0xff]
        %v1292 = vld [vmem:[%s1288 + $0x18] sm:$0xff]
        %1294 = vset.pattern.permute.xlu0 0
        %1295 = vperm.xlu0 %1294, %v1289
        %v1296 = vpop.permute.xlu0 %1295
        %1299 = vset.pattern.permute.xlu0 0
        %1300 = vperm.xlu0 %1299, %v1290
        %v1301 = vpop.permute.xlu0 %1300
        %1304 = vset.pattern.permute.xlu0 0
        %1305 = vperm.xlu0 %1304, %v1291
        %v1306 = vpop.permute.xlu0 %1305
        %1309 = vset.pattern.permute.xlu0 0
        %1310 = vperm.xlu0 %1309, %v1292
        %v1311 = vpop.permute.xlu0 %1310
        %v1313 = vmul.f32 %v1296, %v1223
        %v1314 = vmul.f32 %v1301, %v1224
        %v1315 = vmul.f32 %v1306, %v1225
        %v1316 = vmul.f32 %v1311, %v1226
        %v1317 = vadd.f32 %v1284, %v1313
        %v1318 = vadd.f32 %v1285, %v1314
        %v1319 = vadd.f32 %v1286, %v1315
        %v1320 = vadd.f32 %v1287, %v1316
        %v1321 = vld [vmem:[%s12] sm:$0xff]
        %v1322 = vld [vmem:[%s12 + $0x8] sm:$0xff]
        %v1323 = vld [vmem:[%s12 + $0x10] sm:$0xff]
        %v1324 = vld [vmem:[%s12 + $0x18] sm:$0xff]
        %1326 = vset.pattern.permute.xlu0 0
        %1327 = vperm.xlu0 %1326, %v1321
        %v1328 = vpop.permute.xlu0 %1327
        %1331 = vset.pattern.permute.xlu0 0
        %1332 = vperm.xlu0 %1331, %v1322
        %v1333 = vpop.permute.xlu0 %1332
        %1336 = vset.pattern.permute.xlu0 0
        %1337 = vperm.xlu0 %1336, %v1323
        %v1338 = vpop.permute.xlu0 %1337
        %1341 = vset.pattern.permute.xlu0 0
        %1342 = vperm.xlu0 %1341, %v1324
        %v1343 = vpop.permute.xlu0 %1342
        %v1345 = vadd.f32 %v1317, %v1328
        %v1346 = vadd.f32 %v1318, %v1333
        %v1347 = vadd.f32 %v1319, %v1338
        %v1348 = vadd.f32 %v1320, %v1343
        %vm1349 = vcmp.ge.f32.partialorder %v1345, 0.0
        %vm1350 = vcmp.ge.f32.partialorder %v1346, 0.0
        %vm1351 = vcmp.ge.f32.partialorder %v1347, 0.0
        %vm1352 = vcmp.ge.f32.partialorder %v1348, 0.0
        %v1353 = vstv %s821
        %v1354 = vmul.f32 %v1353, %v1345
        %v1355 = vmul.f32 %v1353, %v1346
        %v1356 = vmul.f32 %v1353, %v1347
        %v1357 = vmul.f32 %v1353, %v1348
        %v1358 = vsel %vm1349, %v1345, %v1354
        %v1359 = vsel %vm1350, %v1346, %v1355
        %v1360 = vsel %vm1351, %v1347, %v1356
        %v1361 = vsel %vm1352, %v1348, %v1357
        %v1362 = vld [vmem:[%s13] sm:$0xff]
        %v1363 = vld [vmem:[%s13 + $0x8] sm:$0xff]
        %v1364 = vld [vmem:[%s13 + $0x10] sm:$0xff]
        %v1365 = vld [vmem:[%s13 + $0x18] sm:$0xff]
        %v1366 = vld [vmem:[%s14] sm:$0xff]
        %v1367 = vld [vmem:[%s14 + $0x8] sm:$0xff]
        %v1368 = vld [vmem:[%s14 + $0x10] sm:$0xff]
        %v1369 = vld [vmem:[%s14 + $0x18] sm:$0xff]
        %v1370 = vadd.f32 %v1358, %v1359
        %v1371 = vadd.f32 %v1370, %v1360
        %v1372 = vadd.f32 %v1371, %v1361
        %1373 = vadd.xlane.f32.xlu0 %v1372
        %v1374 = vpop.xlane.xlu0 %1373
        %v1375 = vrot.slane %v1374, 4
        %v1376 = vadd.f32 %v1374, %v1375
        %v1377 = vrot.slane %v1376, 2
        %v1378 = vadd.f32 %v1376, %v1377
        %v1379 = vrot.slane %v1378, 1
        %v1380 = vadd.f32 %v1378, %v1379
        %s1381 = vtos %v1380
        %v1382 = vrcp.pop 4096.0
        %s1383 = vtos %v1382
        %s1384 = smul.f32 %s1381, %s1383
        %v1385 = vstv %s1384
        %v1386 = vsub.f32 %v1358, %v1385
        %v1387 = vsub.f32 %v1359, %v1385
        %v1388 = vsub.f32 %v1360, %v1385
        %v1389 = vsub.f32 %v1361, %v1385
        %v1390 = vmul.f32 %v1386, %v1386
        %v1391 = vmul.f32 %v1387, %v1387
        %v1392 = vmul.f32 %v1388, %v1388
        %v1393 = vmul.f32 %v1389, %v1389
        %v1394 = vadd.f32 %v1390, %v1391
        %v1395 = vadd.f32 %v1394, %v1392
        %v1396 = vadd.f32 %v1395, %v1393
        %1397 = vadd.xlane.f32.xlu0 %v1396
        %v1398 = vpop.xlane.xlu0 %1397
        %v1399 = vrot.slane %v1398, 4
        %v1400 = vadd.f32 %v1398, %v1399
        %v1401 = vrot.slane %v1400, 2
        %v1402 = vadd.f32 %v1400, %v1401
        %v1403 = vrot.slane %v1402, 1
        %v1404 = vadd.f32 %v1402, %v1403
        %s1405 = vtos %v1404
        %v1406 = vrcp.pop 4096.0
        %s1407 = vtos %v1406
        %s1408 = smul.f32 %s1405, %s1407
        %s1409 = sadd.f32 %s1408, 1e-08
        %v1410 = vstv %s1409
        %v1411 = vrsqrt.pop %v1410
        %s1412 = vtos %v1411
        %v1413 = vstv %s1412
        %v1414 = vmul.f32 %v1386, %v1413
        %v1415 = vmul.f32 %v1387, %v1413
        %v1416 = vmul.f32 %v1388, %v1413
        %v1417 = vmul.f32 %v1389, %v1413
        %1419 = vset.pattern.permute.xlu0 0
        %1420 = vperm.xlu0 %1419, %v1362
        %v1421 = vpop.permute.xlu0 %1420
        %1424 = vset.pattern.permute.xlu0 0
        %1425 = vperm.xlu0 %1424, %v1363
        %v1426 = vpop.permute.xlu0 %1425
        %1429 = vset.pattern.permute.xlu0 0
        %1430 = vperm.xlu0 %1429, %v1364
        %v1431 = vpop.permute.xlu0 %1430
        %1434 = vset.pattern.permute.xlu0 0
        %1435 = vperm.xlu0 %1434, %v1365
        %v1436 = vpop.permute.xlu0 %1435
        %v1438 = vmul.f32 %v1414, %v1421
        %v1439 = vmul.f32 %v1415, %v1426
        %v1440 = vmul.f32 %v1416, %v1431
        %v1441 = vmul.f32 %v1417, %v1436
        %1443 = vset.pattern.permute.xlu0 0
        %1444 = vperm.xlu0 %1443, %v1366
        %v1445 = vpop.permute.xlu0 %1444
        %1448 = vset.pattern.permute.xlu0 0
        %1449 = vperm.xlu0 %1448, %v1367
        %v1450 = vpop.permute.xlu0 %1449
        %1453 = vset.pattern.permute.xlu0 0
        %1454 = vperm.xlu0 %1453, %v1368
        %v1455 = vpop.permute.xlu0 %1454
        %1458 = vset.pattern.permute.xlu0 0
        %1459 = vperm.xlu0 %1458, %v1369
        %v1460 = vpop.permute.xlu0 %1459
        %v1462 = vadd.f32 %v1438, %v1445
        %v1463 = vadd.f32 %v1439, %v1450
        %v1464 = vadd.f32 %v1440, %v1455
        %v1465 = vadd.f32 %v1441, %v1460
        %v1466 = vld [vmem:[%s15] sm:$0xff]
        %v1467 = vld [vmem:[%s15 + $0x8] sm:$0xff]
        %v1468 = vld [vmem:[%s16] sm:$0xff]
        %v1469 = vld [vmem:[%s16 + $0x8] sm:$0xff]
        %1471 = vset.pattern.permute.xlu0 0
        %1472 = vperm.xlu0 %1471, %v1468
        %v1473 = vpop.permute.xlu0 %1472
        %1476 = vset.pattern.permute.xlu0 0
        %1477 = vperm.xlu0 %1476, %v1469
        %v1478 = vpop.permute.xlu0 %1477
        %vm1480 = vcmask 261120
        %v1482 = vsel %vm1480, %v1466, 0
        %v1485 = vsel %vm1480, %v1467, 0
        %1487 = vmatprep.subr.mxu0 0.0
        %1488 = vmatpush1.msra.mxu0 %v1462
        %1489 = vmatprep.subr.mxu0 0.0
        %1490 = vmatpush1.msra.mxu0 %v1463
        %1491 = vmatprep.subr.mxu0 0.0
        %1492 = vmatpush1.msra.mxu0 %v1464
        %1493 = vmatprep.subr.mxu0 0.0
        %1494 = vmatpush1.msra.mxu0 %v1465
        %1495 = vmatprep.subr.mxu0 0.0
        %1496 = vmatpush1.msra.mxu0 0.0
        %1497 = vmatprep.subr.mxu0 0.0
        %1498 = vmatpush1.msra.mxu0 0.0
        %1499 = vmatprep.subr.mxu0 0.0
        %1500 = vmatpush1.msra.mxu0 0.0
        %1501 = vmatprep.subr.mxu0 0.0
        %1502 = vmatpush1.msra.mxu0 0.0
        %1503 = vmatprep.subr.mxu0 0.0
        %1504 = vmatpush1.msra.mxu0 0.0
        %1505 = vmatprep.subr.mxu0 0.0
        %1506 = vmatpush1.msra.mxu0 0.0
        %1507 = vmatprep.subr.mxu0 0.0
        %1508 = vmatpush1.msra.mxu0 0.0
        %1509 = vmatprep.subr.mxu0 0.0
        %1510 = vmatpush1.msra.mxu0 0.0
        %1511 = vmatprep.subr.mxu0 0.0
        %1512 = vmatpush1.msra.mxu0 0.0
        %1513 = vmatprep.subr.mxu0 0.0
        %1514 = vmatpush1.msra.mxu0 0.0
        %1515 = vmatprep.subr.mxu0 0.0
        %1516 = vmatpush1.msra.mxu0 0.0
        %1517 = vmatprep.subr.mxu0 0.0
        %1518 = vmatpush1.msra.mxu0 0.0
        %1519 = vmatprep.subr.mxu0 0.0
        %1520 = vmatpush1.msra.mxu0 0.0
        %1521 = vmatprep.subr.mxu0 0.0
        %1522 = vmatpush1.msra.mxu0 0.0
        %1523 = vmatprep.subr.mxu0 0.0
        %1524 = vmatpush1.msra.mxu0 0.0
        %1525 = vmatprep.subr.mxu0 0.0
        %1526 = vmatpush1.msra.mxu0 0.0
        %1527 = vmatprep.subr.mxu0 0.0
        %1528 = vmatpush1.msra.mxu0 0.0
        %1529 = vmatprep.subr.mxu0 0.0
        %1530 = vmatpush1.msra.mxu0 0.0
        %1531 = vmatprep.subr.mxu0 0.0
        %1532 = vmatpush1.msra.mxu0 0.0
        %1533 = vmatprep.subr.mxu0 0.0
        %1534 = vmatpush1.msra.mxu0 0.0
        %1535 = vmatprep.subr.mxu0 0.0
        %1536 = vmatpush1.msra.mxu0 0.0
        %1537 = vmatprep.subr.mxu0 0.0
        %1538 = vmatpush1.msra.mxu0 0.0
        %1539 = vmatprep.subr.mxu0 0.0
        %1540 = vmatpush1.msra.mxu0 0.0
        %1541 = vmatprep.subr.mxu0 0.0
        %1542 = vmatpush1.msra.mxu0 0.0
        %1543 = vmatprep.subr.mxu0 0.0
        %1544 = vmatpush1.msra.mxu0 0.0
        %1545 = vmatprep.subr.mxu0 0.0
        %1546 = vmatpush1.msra.mxu0 0.0
        %1547 = vmatprep.subr.mxu0 0.0
        %1548 = vmatpush1.msra.mxu0 0.0
        %1549 = vmatprep.subr.mxu0 0.0
        %1550 = vmatpush1.msra.mxu0 0.0
        %1551 = vmatprep.mubr.f32.mxu0 0.0
        %1552 = vmatmul.mubr.f32.gmra.mrb[0].mxu0 %v1482
        %v1553 = vpop.f32.mrb[0].mxu0
        %v1554 = vadd.f32 %v1473, %v1553
        %v1555 = vpop.f32.mrb[0].mxu0
        %1556 = vmatprep.mubr.f32.mxu0 0.0
        %1557 = vmatmul.mubr.f32.gmra.mrb[0].mxu0 %v1485
        %v1558 = vpop.f32.mrb[0].mxu0
        %v1559 = vadd.f32 %v1478, %v1558
        %v1560 = vpop.f32.mrb[0].mxu0
        %1561 = vdwg.mxu0
        %s1562 = sld [smem:[#allocation2 + $0x2]]
        %s1563 = sld [smem:[#allocation2 + $0x3]]
        %s1564 = scalar_lea.vmem %s6, 32
        %v1565 = vld [vmem:[%s1564] sm:$0xff]
        %v1566 = vld [vmem:[%s1564 + $0x8] sm:$0xff]
        %v1567 = vld [vmem:[%s1564 + $0x10] sm:$0xff]
        %v1568 = vld [vmem:[%s1564 + $0x18] sm:$0xff]
        %s1569 = scalar_lea.vmem %s8, 32
        %v1570 = vld [vmem:[%s1569] sm:$0xff]
        %v1571 = vld [vmem:[%s1569 + $0x8] sm:$0xff]
        %v1572 = vld [vmem:[%s1569 + $0x10] sm:$0xff]
        %v1573 = vld [vmem:[%s1569 + $0x18] sm:$0xff]
        %1575 = vset.pattern.permute.xlu0 0
        %1576 = vperm.xlu0 %1575, %v1570
        %v1577 = vpop.permute.xlu0 %1576
        %1580 = vset.pattern.permute.xlu0 0
        %1581 = vperm.xlu0 %1580, %v1571
        %v1582 = vpop.permute.xlu0 %1581
        %1585 = vset.pattern.permute.xlu0 0
        %1586 = vperm.xlu0 %1585, %v1572
        %v1587 = vpop.permute.xlu0 %1586
        %1590 = vset.pattern.permute.xlu0 0
        %1591 = vperm.xlu0 %1590, %v1573
        %v1592 = vpop.permute.xlu0 %1591
        %v1595 = vsel %vm734, %v1565, 0
        %v1598 = vsel %vm734, %v1566, 0
        %v1601 = vsel %vm734, %v1567, 0
        %v1604 = vsel %vm734, %v1568, 0
        %1606 = vmatprep.subr.mxu0 0.0
        %1607 = vmatpush1.msra.mxu0 %v1554
        %1608 = vmatprep.subr.mxu0 0.0
        %1609 = vmatpush1.msra.mxu0 %v1559
        %1610 = vmatprep.subr.mxu0 0.0
        %1611 = vmatpush1.msra.mxu0 0.0
        %1612 = vmatprep.subr.mxu0 0.0
        %1613 = vmatpush1.msra.mxu0 0.0
        %1614 = vmatprep.subr.mxu0 0.0
        %1615 = vmatpush1.msra.mxu0 0.0
        %1616 = vmatprep.subr.mxu0 0.0
        %1617 = vmatpush1.msra.mxu0 0.0
        %1618 = vmatprep.subr.mxu0 0.0
        %1619 = vmatpush1.msra.mxu0 0.0
        %1620 = vmatprep.subr.mxu0 0.0
        %1621 = vmatpush1.msra.mxu0 0.0
        %1622 = vmatprep.subr.mxu0 0.0
        %1623 = vmatpush1.msra.mxu0 0.0
        %1624 = vmatprep.subr.mxu0 0.0
        %1625 = vmatpush1.msra.mxu0 0.0
        %1626 = vmatprep.subr.mxu0 0.0
        %1627 = vmatpush1.msra.mxu0 0.0
        %1628 = vmatprep.subr.mxu0 0.0
        %1629 = vmatpush1.msra.mxu0 0.0
        %1630 = vmatprep.subr.mxu0 0.0
        %1631 = vmatpush1.msra.mxu0 0.0
        %1632 = vmatprep.subr.mxu0 0.0
        %1633 = vmatpush1.msra.mxu0 0.0
        %1634 = vmatprep.subr.mxu0 0.0
        %1635 = vmatpush1.msra.mxu0 0.0
        %1636 = vmatprep.subr.mxu0 0.0
        %1637 = vmatpush1.msra.mxu0 0.0
        %1638 = vmatprep.subr.mxu0 0.0
        %1639 = vmatpush1.msra.mxu0 0.0
        %1640 = vmatprep.subr.mxu0 0.0
        %1641 = vmatpush1.msra.mxu0 0.0
        %1642 = vmatprep.subr.mxu0 0.0
        %1643 = vmatpush1.msra.mxu0 0.0
        %1644 = vmatprep.subr.mxu0 0.0
        %1645 = vmatpush1.msra.mxu0 0.0
        %1646 = vmatprep.subr.mxu0 0.0
        %1647 = vmatpush1.msra.mxu0 0.0
        %1648 = vmatprep.subr.mxu0 0.0
        %1649 = vmatpush1.msra.mxu0 0.0
        %1650 = vmatprep.subr.mxu0 0.0
        %1651 = vmatpush1.msra.mxu0 0.0
        %1652 = vmatprep.subr.mxu0 0.0
        %1653 = vmatpush1.msra.mxu0 0.0
        %1654 = vmatprep.subr.mxu0 0.0
        %1655 = vmatpush1.msra.mxu0 0.0
        %1656 = vmatprep.subr.mxu0 0.0
        %1657 = vmatpush1.msra.mxu0 0.0
        %1658 = vmatprep.subr.mxu0 0.0
        %1659 = vmatpush1.msra.mxu0 0.0
        %1660 = vmatprep.subr.mxu0 0.0
        %1661 = vmatpush1.msra.mxu0 0.0
        %1662 = vmatprep.subr.mxu0 0.0
        %1663 = vmatpush1.msra.mxu0 0.0
        %1664 = vmatprep.subr.mxu0 0.0
        %1665 = vmatpush1.msra.mxu0 0.0
        %1666 = vmatprep.subr.mxu0 0.0
        %1667 = vmatpush1.msra.mxu0 0.0
        %1668 = vmatprep.subr.mxu0 0.0
        %1669 = vmatpush1.msra.mxu0 0.0
        %1670 = vmatprep.mubr.f32.mxu0 0.0
        %1671 = vmatmul.mubr.f32.gmra.mrb[0].mxu0 %v1595
        %v1672 = vpop.f32.mrb[0].mxu0
        %v1673 = vadd.f32 %v1577, %v1672
        %v1674 = vpop.f32.mrb[0].mxu0
        %1675 = vmatprep.mubr.f32.mxu0 0.0
        %1676 = vmatmul.mubr.f32.gmra.mrb[0].mxu0 %v1598
        %v1677 = vpop.f32.mrb[0].mxu0
        %v1678 = vadd.f32 %v1582, %v1677
        %v1679 = vpop.f32.mrb[0].mxu0
        %1680 = vmatprep.mubr.f32.mxu0 0.0
        %1681 = vmatmul.mubr.f32.gmra.mrb[0].mxu0 %v1601
        %v1682 = vpop.f32.mrb[0].mxu0
        %v1683 = vadd.f32 %v1587, %v1682
        %v1684 = vpop.f32.mrb[0].mxu0
        %1685 = vmatprep.mubr.f32.mxu0 0.0
        %1686 = vmatmul.mubr.f32.gmra.mrb[0].mxu0 %v1604
        %v1687 = vpop.f32.mrb[0].mxu0
        %v1688 = vadd.f32 %v1592, %v1687
        %v1689 = vpop.f32.mrb[0].mxu0
        %1690 = vdwg.mxu0
        %vm1691 = vcmp.ge.f32.partialorder %v1673, 0.0
        %vm1692 = vcmp.ge.f32.partialorder %v1678, 0.0
        %vm1693 = vcmp.ge.f32.partialorder %v1683, 0.0
        %vm1694 = vcmp.ge.f32.partialorder %v1688, 0.0
        %v1695 = vstv %s1562
        %v1696 = vmul.f32 %v1695, %v1673
        %v1697 = vmul.f32 %v1695, %v1678
        %v1698 = vmul.f32 %v1695, %v1683
        %v1699 = vmul.f32 %v1695, %v1688
        %v1700 = vsel %vm1691, %v1673, %v1696
        %v1701 = vsel %vm1692, %v1678, %v1697
        %v1702 = vsel %vm1693, %v1683, %v1698
        %v1703 = vsel %vm1694, %v1688, %v1699
        %s1704 = scalar_lea.vmem %s9, 32
        %v1705 = vld [vmem:[%s1704] sm:$0xff]
        %v1706 = vld [vmem:[%s1704 + $0x8] sm:$0xff]
        %v1707 = vld [vmem:[%s1704 + $0x10] sm:$0xff]
        %v1708 = vld [vmem:[%s1704 + $0x18] sm:$0xff]
        %s1709 = scalar_lea.vmem %s10, 32
        %v1710 = vld [vmem:[%s1709] sm:$0xff]
        %v1711 = vld [vmem:[%s1709 + $0x8] sm:$0xff]
        %v1712 = vld [vmem:[%s1709 + $0x10] sm:$0xff]
        %v1713 = vld [vmem:[%s1709 + $0x18] sm:$0xff]
        %v1714 = vadd.f32 %v1700, %v1701
        %v1715 = vadd.f32 %v1714, %v1702
        %v1716 = vadd.f32 %v1715, %v1703
        %1717 = vadd.xlane.f32.xlu0 %v1716
        %v1718 = vpop.xlane.xlu0 %1717
        %v1719 = vrot.slane %v1718, 4
        %v1720 = vadd.f32 %v1718, %v1719
        %v1721 = vrot.slane %v1720, 2
        %v1722 = vadd.f32 %v1720, %v1721
        %v1723 = vrot.slane %v1722, 1
        %v1724 = vadd.f32 %v1722, %v1723
        %s1725 = vtos %v1724
        %v1726 = vrcp.pop 4096.0
        %s1727 = vtos %v1726
        %s1728 = smul.f32 %s1725, %s1727
        %v1729 = vstv %s1728
        %v1730 = vsub.f32 %v1700, %v1729
        %v1731 = vsub.f32 %v1701, %v1729
        %v1732 = vsub.f32 %v1702, %v1729
        %v1733 = vsub.f32 %v1703, %v1729
        %v1734 = vmul.f32 %v1730, %v1730
        %v1735 = vmul.f32 %v1731, %v1731
        %v1736 = vmul.f32 %v1732, %v1732
        %v1737 = vmul.f32 %v1733, %v1733
        %v1738 = vadd.f32 %v1734, %v1735
        %v1739 = vadd.f32 %v1738, %v1736
        %v1740 = vadd.f32 %v1739, %v1737
        %1741 = vadd.xlane.f32.xlu0 %v1740
        %v1742 = vpop.xlane.xlu0 %1741
        %v1743 = vrot.slane %v1742, 4
        %v1744 = vadd.f32 %v1742, %v1743
        %v1745 = vrot.slane %v1744, 2
        %v1746 = vadd.f32 %v1744, %v1745
        %v1747 = vrot.slane %v1746, 1
        %v1748 = vadd.f32 %v1746, %v1747
        %s1749 = vtos %v1748
        %v1750 = vrcp.pop 4096.0
        %s1751 = vtos %v1750
        %s1752 = smul.f32 %s1749, %s1751
        %s1753 = sadd.f32 %s1752, 1e-08
        %v1754 = vstv %s1753
        %v1755 = vrsqrt.pop %v1754
        %s1756 = vtos %v1755
        %v1757 = vstv %s1756
        %v1758 = vmul.f32 %v1730, %v1757
        %v1759 = vmul.f32 %v1731, %v1757
        %v1760 = vmul.f32 %v1732, %v1757
        %v1761 = vmul.f32 %v1733, %v1757
        %1763 = vset.pattern.permute.xlu0 0
        %1764 = vperm.xlu0 %1763, %v1705
        %v1765 = vpop.permute.xlu0 %1764
        %1768 = vset.pattern.permute.xlu0 0
        %1769 = vperm.xlu0 %1768, %v1706
        %v1770 = vpop.permute.xlu0 %1769
        %1773 = vset.pattern.permute.xlu0 0
        %1774 = vperm.xlu0 %1773, %v1707
        %v1775 = vpop.permute.xlu0 %1774
        %1778 = vset.pattern.permute.xlu0 0
        %1779 = vperm.xlu0 %1778, %v1708
        %v1780 = vpop.permute.xlu0 %1779
        %v1782 = vmul.f32 %v1758, %v1765
        %v1783 = vmul.f32 %v1759, %v1770
        %v1784 = vmul.f32 %v1760, %v1775
        %v1785 = vmul.f32 %v1761, %v1780
        %1787 = vset.pattern.permute.xlu0 0
        %1788 = vperm.xlu0 %1787, %v1710
        %v1789 = vpop.permute.xlu0 %1788
        %1792 = vset.pattern.permute.xlu0 0
        %1793 = vperm.xlu0 %1792, %v1711
        %v1794 = vpop.permute.xlu0 %1793
        %1797 = vset.pattern.permute.xlu0 0
        %1798 = vperm.xlu0 %1797, %v1712
        %v1799 = vpop.permute.xlu0 %1798
        %1802 = vset.pattern.permute.xlu0 0
        %1803 = vperm.xlu0 %1802, %v1713
        %v1804 = vpop.permute.xlu0 %1803
        %v1806 = vadd.f32 %v1782, %v1789
        %v1807 = vadd.f32 %v1783, %v1794
        %v1808 = vadd.f32 %v1784, %v1799
        %v1809 = vadd.f32 %v1785, %v1804
        %1810 = vrot.lane.b32.xlu0 %v1806, 2
        %v1811 = vpop.permute.xlu0 %1810
        %1812 = vrot.lane.b32.xlu0 %v1807, 2
        %v1813 = vpop.permute.xlu0 %1812
        %1814 = vrot.lane.b32.xlu0 %v1808, 2
        %v1815 = vpop.permute.xlu0 %1814
        %1816 = vrot.lane.b32.xlu0 %v1809, 2
        %v1817 = vpop.permute.xlu0 %1816
        %vm1818 = vcmp.ge.s32.totalorder %v817, 2
        %v1819 = vsel %vm1818, %v1811, 0.0
        %v1820 = vsel %vm1818, %v1813, 0.0
        %v1821 = vsel %vm1818, %v1815, 0.0
        %v1822 = vsel %vm1818, %v1817, 0.0
        %1823 = vrot.lane.b32.xlu0 %v1806, 126
        %v1824 = vpop.permute.xlu0 %1823
        %1825 = vrot.lane.b32.xlu0 %v1807, 126
        %v1826 = vpop.permute.xlu0 %1825
        %1827 = vrot.lane.b32.xlu0 %v1808, 126
        %v1828 = vpop.permute.xlu0 %1827
        %1829 = vrot.lane.b32.xlu0 %v1809, 126
        %v1830 = vpop.permute.xlu0 %1829
        %vm1831 = vcmp.lt.s32.totalorder %v817, 126
        %v1832 = vsel %vm1831, %v1824, 0.0
        %v1833 = vsel %vm1831, %v1826, 0.0
        %v1834 = vsel %vm1831, %v1828, 0.0
        %v1835 = vsel %vm1831, %v1830, 0.0
        %s1836 = scalar_lea.vmem %s11, 96
        %v1837 = vld [vmem:[%s1836] sm:$0xff]
        %v1838 = vld [vmem:[%s1836 + $0x8] sm:$0xff]
        %v1839 = vld [vmem:[%s1836 + $0x10] sm:$0xff]
        %v1840 = vld [vmem:[%s1836 + $0x18] sm:$0xff]
        %1842 = vset.pattern.permute.xlu0 0
        %1843 = vperm.xlu0 %1842, %v1837
        %v1844 = vpop.permute.xlu0 %1843
        %1847 = vset.pattern.permute.xlu0 0
        %1848 = vperm.xlu0 %1847, %v1838
        %v1849 = vpop.permute.xlu0 %1848
        %1852 = vset.pattern.permute.xlu0 0
        %1853 = vperm.xlu0 %1852, %v1839
        %v1854 = vpop.permute.xlu0 %1853
        %1857 = vset.pattern.permute.xlu0 0
        %1858 = vperm.xlu0 %1857, %v1840
        %v1859 = vpop.permute.xlu0 %1858
        %v1861 = vmul.f32 %v1844, %v1819
        %v1862 = vmul.f32 %v1849, %v1820
        %v1863 = vmul.f32 %v1854, %v1821
        %v1864 = vmul.f32 %v1859, %v1822
        %s1865 = scalar_lea.vmem %s11, 128
        %v1866 = vld [vmem:[%s1865] sm:$0xff]
        %v1867 = vld [vmem:[%s1865 + $0x8] sm:$0xff]
        %v1868 = vld [vmem:[%s1865 + $0x10] sm:$0xff]
        %v1869 = vld [vmem:[%s1865 + $0x18] sm:$0xff]
        %1871 = vset.pattern.permute.xlu0 0
        %1872 = vperm.xlu0 %1871, %v1866
        %v1873 = vpop.permute.xlu0 %1872
        %1876 = vset.pattern.permute.xlu0 0
        %1877 = vperm.xlu0 %1876, %v1867
        %v1878 = vpop.permute.xlu0 %1877
        %1881 = vset.pattern.permute.xlu0 0
        %1882 = vperm.xlu0 %1881, %v1868
        %v1883 = vpop.permute.xlu0 %1882
        %1886 = vset.pattern.permute.xlu0 0
        %1887 = vperm.xlu0 %1886, %v1869
        %v1888 = vpop.permute.xlu0 %1887
        %v1890 = vmul.f32 %v1873, %v1806
        %v1891 = vmul.f32 %v1878, %v1807
        %v1892 = vmul.f32 %v1883, %v1808
        %v1893 = vmul.f32 %v1888, %v1809
        %v1894 = vadd.f32 %v1861, %v1890
        %v1895 = vadd.f32 %v1862, %v1891
        %v1896 = vadd.f32 %v1863, %v1892
        %v1897 = vadd.f32 %v1864, %v1893
        %s1898 = scalar_lea.vmem %s11, 160
        %v1899 = vld [vmem:[%s1898] sm:$0xff]
        %v1900 = vld [vmem:[%s1898 + $0x8] sm:$0xff]
        %v1901 = vld [vmem:[%s1898 + $0x10] sm:$0xff]
        %v1902 = vld [vmem:[%s1898 + $0x18] sm:$0xff]
        %1904 = vset.pattern.permute.xlu0 0
        %1905 = vperm.xlu0 %1904, %v1899
        %v1906 = vpop.permute.xlu0 %1905
        %1909 = vset.pattern.permute.xlu0 0
        %1910 = vperm.xlu0 %1909, %v1900
        %v1911 = vpop.permute.xlu0 %1910
        %1914 = vset.pattern.permute.xlu0 0
        %1915 = vperm.xlu0 %1914, %v1901
        %v1916 = vpop.permute.xlu0 %1915
        %1919 = vset.pattern.permute.xlu0 0
        %1920 = vperm.xlu0 %1919, %v1902
        %v1921 = vpop.permute.xlu0 %1920
        %v1923 = vmul.f32 %v1906, %v1832
        %v1924 = vmul.f32 %v1911, %v1833
        %v1925 = vmul.f32 %v1916, %v1834
        %v1926 = vmul.f32 %v1921, %v1835
        %v1927 = vadd.f32 %v1894, %v1923
        %v1928 = vadd.f32 %v1895, %v1924
        %v1929 = vadd.f32 %v1896, %v1925
        %v1930 = vadd.f32 %v1897, %v1926
        %s1931 = scalar_lea.vmem %s12, 32
        %v1932 = vld [vmem:[%s1931] sm:$0xff]
        %v1933 = vld [vmem:[%s1931 + $0x8] sm:$0xff]
        %v1934 = vld [vmem:[%s1931 + $0x10] sm:$0xff]
        %v1935 = vld [vmem:[%s1931 + $0x18] sm:$0xff]
        %1937 = vset.pattern.permute.xlu0 0
        %1938 = vperm.xlu0 %1937, %v1932
        %v1939 = vpop.permute.xlu0 %1938
        %1942 = vset.pattern.permute.xlu0 0
        %1943 = vperm.xlu0 %1942, %v1933
        %v1944 = vpop.permute.xlu0 %1943
        %1947 = vset.pattern.permute.xlu0 0
        %1948 = vperm.xlu0 %1947, %v1934
        %v1949 = vpop.permute.xlu0 %1948
        %1952 = vset.pattern.permute.xlu0 0
        %1953 = vperm.xlu0 %1952, %v1935
        %v1954 = vpop.permute.xlu0 %1953
        %v1956 = vadd.f32 %v1927, %v1939
        %v1957 = vadd.f32 %v1928, %v1944
        %v1958 = vadd.f32 %v1929, %v1949
        %v1959 = vadd.f32 %v1930, %v1954
        %vm1960 = vcmp.ge.f32.partialorder %v1956, 0.0
        %vm1961 = vcmp.ge.f32.partialorder %v1957, 0.0
        %vm1962 = vcmp.ge.f32.partialorder %v1958, 0.0
        %vm1963 = vcmp.ge.f32.partialorder %v1959, 0.0
        %v1964 = vstv %s1563
        %v1965 = vmul.f32 %v1964, %v1956
        %v1966 = vmul.f32 %v1964, %v1957
        %v1967 = vmul.f32 %v1964, %v1958
        %v1968 = vmul.f32 %v1964, %v1959
        %v1969 = vsel %vm1960, %v1956, %v1965
        %v1970 = vsel %vm1961, %v1957, %v1966
        %v1971 = vsel %vm1962, %v1958, %v1967
        %v1972 = vsel %vm1963, %v1959, %v1968
        %s1973 = scalar_lea.vmem %s13, 32
        %v1974 = vld [vmem:[%s1973] sm:$0xff]
        %v1975 = vld [vmem:[%s1973 + $0x8] sm:$0xff]
        %v1976 = vld [vmem:[%s1973 + $0x10] sm:$0xff]
        %v1977 = vld [vmem:[%s1973 + $0x18] sm:$0xff]
        %s1978 = scalar_lea.vmem %s14, 32
        %v1979 = vld [vmem:[%s1978] sm:$0xff]
        %v1980 = vld [vmem:[%s1978 + $0x8] sm:$0xff]
        %v1981 = vld [vmem:[%s1978 + $0x10] sm:$0xff]
        %v1982 = vld [vmem:[%s1978 + $0x18] sm:$0xff]
        %v1983 = vadd.f32 %v1969, %v1970
        %v1984 = vadd.f32 %v1983, %v1971
        %v1985 = vadd.f32 %v1984, %v1972
        %1986 = vadd.xlane.f32.xlu0 %v1985
        %v1987 = vpop.xlane.xlu0 %1986
        %v1988 = vrot.slane %v1987, 4
        %v1989 = vadd.f32 %v1987, %v1988
        %v1990 = vrot.slane %v1989, 2
        %v1991 = vadd.f32 %v1989, %v1990
        %v1992 = vrot.slane %v1991, 1
        %v1993 = vadd.f32 %v1991, %v1992
        %s1994 = vtos %v1993
        %v1995 = vrcp.pop 4096.0
        %s1996 = vtos %v1995
        %s1997 = smul.f32 %s1994, %s1996
        %v1998 = vstv %s1997
        %v1999 = vsub.f32 %v1969, %v1998
        %v2000 = vsub.f32 %v1970, %v1998
        %v2001 = vsub.f32 %v1971, %v1998
        %v2002 = vsub.f32 %v1972, %v1998
        %v2003 = vmul.f32 %v1999, %v1999
        %v2004 = vmul.f32 %v2000, %v2000
        %v2005 = vmul.f32 %v2001, %v2001
        %v2006 = vmul.f32 %v2002, %v2002
        %v2007 = vadd.f32 %v2003, %v2004
        %v2008 = vadd.f32 %v2007, %v2005
        %v2009 = vadd.f32 %v2008, %v2006
        %2010 = vadd.xlane.f32.xlu0 %v2009
        %v2011 = vpop.xlane.xlu0 %2010
        %v2012 = vrot.slane %v2011, 4
        %v2013 = vadd.f32 %v2011, %v2012
        %v2014 = vrot.slane %v2013, 2
        %v2015 = vadd.f32 %v2013, %v2014
        %v2016 = vrot.slane %v2015, 1
        %v2017 = vadd.f32 %v2015, %v2016
        %s2018 = vtos %v2017
        %v2019 = vrcp.pop 4096.0
        %s2020 = vtos %v2019
        %s2021 = smul.f32 %s2018, %s2020
        %s2022 = sadd.f32 %s2021, 1e-08
        %v2023 = vstv %s2022
        %v2024 = vrsqrt.pop %v2023
        %s2025 = vtos %v2024
        %v2026 = vstv %s2025
        %v2027 = vmul.f32 %v1999, %v2026
        %v2028 = vmul.f32 %v2000, %v2026
        %v2029 = vmul.f32 %v2001, %v2026
        %v2030 = vmul.f32 %v2002, %v2026
        %2032 = vset.pattern.permute.xlu0 0
        %2033 = vperm.xlu0 %2032, %v1974
        %v2034 = vpop.permute.xlu0 %2033
        %2037 = vset.pattern.permute.xlu0 0
        %2038 = vperm.xlu0 %2037, %v1975
        %v2039 = vpop.permute.xlu0 %2038
        %2042 = vset.pattern.permute.xlu0 0
        %2043 = vperm.xlu0 %2042, %v1976
        %v2044 = vpop.permute.xlu0 %2043
        %2047 = vset.pattern.permute.xlu0 0
        %2048 = vperm.xlu0 %2047, %v1977
        %v2049 = vpop.permute.xlu0 %2048
        %v2051 = vmul.f32 %v2027, %v2034
        %v2052 = vmul.f32 %v2028, %v2039
        %v2053 = vmul.f32 %v2029, %v2044
        %v2054 = vmul.f32 %v2030, %v2049
        %2056 = vset.pattern.permute.xlu0 0
        %2057 = vperm.xlu0 %2056, %v1979
        %v2058 = vpop.permute.xlu0 %2057
        %2061 = vset.pattern.permute.xlu0 0
        %2062 = vperm.xlu0 %2061, %v1980
        %v2063 = vpop.permute.xlu0 %2062
        %2066 = vset.pattern.permute.xlu0 0
        %2067 = vperm.xlu0 %2066, %v1981
        %v2068 = vpop.permute.xlu0 %2067
        %2071 = vset.pattern.permute.xlu0 0
        %2072 = vperm.xlu0 %2071, %v1982
        %v2073 = vpop.permute.xlu0 %2072
        %v2075 = vadd.f32 %v2051, %v2058
        %v2076 = vadd.f32 %v2052, %v2063
        %v2077 = vadd.f32 %v2053, %v2068
        %v2078 = vadd.f32 %v2054, %v2073
        %s2079 = scalar_lea.vmem %s15, 16
        %v2080 = vld [vmem:[%s2079] sm:$0xff]
        %v2081 = vld [vmem:[%s2079 + $0x8] sm:$0xff]
        %s2082 = scalar_lea.vmem %s16, 16
        %v2083 = vld [vmem:[%s2082] sm:$0xff]
        %v2084 = vld [vmem:[%s2082 + $0x8] sm:$0xff]
        %2086 = vset.pattern.permute.xlu0 0
        %2087 = vperm.xlu0 %2086, %v2083
        %v2088 = vpop.permute.xlu0 %2087
        %2091 = vset.pattern.permute.xlu0 0
        %2092 = vperm.xlu0 %2091, %v2084
        %v2093 = vpop.permute.xlu0 %2092
        %v2096 = vsel %vm1480, %v2080, 0
        %v2099 = vsel %vm1480, %v2081, 0
        %2101 = vmatprep.subr.mxu0 0.0
        %2102 = vmatpush1.msra.mxu0 %v2075
        %2103 = vmatprep.subr.mxu0 0.0
        %2104 = vmatpush1.msra.mxu0 %v2076
        %2105 = vmatprep.subr.mxu0 0.0
        %2106 = vmatpush1.msra.mxu0 %v2077
        %2107 = vmatprep.subr.mxu0 0.0
        %2108 = vmatpush1.msra.mxu0 %v2078
        %2109 = vmatprep.subr.mxu0 0.0
        %2110 = vmatpush1.msra.mxu0 0.0
        %2111 = vmatprep.subr.mxu0 0.0
        %2112 = vmatpush1.msra.mxu0 0.0
        %2113 = vmatprep.subr.mxu0 0.0
        %2114 = vmatpush1.msra.mxu0 0.0
        %2115 = vmatprep.subr.mxu0 0.0
        %2116 = vmatpush1.msra.mxu0 0.0
        %2117 = vmatprep.subr.mxu0 0.0
        %2118 = vmatpush1.msra.mxu0 0.0
        %2119 = vmatprep.subr.mxu0 0.0
        %2120 = vmatpush1.msra.mxu0 0.0
        %2121 = vmatprep.subr.mxu0 0.0
        %2122 = vmatpush1.msra.mxu0 0.0
        %2123 = vmatprep.subr.mxu0 0.0
        %2124 = vmatpush1.msra.mxu0 0.0
        %2125 = vmatprep.subr.mxu0 0.0
        %2126 = vmatpush1.msra.mxu0 0.0
        %2127 = vmatprep.subr.mxu0 0.0
        %2128 = vmatpush1.msra.mxu0 0.0
        %2129 = vmatprep.subr.mxu0 0.0
        %2130 = vmatpush1.msra.mxu0 0.0
        %2131 = vmatprep.subr.mxu0 0.0
        %2132 = vmatpush1.msra.mxu0 0.0
        %2133 = vmatprep.subr.mxu0 0.0
        %2134 = vmatpush1.msra.mxu0 0.0
        %2135 = vmatprep.subr.mxu0 0.0
        %2136 = vmatpush1.msra.mxu0 0.0
        %2137 = vmatprep.subr.mxu0 0.0
        %2138 = vmatpush1.msra.mxu0 0.0
        %2139 = vmatprep.subr.mxu0 0.0
        %2140 = vmatpush1.msra.mxu0 0.0
        %2141 = vmatprep.subr.mxu0 0.0
        %2142 = vmatpush1.msra.mxu0 0.0
        %2143 = vmatprep.subr.mxu0 0.0
        %2144 = vmatpush1.msra.mxu0 0.0
        %2145 = vmatprep.subr.mxu0 0.0
        %2146 = vmatpush1.msra.mxu0 0.0
        %2147 = vmatprep.subr.mxu0 0.0
        %2148 = vmatpush1.msra.mxu0 0.0
        %2149 = vmatprep.subr.mxu0 0.0
        %2150 = vmatpush1.msra.mxu0 0.0
        %2151 = vmatprep.subr.mxu0 0.0
        %2152 = vmatpush1.msra.mxu0 0.0
        %2153 = vmatprep.subr.mxu0 0.0
        %2154 = vmatpush1.msra.mxu0 0.0
        %2155 = vmatprep.subr.mxu0 0.0
        %2156 = vmatpush1.msra.mxu0 0.0
        %2157 = vmatprep.subr.mxu0 0.0
        %2158 = vmatpush1.msra.mxu0 0.0
        %2159 = vmatprep.subr.mxu0 0.0
        %2160 = vmatpush1.msra.mxu0 0.0
        %2161 = vmatprep.subr.mxu0 0.0
        %2162 = vmatpush1.msra.mxu0 0.0
        %2163 = vmatprep.subr.mxu0 0.0
        %2164 = vmatpush1.msra.mxu0 0.0
        %2165 = vmatprep.mubr.f32.mxu0 0.0
        %2166 = vmatmul.mubr.f32.gmra.mrb[0].mxu0 %v2096
        %v2167 = vpop.f32.mrb[0].mxu0
        %v2168 = vadd.f32 %v2088, %v2167
        %v2169 = vpop.f32.mrb[0].mxu0
        %2170 = vmatprep.mubr.f32.mxu0 0.0
        %2171 = vmatmul.mubr.f32.gmra.mrb[0].mxu0 %v2099
        %v2172 = vpop.f32.mrb[0].mxu0
        %v2173 = vadd.f32 %v2093, %v2172
        %v2174 = vpop.f32.mrb[0].mxu0
        %2175 = vdwg.mxu0
        %v2176 = vadd.f32 %v1554, %v2168
        %v2177 = vadd.f32 %v1559, %v2173
        %s2178 = sld [smem:[#allocation2 + $0x4]]
        %s2179 = sld [smem:[#allocation2 + $0x5]]
        %s2180 = scalar_lea.vmem %s6, 64
        %v2181 = vld [vmem:[%s2180] sm:$0xff]
        %v2182 = vld [vmem:[%s2180 + $0x8] sm:$0xff]
        %v2183 = vld [vmem:[%s2180 + $0x10] sm:$0xff]
        %v2184 = vld [vmem:[%s2180 + $0x18] sm:$0xff]
        %s2185 = scalar_lea.vmem %s8, 64
        %v2186 = vld [vmem:[%s2185] sm:$0xff]
        %v2187 = vld [vmem:[%s2185 + $0x8] sm:$0xff]
        %v2188 = vld [vmem:[%s2185 + $0x10] sm:$0xff]
        %v2189 = vld [vmem:[%s2185 + $0x18] sm:$0xff]
        %2191 = vset.pattern.permute.xlu0 0
        %2192 = vperm.xlu0 %2191, %v2186
        %v2193 = vpop.permute.xlu0 %2192
        %2196 = vset.pattern.permute.xlu0 0
        %2197 = vperm.xlu0 %2196, %v2187
        %v2198 = vpop.permute.xlu0 %2197
        %2201 = vset.pattern.permute.xlu0 0
        %2202 = vperm.xlu0 %2201, %v2188
        %v2203 = vpop.permute.xlu0 %2202
        %2206 = vset.pattern.permute.xlu0 0
        %2207 = vperm.xlu0 %2206, %v2189
        %v2208 = vpop.permute.xlu0 %2207
        %v2211 = vsel %vm734, %v2181, 0
        %v2214 = vsel %vm734, %v2182, 0
        %v2217 = vsel %vm734, %v2183, 0
        %v2220 = vsel %vm734, %v2184, 0
        %2222 = vmatprep.subr.mxu0 0.0
        %2223 = vmatpush1.msra.mxu0 %v2176
        %2224 = vmatprep.subr.mxu0 0.0
        %2225 = vmatpush1.msra.mxu0 %v2177
        %2226 = vmatprep.subr.mxu0 0.0
        %2227 = vmatpush1.msra.mxu0 0.0
        %2228 = vmatprep.subr.mxu0 0.0
        %2229 = vmatpush1.msra.mxu0 0.0
        %2230 = vmatprep.subr.mxu0 0.0
        %2231 = vmatpush1.msra.mxu0 0.0
        %2232 = vmatprep.subr.mxu0 0.0
        %2233 = vmatpush1.msra.mxu0 0.0
        %2234 = vmatprep.subr.mxu0 0.0
        %2235 = vmatpush1.msra.mxu0 0.0
        %2236 = vmatprep.subr.mxu0 0.0
        %2237 = vmatpush1.msra.mxu0 0.0
        %2238 = vmatprep.subr.mxu0 0.0
        %2239 = vmatpush1.msra.mxu0 0.0
        %2240 = vmatprep.subr.mxu0 0.0
        %2241 = vmatpush1.msra.mxu0 0.0
        %2242 = vmatprep.subr.mxu0 0.0
        %2243 = vmatpush1.msra.mxu0 0.0
        %2244 = vmatprep.subr.mxu0 0.0
        %2245 = vmatpush1.msra.mxu0 0.0
        %2246 = vmatprep.subr.mxu0 0.0
        %2247 = vmatpush1.msra.mxu0 0.0
        %2248 = vmatprep.subr.mxu0 0.0
        %2249 = vmatpush1.msra.mxu0 0.0
        %2250 = vmatprep.subr.mxu0 0.0
        %2251 = vmatpush1.msra.mxu0 0.0
        %2252 = vmatprep.subr.mxu0 0.0
        %2253 = vmatpush1.msra.mxu0 0.0
        %2254 = vmatprep.subr.mxu0 0.0
        %2255 = vmatpush1.msra.mxu0 0.0
        %2256 = vmatprep.subr.mxu0 0.0
        %2257 = vmatpush1.msra.mxu0 0.0
        %2258 = vmatprep.subr.mxu0 0.0
        %2259 = vmatpush1.msra.mxu0 0.0
        %2260 = vmatprep.subr.mxu0 0.0
        %2261 = vmatpush1.msra.mxu0 0.0
        %2262 = vmatprep.subr.mxu0 0.0
        %2263 = vmatpush1.msra.mxu0 0.0
        %2264 = vmatprep.subr.mxu0 0.0
        %2265 = vmatpush1.msra.mxu0 0.0
        %2266 = vmatprep.subr.mxu0 0.0
        %2267 = vmatpush1.msra.mxu0 0.0
        %2268 = vmatprep.subr.mxu0 0.0
        %2269 = vmatpush1.msra.mxu0 0.0
        %2270 = vmatprep.subr.mxu0 0.0
        %2271 = vmatpush1.msra.mxu0 0.0
        %2272 = vmatprep.subr.mxu0 0.0
        %2273 = vmatpush1.msra.mxu0 0.0
        %2274 = vmatprep.subr.mxu0 0.0
        %2275 = vmatpush1.msra.mxu0 0.0
        %2276 = vmatprep.subr.mxu0 0.0
        %2277 = vmatpush1.msra.mxu0 0.0
        %2278 = vmatprep.subr.mxu0 0.0
        %2279 = vmatpush1.msra.mxu0 0.0
        %2280 = vmatprep.subr.mxu0 0.0
        %2281 = vmatpush1.msra.mxu0 0.0
        %2282 = vmatprep.subr.mxu0 0.0
        %2283 = vmatpush1.msra.mxu0 0.0
        %2284 = vmatprep.subr.mxu0 0.0
        %2285 = vmatpush1.msra.mxu0 0.0
        %2286 = vmatprep.mubr.f32.mxu0 0.0
        %2287 = vmatmul.mubr.f32.gmra.mrb[0].mxu0 %v2211
        %v2288 = vpop.f32.mrb[0].mxu0
        %v2289 = vadd.f32 %v2193, %v2288
        %v2290 = vpop.f32.mrb[0].mxu0
        %2291 = vmatprep.mubr.f32.mxu0 0.0
        %2292 = vmatmul.mubr.f32.gmra.mrb[0].mxu0 %v2214
        %v2293 = vpop.f32.mrb[0].mxu0
        %v2294 = vadd.f32 %v2198, %v2293
        %v2295 = vpop.f32.mrb[0].mxu0
        %2296 = vmatprep.mubr.f32.mxu0 0.0
        %2297 = vmatmul.mubr.f32.gmra.mrb[0].mxu0 %v2217
        %v2298 = vpop.f32.mrb[0].mxu0
        %v2299 = vadd.f32 %v2203, %v2298
        %v2300 = vpop.f32.mrb[0].mxu0
        %2301 = vmatprep.mubr.f32.mxu0 0.0
        %2302 = vmatmul.mubr.f32.gmra.mrb[0].mxu0 %v2220
        %v2303 = vpop.f32.mrb[0].mxu0
        %v2304 = vadd.f32 %v2208, %v2303
        %v2305 = vpop.f32.mrb[0].mxu0
        %2306 = vdwg.mxu0
        %vm2307 = vcmp.ge.f32.partialorder %v2289, 0.0
        %vm2308 = vcmp.ge.f32.partialorder %v2294, 0.0
        %vm2309 = vcmp.ge.f32.partialorder %v2299, 0.0
        %vm2310 = vcmp.ge.f32.partialorder %v2304, 0.0
        %v2311 = vstv %s2178
        %v2312 = vmul.f32 %v2311, %v2289
        %v2313 = vmul.f32 %v2311, %v2294
        %v2314 = vmul.f32 %v2311, %v2299
        %v2315 = vmul.f32 %v2311, %v2304
        %v2316 = vsel %vm2307, %v2289, %v2312
        %v2317 = vsel %vm2308, %v2294, %v2313
        %v2318 = vsel %vm2309, %v2299, %v2314
        %v2319 = vsel %vm2310, %v2304, %v2315
        %s2320 = scalar_lea.vmem %s9, 64
        %v2321 = vld [vmem:[%s2320] sm:$0xff]
        %v2322 = vld [vmem:[%s2320 + $0x8] sm:$0xff]
        %v2323 = vld [vmem:[%s2320 + $0x10] sm:$0xff]
        %v2324 = vld [vmem:[%s2320 + $0x18] sm:$0xff]
        %s2325 = scalar_lea.vmem %s10, 64
        %v2326 = vld [vmem:[%s2325] sm:$0xff]
        %v2327 = vld [vmem:[%s2325 + $0x8] sm:$0xff]
        %v2328 = vld [vmem:[%s2325 + $0x10] sm:$0xff]
        %v2329 = vld [vmem:[%s2325 + $0x18] sm:$0xff]
        %v2330 = vadd.f32 %v2316, %v2317
        %v2331 = vadd.f32 %v2330, %v2318
        %v2332 = vadd.f32 %v2331, %v2319
        %2333 = vadd.xlane.f32.xlu0 %v2332
        %v2334 = vpop.xlane.xlu0 %2333
        %v2335 = vrot.slane %v2334, 4
        %v2336 = vadd.f32 %v2334, %v2335
        %v2337 = vrot.slane %v2336, 2
        %v2338 = vadd.f32 %v2336, %v2337
        %v2339 = vrot.slane %v2338, 1
        %v2340 = vadd.f32 %v2338, %v2339
        %s2341 = vtos %v2340
        %v2342 = vrcp.pop 4096.0
        %s2343 = vtos %v2342
        %s2344 = smul.f32 %s2341, %s2343
        %v2345 = vstv %s2344
        %v2346 = vsub.f32 %v2316, %v2345
        %v2347 = vsub.f32 %v2317, %v2345
        %v2348 = vsub.f32 %v2318, %v2345
        %v2349 = vsub.f32 %v2319, %v2345
        %v2350 = vmul.f32 %v2346, %v2346
        %v2351 = vmul.f32 %v2347, %v2347
        %v2352 = vmul.f32 %v2348, %v2348
        %v2353 = vmul.f32 %v2349, %v2349
        %v2354 = vadd.f32 %v2350, %v2351
        %v2355 = vadd.f32 %v2354, %v2352
        %v2356 = vadd.f32 %v2355, %v2353
        %2357 = vadd.xlane.f32.xlu0 %v2356
        %v2358 = vpop.xlane.xlu0 %2357
        %v2359 = vrot.slane %v2358, 4
        %v2360 = vadd.f32 %v2358, %v2359
        %v2361 = vrot.slane %v2360, 2
        %v2362 = vadd.f32 %v2360, %v2361
        %v2363 = vrot.slane %v2362, 1
        %v2364 = vadd.f32 %v2362, %v2363
        %s2365 = vtos %v2364
        %v2366 = vrcp.pop 4096.0
        %s2367 = vtos %v2366
        %s2368 = smul.f32 %s2365, %s2367
        %s2369 = sadd.f32 %s2368, 1e-08
        %v2370 = vstv %s2369
        %v2371 = vrsqrt.pop %v2370
        %s2372 = vtos %v2371
        %v2373 = vstv %s2372
        %v2374 = vmul.f32 %v2346, %v2373
        %v2375 = vmul.f32 %v2347, %v2373
        %v2376 = vmul.f32 %v2348, %v2373
        %v2377 = vmul.f32 %v2349, %v2373
        %2379 = vset.pattern.permute.xlu0 0
        %2380 = vperm.xlu0 %2379, %v2321
        %v2381 = vpop.permute.xlu0 %2380
        %2384 = vset.pattern.permute.xlu0 0
        %2385 = vperm.xlu0 %2384, %v2322
        %v2386 = vpop.permute.xlu0 %2385
        %2389 = vset.pattern.permute.xlu0 0
        %2390 = vperm.xlu0 %2389, %v2323
        %v2391 = vpop.permute.xlu0 %2390
        %2394 = vset.pattern.permute.xlu0 0
        %2395 = vperm.xlu0 %2394, %v2324
        %v2396 = vpop.permute.xlu0 %2395
        %v2398 = vmul.f32 %v2374, %v2381
        %v2399 = vmul.f32 %v2375, %v2386
        %v2400 = vmul.f32 %v2376, %v2391
        %v2401 = vmul.f32 %v2377, %v2396
        %2403 = vset.pattern.permute.xlu0 0
        %2404 = vperm.xlu0 %2403, %v2326
        %v2405 = vpop.permute.xlu0 %2404
        %2408 = vset.pattern.permute.xlu0 0
        %2409 = vperm.xlu0 %2408, %v2327
        %v2410 = vpop.permute.xlu0 %2409
        %2413 = vset.pattern.permute.xlu0 0
        %2414 = vperm.xlu0 %2413, %v2328
        %v2415 = vpop.permute.xlu0 %2414
        %2418 = vset.pattern.permute.xlu0 0
        %2419 = vperm.xlu0 %2418, %v2329
        %v2420 = vpop.permute.xlu0 %2419
        %v2422 = vadd.f32 %v2398, %v2405
        %v2423 = vadd.f32 %v2399, %v2410
        %v2424 = vadd.f32 %v2400, %v2415
        %v2425 = vadd.f32 %v2401, %v2420
        %2426 = vrot.lane.b32.xlu0 %v2422, 4
        %v2427 = vpop.permute.xlu0 %2426
        %2428 = vrot.lane.b32.xlu0 %v2423, 4
        %v2429 = vpop.permute.xlu0 %2428
        %2430 = vrot.lane.b32.xlu0 %v2424, 4
        %v2431 = vpop.permute.xlu0 %2430
        %2432 = vrot.lane.b32.xlu0 %v2425, 4
        %v2433 = vpop.permute.xlu0 %2432
        %vm2434 = vcmp.ge.s32.totalorder %v817, 4
        %v2435 = vsel %vm2434, %v2427, 0.0
        %v2436 = vsel %vm2434, %v2429, 0.0
        %v2437 = vsel %vm2434, %v2431, 0.0
        %v2438 = vsel %vm2434, %v2433, 0.0
        %2439 = vrot.lane.b32.xlu0 %v2422, 124
        %v2440 = vpop.permute.xlu0 %2439
        %2441 = vrot.lane.b32.xlu0 %v2423, 124
        %v2442 = vpop.permute.xlu0 %2441
        %2443 = vrot.lane.b32.xlu0 %v2424, 124
        %v2444 = vpop.permute.xlu0 %2443
        %2445 = vrot.lane.b32.xlu0 %v2425, 124
        %v2446 = vpop.permute.xlu0 %2445
        %vm2447 = vcmp.lt.s32.totalorder %v817, 124
        %v2448 = vsel %vm2447, %v2440, 0.0
        %v2449 = vsel %vm2447, %v2442, 0.0
        %v2450 = vsel %vm2447, %v2444, 0.0
        %v2451 = vsel %vm2447, %v2446, 0.0
        %s2452 = scalar_lea.vmem %s11, 192
        %v2453 = vld [vmem:[%s2452] sm:$0xff]
        %v2454 = vld [vmem:[%s2452 + $0x8] sm:$0xff]
        %v2455 = vld [vmem:[%s2452 + $0x10] sm:$0xff]
        %v2456 = vld [vmem:[%s2452 + $0x18] sm:$0xff]
        %2458 = vset.pattern.permute.xlu0 0
        %2459 = vperm.xlu0 %2458, %v2453
        %v2460 = vpop.permute.xlu0 %2459
        %2463 = vset.pattern.permute.xlu0 0
        %2464 = vperm.xlu0 %2463, %v2454
        %v2465 = vpop.permute.xlu0 %2464
        %2468 = vset.pattern.permute.xlu0 0
        %2469 = vperm.xlu0 %2468, %v2455
        %v2470 = vpop.permute.xlu0 %2469
        %2473 = vset.pattern.permute.xlu0 0
        %2474 = vperm.xlu0 %2473, %v2456
        %v2475 = vpop.permute.xlu0 %2474
        %v2477 = vmul.f32 %v2460, %v2435
        %v2478 = vmul.f32 %v2465, %v2436
        %v2479 = vmul.f32 %v2470, %v2437
        %v2480 = vmul.f32 %v2475, %v2438
        %s2481 = scalar_lea.vmem %s11, 224
        %v2482 = vld [vmem:[%s2481] sm:$0xff]
        %v2483 = vld [vmem:[%s2481 + $0x8] sm:$0xff]
        %v2484 = vld [vmem:[%s2481 + $0x10] sm:$0xff]
        %v2485 = vld [vmem:[%s2481 + $0x18] sm:$0xff]
        %2487 = vset.pattern.permute.xlu0 0
        %2488 = vperm.xlu0 %2487, %v2482
        %v2489 = vpop.permute.xlu0 %2488
        %2492 = vset.pattern.permute.xlu0 0
        %2493 = vperm.xlu0 %2492, %v2483
        %v2494 = vpop.permute.xlu0 %2493
        %2497 = vset.pattern.permute.xlu0 0
        %2498 = vperm.xlu0 %2497, %v2484
        %v2499 = vpop.permute.xlu0 %2498
        %2502 = vset.pattern.permute.xlu0 0
        %2503 = vperm.xlu0 %2502, %v2485
        %v2504 = vpop.permute.xlu0 %2503
        %v2506 = vmul.f32 %v2489, %v2422
        %v2507 = vmul.f32 %v2494, %v2423
        %v2508 = vmul.f32 %v2499, %v2424
        %v2509 = vmul.f32 %v2504, %v2425
        %v2510 = vadd.f32 %v2477, %v2506
        %v2511 = vadd.f32 %v2478, %v2507
        %v2512 = vadd.f32 %v2479, %v2508
        %v2513 = vadd.f32 %v2480, %v2509
        %s2514 = scalar_lea.vmem %s11, 256
        %v2515 = vld [vmem:[%s2514] sm:$0xff]
        %v2516 = vld [vmem:[%s2514 + $0x8] sm:$0xff]
        %v2517 = vld [vmem:[%s2514 + $0x10] sm:$0xff]
        %v2518 = vld [vmem:[%s2514 + $0x18] sm:$0xff]
        %2520 = vset.pattern.permute.xlu0 0
        %2521 = vperm.xlu0 %2520, %v2515
        %v2522 = vpop.permute.xlu0 %2521
        %2525 = vset.pattern.permute.xlu0 0
        %2526 = vperm.xlu0 %2525, %v2516
        %v2527 = vpop.permute.xlu0 %2526
        %2530 = vset.pattern.permute.xlu0 0
        %2531 = vperm.xlu0 %2530, %v2517
        %v2532 = vpop.permute.xlu0 %2531
        %2535 = vset.pattern.permute.xlu0 0
        %2536 = vperm.xlu0 %2535, %v2518
        %v2537 = vpop.permute.xlu0 %2536
        %v2539 = vmul.f32 %v2522, %v2448
        %v2540 = vmul.f32 %v2527, %v2449
        %v2541 = vmul.f32 %v2532, %v2450
        %v2542 = vmul.f32 %v2537, %v2451
        %v2543 = vadd.f32 %v2510, %v2539
        %v2544 = vadd.f32 %v2511, %v2540
        %v2545 = vadd.f32 %v2512, %v2541
        %v2546 = vadd.f32 %v2513, %v2542
        %s2547 = scalar_lea.vmem %s12, 64
        %v2548 = vld [vmem:[%s2547] sm:$0xff]
        %v2549 = vld [vmem:[%s2547 + $0x8] sm:$0xff]
        %v2550 = vld [vmem:[%s2547 + $0x10] sm:$0xff]
        %v2551 = vld [vmem:[%s2547 + $0x18] sm:$0xff]
        %2553 = vset.pattern.permute.xlu0 0
        %2554 = vperm.xlu0 %2553, %v2548
        %v2555 = vpop.permute.xlu0 %2554
        %2558 = vset.pattern.permute.xlu0 0
        %2559 = vperm.xlu0 %2558, %v2549
        %v2560 = vpop.permute.xlu0 %2559
        %2563 = vset.pattern.permute.xlu0 0
        %2564 = vperm.xlu0 %2563, %v2550
        %v2565 = vpop.permute.xlu0 %2564
        %2568 = vset.pattern.permute.xlu0 0
        %2569 = vperm.xlu0 %2568, %v2551
        %v2570 = vpop.permute.xlu0 %2569
        %v2572 = vadd.f32 %v2543, %v2555
        %v2573 = vadd.f32 %v2544, %v2560
        %v2574 = vadd.f32 %v2545, %v2565
        %v2575 = vadd.f32 %v2546, %v2570
        %vm2576 = vcmp.ge.f32.partialorder %v2572, 0.0
        %vm2577 = vcmp.ge.f32.partialorder %v2573, 0.0
        %vm2578 = vcmp.ge.f32.partialorder %v2574, 0.0
        %vm2579 = vcmp.ge.f32.partialorder %v2575, 0.0
        %v2580 = vstv %s2179
        %v2581 = vmul.f32 %v2580, %v2572
        %v2582 = vmul.f32 %v2580, %v2573
        %v2583 = vmul.f32 %v2580, %v2574
        %v2584 = vmul.f32 %v2580, %v2575
        %v2585 = vsel %vm2576, %v2572, %v2581
        %v2586 = vsel %vm2577, %v2573, %v2582
        %v2587 = vsel %vm2578, %v2574, %v2583
        %v2588 = vsel %vm2579, %v2575, %v2584
        %s2589 = scalar_lea.vmem %s13, 64
        %v2590 = vld [vmem:[%s2589] sm:$0xff]
        %v2591 = vld [vmem:[%s2589 + $0x8] sm:$0xff]
        %v2592 = vld [vmem:[%s2589 + $0x10] sm:$0xff]
        %v2593 = vld [vmem:[%s2589 + $0x18] sm:$0xff]
        %s2594 = scalar_lea.vmem %s14, 64
        %v2595 = vld [vmem:[%s2594] sm:$0xff]
        %v2596 = vld [vmem:[%s2594 + $0x8] sm:$0xff]
        %v2597 = vld [vmem:[%s2594 + $0x10] sm:$0xff]
        %v2598 = vld [vmem:[%s2594 + $0x18] sm:$0xff]
        %v2599 = vadd.f32 %v2585, %v2586
        %v2600 = vadd.f32 %v2599, %v2587
        %v2601 = vadd.f32 %v2600, %v2588
        %2602 = vadd.xlane.f32.xlu0 %v2601
        %v2603 = vpop.xlane.xlu0 %2602
        %v2604 = vrot.slane %v2603, 4
        %v2605 = vadd.f32 %v2603, %v2604
        %v2606 = vrot.slane %v2605, 2
        %v2607 = vadd.f32 %v2605, %v2606
        %v2608 = vrot.slane %v2607, 1
        %v2609 = vadd.f32 %v2607, %v2608
        %s2610 = vtos %v2609
        %v2611 = vrcp.pop 4096.0
        %s2612 = vtos %v2611
        %s2613 = smul.f32 %s2610, %s2612
        %v2614 = vstv %s2613
        %v2615 = vsub.f32 %v2585, %v2614
        %v2616 = vsub.f32 %v2586, %v2614
        %v2617 = vsub.f32 %v2587, %v2614
        %v2618 = vsub.f32 %v2588, %v2614
        %v2619 = vmul.f32 %v2615, %v2615
        %v2620 = vmul.f32 %v2616, %v2616
        %v2621 = vmul.f32 %v2617, %v2617
        %v2622 = vmul.f32 %v2618, %v2618
        %v2623 = vadd.f32 %v2619, %v2620
        %v2624 = vadd.f32 %v2623, %v2621
        %v2625 = vadd.f32 %v2624, %v2622
        %2626 = vadd.xlane.f32.xlu0 %v2625
        %v2627 = vpop.xlane.xlu0 %2626
        %v2628 = vrot.slane %v2627, 4
        %v2629 = vadd.f32 %v2627, %v2628
        %v2630 = vrot.slane %v2629, 2
        %v2631 = vadd.f32 %v2629, %v2630
        %v2632 = vrot.slane %v2631, 1
        %v2633 = vadd.f32 %v2631, %v2632
        %s2634 = vtos %v2633
        %v2635 = vrcp.pop 4096.0
        %s2636 = vtos %v2635
        %s2637 = smul.f32 %s2634, %s2636
        %s2638 = sadd.f32 %s2637, 1e-08
        %v2639 = vstv %s2638
        %v2640 = vrsqrt.pop %v2639
        %s2641 = vtos %v2640
        %v2642 = vstv %s2641
        %v2643 = vmul.f32 %v2615, %v2642
        %v2644 = vmul.f32 %v2616, %v2642
        %v2645 = vmul.f32 %v2617, %v2642
        %v2646 = vmul.f32 %v2618, %v2642
        %2648 = vset.pattern.permute.xlu0 0
        %2649 = vperm.xlu0 %2648, %v2590
        %v2650 = vpop.permute.xlu0 %2649
        %2653 = vset.pattern.permute.xlu0 0
        %2654 = vperm.xlu0 %2653, %v2591
        %v2655 = vpop.permute.xlu0 %2654
        %2658 = vset.pattern.permute.xlu0 0
        %2659 = vperm.xlu0 %2658, %v2592
        %v2660 = vpop.permute.xlu0 %2659
        %2663 = vset.pattern.permute.xlu0 0
        %2664 = vperm.xlu0 %2663, %v2593
        %v2665 = vpop.permute.xlu0 %2664
        %v2667 = vmul.f32 %v2643, %v2650
        %v2668 = vmul.f32 %v2644, %v2655
        %v2669 = vmul.f32 %v2645, %v2660
        %v2670 = vmul.f32 %v2646, %v2665
        %2672 = vset.pattern.permute.xlu0 0
        %2673 = vperm.xlu0 %2672, %v2595
        %v2674 = vpop.permute.xlu0 %2673
        %2677 = vset.pattern.permute.xlu0 0
        %2678 = vperm.xlu0 %2677, %v2596
        %v2679 = vpop.permute.xlu0 %2678
        %2682 = vset.pattern.permute.xlu0 0
        %2683 = vperm.xlu0 %2682, %v2597
        %v2684 = vpop.permute.xlu0 %2683
        %2687 = vset.pattern.permute.xlu0 0
        %2688 = vperm.xlu0 %2687, %v2598
        %v2689 = vpop.permute.xlu0 %2688
        %v2691 = vadd.f32 %v2667, %v2674
        %v2692 = vadd.f32 %v2668, %v2679
        %v2693 = vadd.f32 %v2669, %v2684
        %v2694 = vadd.f32 %v2670, %v2689
        %s2695 = scalar_lea.vmem %s15, 32
        %v2696 = vld [vmem:[%s2695] sm:$0xff]
        %v2697 = vld [vmem:[%s2695 + $0x8] sm:$0xff]
        %s2698 = scalar_lea.vmem %s16, 32
        %v2699 = vld [vmem:[%s2698] sm:$0xff]
        %v2700 = vld [vmem:[%s2698 + $0x8] sm:$0xff]
        %2702 = vset.pattern.permute.xlu0 0
        %2703 = vperm.xlu0 %2702, %v2699
        %v2704 = vpop.permute.xlu0 %2703
        %2707 = vset.pattern.permute.xlu0 0
        %2708 = vperm.xlu0 %2707, %v2700
        %v2709 = vpop.permute.xlu0 %2708
        %v2712 = vsel %vm1480, %v2696, 0
        %v2715 = vsel %vm1480, %v2697, 0
        %2717 = vmatprep.subr.mxu0 0.0
        %2718 = vmatpush1.msra.mxu0 %v2691
        %2719 = vmatprep.subr.mxu0 0.0
        %2720 = vmatpush1.msra.mxu0 %v2692
        %2721 = vmatprep.subr.mxu0 0.0
        %2722 = vmatpush1.msra.mxu0 %v2693
        %2723 = vmatprep.subr.mxu0 0.0
        %2724 = vmatpush1.msra.mxu0 %v2694
        %2725 = vmatprep.subr.mxu0 0.0
        %2726 = vmatpush1.msra.mxu0 0.0
        %2727 = vmatprep.subr.mxu0 0.0
        %2728 = vmatpush1.msra.mxu0 0.0
        %2729 = vmatprep.subr.mxu0 0.0
        %2730 = vmatpush1.msra.mxu0 0.0
        %2731 = vmatprep.subr.mxu0 0.0
        %2732 = vmatpush1.msra.mxu0 0.0
        %2733 = vmatprep.subr.mxu0 0.0
        %2734 = vmatpush1.msra.mxu0 0.0
        %2735 = vmatprep.subr.mxu0 0.0
        %2736 = vmatpush1.msra.mxu0 0.0
        %2737 = vmatprep.subr.mxu0 0.0
        %2738 = vmatpush1.msra.mxu0 0.0
        %2739 = vmatprep.subr.mxu0 0.0
        %2740 = vmatpush1.msra.mxu0 0.0
        %2741 = vmatprep.subr.mxu0 0.0
        %2742 = vmatpush1.msra.mxu0 0.0
        %2743 = vmatprep.subr.mxu0 0.0
        %2744 = vmatpush1.msra.mxu0 0.0
        %2745 = vmatprep.subr.mxu0 0.0
        %2746 = vmatpush1.msra.mxu0 0.0
        %2747 = vmatprep.subr.mxu0 0.0
        %2748 = vmatpush1.msra.mxu0 0.0
        %2749 = vmatprep.subr.mxu0 0.0
        %2750 = vmatpush1.msra.mxu0 0.0
        %2751 = vmatprep.subr.mxu0 0.0
        %2752 = vmatpush1.msra.mxu0 0.0
        %2753 = vmatprep.subr.mxu0 0.0
        %2754 = vmatpush1.msra.mxu0 0.0
        %2755 = vmatprep.subr.mxu0 0.0
        %2756 = vmatpush1.msra.mxu0 0.0
        %2757 = vmatprep.subr.mxu0 0.0
        %2758 = vmatpush1.msra.mxu0 0.0
        %2759 = vmatprep.subr.mxu0 0.0
        %2760 = vmatpush1.msra.mxu0 0.0
        %2761 = vmatprep.subr.mxu0 0.0
        %2762 = vmatpush1.msra.mxu0 0.0
        %2763 = vmatprep.subr.mxu0 0.0
        %2764 = vmatpush1.msra.mxu0 0.0
        %2765 = vmatprep.subr.mxu0 0.0
        %2766 = vmatpush1.msra.mxu0 0.0
        %2767 = vmatprep.subr.mxu0 0.0
        %2768 = vmatpush1.msra.mxu0 0.0
        %2769 = vmatprep.subr.mxu0 0.0
        %2770 = vmatpush1.msra.mxu0 0.0
        %2771 = vmatprep.subr.mxu0 0.0
        %2772 = vmatpush1.msra.mxu0 0.0
        %2773 = vmatprep.subr.mxu0 0.0
        %2774 = vmatpush1.msra.mxu0 0.0
        %2775 = vmatprep.subr.mxu0 0.0
        %2776 = vmatpush1.msra.mxu0 0.0
        %2777 = vmatprep.subr.mxu0 0.0
        %2778 = vmatpush1.msra.mxu0 0.0
        %2779 = vmatprep.subr.mxu0 0.0
        %2780 = vmatpush1.msra.mxu0 0.0
        %2781 = vmatprep.mubr.f32.mxu0 0.0
        %2782 = vmatmul.mubr.f32.gmra.mrb[0].mxu0 %v2712
        %v2783 = vpop.f32.mrb[0].mxu0
        %v2784 = vadd.f32 %v2704, %v2783
        %v2785 = vpop.f32.mrb[0].mxu0
        %2786 = vmatprep.mubr.f32.mxu0 0.0
        %2787 = vmatmul.mubr.f32.gmra.mrb[0].mxu0 %v2715
        %v2788 = vpop.f32.mrb[0].mxu0
        %v2789 = vadd.f32 %v2709, %v2788
        %v2790 = vpop.f32.mrb[0].mxu0
        %2791 = vdwg.mxu0
        %v2792 = vadd.f32 %v2176, %v2784
        %v2793 = vadd.f32 %v2177, %v2789
        %s2794 = scalar_lea.vmem %s677, 16 [#allocation6]
        %2795 = vst [vmem:[%s2794] sm:$0xff] %v2792
        %2796 = vst [vmem:[%s2794 + $0x8] sm:$0xff] %v2793
        %s2797 = sld [smem:[#allocation2 + $0x6]]
        %s2798 = sld [smem:[#allocation2 + $0x7]]
        %s2799 = scalar_lea.vmem %s6, 96
        %v2800 = vld [vmem:[%s2799] sm:$0xff]
        %v2801 = vld [vmem:[%s2799 + $0x8] sm:$0xff]
        %v2802 = vld [vmem:[%s2799 + $0x10] sm:$0xff]
        %v2803 = vld [vmem:[%s2799 + $0x18] sm:$0xff]
        %s2804 = scalar_lea.vmem %s8, 96
        %v2805 = vld [vmem:[%s2804] sm:$0xff]
        %v2806 = vld [vmem:[%s2804 + $0x8] sm:$0xff]
        %v2807 = vld [vmem:[%s2804 + $0x10] sm:$0xff]
        %v2808 = vld [vmem:[%s2804 + $0x18] sm:$0xff]
        %2810 = vset.pattern.permute.xlu0 0
        %2811 = vperm.xlu0 %2810, %v2805
        %v2812 = vpop.permute.xlu0 %2811
        %2815 = vset.pattern.permute.xlu0 0
        %2816 = vperm.xlu0 %2815, %v2806
        %v2817 = vpop.permute.xlu0 %2816
        %2820 = vset.pattern.permute.xlu0 0
        %2821 = vperm.xlu0 %2820, %v2807
        %v2822 = vpop.permute.xlu0 %2821
        %2825 = vset.pattern.permute.xlu0 0
        %2826 = vperm.xlu0 %2825, %v2808
        %v2827 = vpop.permute.xlu0 %2826
        %v2830 = vsel %vm734, %v2800, 0
        %v2833 = vsel %vm734, %v2801, 0
        %v2836 = vsel %vm734, %v2802, 0
        %v2839 = vsel %vm734, %v2803, 0
        %2841 = vmatprep.subr.mxu0 0.0
        %2842 = vmatpush1.msra.mxu0 %v2792
        %2843 = vmatprep.subr.mxu0 0.0
        %2844 = vmatpush1.msra.mxu0 %v2793
        %2845 = vmatprep.subr.mxu0 0.0
        %2846 = vmatpush1.msra.mxu0 0.0
        %2847 = vmatprep.subr.mxu0 0.0
        %2848 = vmatpush1.msra.mxu0 0.0
        %2849 = vmatprep.subr.mxu0 0.0
        %2850 = vmatpush1.msra.mxu0 0.0
        %2851 = vmatprep.subr.mxu0 0.0
        %2852 = vmatpush1.msra.mxu0 0.0
        %2853 = vmatprep.subr.mxu0 0.0
        %2854 = vmatpush1.msra.mxu0 0.0
        %2855 = vmatprep.subr.mxu0 0.0
        %2856 = vmatpush1.msra.mxu0 0.0
        %2857 = vmatprep.subr.mxu0 0.0
        %2858 = vmatpush1.msra.mxu0 0.0
        %2859 = vmatprep.subr.mxu0 0.0
        %2860 = vmatpush1.msra.mxu0 0.0
        %2861 = vmatprep.subr.mxu0 0.0
        %2862 = vmatpush1.msra.mxu0 0.0
        %2863 = vmatprep.subr.mxu0 0.0
        %2864 = vmatpush1.msra.mxu0 0.0
        %2865 = vmatprep.subr.mxu0 0.0
        %2866 = vmatpush1.msra.mxu0 0.0
        %2867 = vmatprep.subr.mxu0 0.0
        %2868 = vmatpush1.msra.mxu0 0.0
        %2869 = vmatprep.subr.mxu0 0.0
        %2870 = vmatpush1.msra.mxu0 0.0
        %2871 = vmatprep.subr.mxu0 0.0
        %2872 = vmatpush1.msra.mxu0 0.0
        %2873 = vmatprep.subr.mxu0 0.0
        %2874 = vmatpush1.msra.mxu0 0.0
        %2875 = vmatprep.subr.mxu0 0.0
        %2876 = vmatpush1.msra.mxu0 0.0
        %2877 = vmatprep.subr.mxu0 0.0
        %2878 = vmatpush1.msra.mxu0 0.0
        %2879 = vmatprep.subr.mxu0 0.0
        %2880 = vmatpush1.msra.mxu0 0.0
        %2881 = vmatprep.subr.mxu0 0.0
        %2882 = vmatpush1.msra.mxu0 0.0
        %2883 = vmatprep.subr.mxu0 0.0
        %2884 = vmatpush1.msra.mxu0 0.0
        %2885 = vmatprep.subr.mxu0 0.0
        %2886 = vmatpush1.msra.mxu0 0.0
        %2887 = vmatprep.subr.mxu0 0.0
        %2888 = vmatpush1.msra.mxu0 0.0
        %2889 = vmatprep.subr.mxu0 0.0
        %2890 = vmatpush1.msra.mxu0 0.0
        %2891 = vmatprep.subr.mxu0 0.0
        %2892 = vmatpush1.msra.mxu0 0.0
        %2893 = vmatprep.subr.mxu0 0.0
        %2894 = vmatpush1.msra.mxu0 0.0
        %2895 = vmatprep.subr.mxu0 0.0
        %2896 = vmatpush1.msra.mxu0 0.0
        %2897 = vmatprep.subr.mxu0 0.0
        %2898 = vmatpush1.msra.mxu0 0.0
        %2899 = vmatprep.subr.mxu0 0.0
        %2900 = vmatpush1.msra.mxu0 0.0
        %2901 = vmatprep.subr.mxu0 0.0
        %2902 = vmatpush1.msra.mxu0 0.0
        %2903 = vmatprep.subr.mxu0 0.0
        %2904 = vmatpush1.msra.mxu0 0.0
        %2905 = vmatprep.mubr.f32.mxu0 0.0
        %2906 = vmatmul.mubr.f32.gmra.mrb[0].mxu0 %v2830
        %v2907 = vpop.f32.mrb[0].mxu0
        %v2908 = vadd.f32 %v2812, %v2907
        %v2909 = vpop.f32.mrb[0].mxu0
        %2910 = vmatprep.mubr.f32.mxu0 0.0
        %2911 = vmatmul.mubr.f32.gmra.mrb[0].mxu0 %v2833
        %v2912 = vpop.f32.mrb[0].mxu0
        %v2913 = vadd.f32 %v2817, %v2912
        %v2914 = vpop.f32.mrb[0].mxu0
        %2915 = vmatprep.mubr.f32.mxu0 0.0
        %2916 = vmatmul.mubr.f32.gmra.mrb[0].mxu0 %v2836
        %v2917 = vpop.f32.mrb[0].mxu0
        %v2918 = vadd.f32 %v2822, %v2917
        %v2919 = vpop.f32.mrb[0].mxu0
        %2920 = vmatprep.mubr.f32.mxu0 0.0
        %2921 = vmatmul.mubr.f32.gmra.mrb[0].mxu0 %v2839
        %v2922 = vpop.f32.mrb[0].mxu0
        %v2923 = vadd.f32 %v2827, %v2922
        %v2924 = vpop.f32.mrb[0].mxu0
        %2925 = vdwg.mxu0
        %s2926 = scalar_lea.vmem %s7, 32
        %v2927 = vld [vmem:[%s2926] sm:$0xff]
        %v2928 = vld [vmem:[%s2926 + $0x8] sm:$0xff]
        %v2929 = vld [vmem:[%s2926 + $0x10] sm:$0xff]
        %v2930 = vld [vmem:[%s2926 + $0x18] sm:$0xff]
        %s2931 = scalar_lea.vmem %s687, 24
        %v2932 = vld [vmem:[%s2931] sm:$0xff]
        %v2933 = vld [vmem:[%s2931 + $0x8] sm:$0xff]
        %v2934 = vld [vmem:[%s2931 + $0x10] sm:$0xff]
        %v2936 = vsel %vm954, %v2927, 0
        %v2939 = vsel %vm954, %v2928, 0
        %v2942 = vsel %vm954, %v2929, 0
        %v2945 = vsel %vm954, %v2930, 0
        %2947 = vmatprep.subr.mxu0 0.0
        %2948 = vmatpush1.msra.mxu0 %v2932
        %2949 = vmatprep.subr.mxu0 0.0
        %2950 = vmatpush1.msra.mxu0 %v2933
        %2951 = vmatprep.subr.mxu0 0.0
        %2952 = vmatpush1.msra.mxu0 %v2934
        %2953 = vmatprep.subr.mxu0 0.0
        %2954 = vmatpush1.msra.mxu0 0.0
        %2955 = vmatprep.subr.mxu0 0.0
        %2956 = vmatpush1.msra.mxu0 0.0
        %2957 = vmatprep.subr.mxu0 0.0
        %2958 = vmatpush1.msra.mxu0 0.0
        %2959 = vmatprep.subr.mxu0 0.0
        %2960 = vmatpush1.msra.mxu0 0.0
        %2961 = vmatprep.subr.mxu0 0.0
        %2962 = vmatpush1.msra.mxu0 0.0
        %2963 = vmatprep.subr.mxu0 0.0
        %2964 = vmatpush1.msra.mxu0 0.0
        %2965 = vmatprep.subr.mxu0 0.0
        %2966 = vmatpush1.msra.mxu0 0.0
        %2967 = vmatprep.subr.mxu0 0.0
        %2968 = vmatpush1.msra.mxu0 0.0
        %2969 = vmatprep.subr.mxu0 0.0
        %2970 = vmatpush1.msra.mxu0 0.0
        %2971 = vmatprep.subr.mxu0 0.0
        %2972 = vmatpush1.msra.mxu0 0.0
        %2973 = vmatprep.subr.mxu0 0.0
        %2974 = vmatpush1.msra.mxu0 0.0
        %2975 = vmatprep.subr.mxu0 0.0
        %2976 = vmatpush1.msra.mxu0 0.0
        %2977 = vmatprep.subr.mxu0 0.0
        %2978 = vmatpush1.msra.mxu0 0.0
        %2979 = vmatprep.subr.mxu0 0.0
        %2980 = vmatpush1.msra.mxu0 0.0
        %2981 = vmatprep.subr.mxu0 0.0
        %2982 = vmatpush1.msra.mxu0 0.0
        %2983 = vmatprep.subr.mxu0 0.0
        %2984 = vmatpush1.msra.mxu0 0.0
        %2985 = vmatprep.subr.mxu0 0.0
        %2986 = vmatpush1.msra.mxu0 0.0
        %2987 = vmatprep.subr.mxu0 0.0
        %2988 = vmatpush1.msra.mxu0 0.0
        %2989 = vmatprep.subr.mxu0 0.0
        %2990 = vmatpush1.msra.mxu0 0.0
        %2991 = vmatprep.subr.mxu0 0.0
        %2992 = vmatpush1.msra.mxu0 0.0
        %2993 = vmatprep.subr.mxu0 0.0
        %2994 = vmatpush1.msra.mxu0 0.0
        %2995 = vmatprep.subr.mxu0 0.0
        %2996 = vmatpush1.msra.mxu0 0.0
        %2997 = vmatprep.subr.mxu0 0.0
        %2998 = vmatpush1.msra.mxu0 0.0
        %2999 = vmatprep.subr.mxu0 0.0
        %3000 = vmatpush1.msra.mxu0 0.0
        %3001 = vmatprep.subr.mxu0 0.0
        %3002 = vmatpush1.msra.mxu0 0.0
        %3003 = vmatprep.subr.mxu0 0.0
        %3004 = vmatpush1.msra.mxu0 0.0
        %3005 = vmatprep.subr.mxu0 0.0
        %3006 = vmatpush1.msra.mxu0 0.0
        %3007 = vmatprep.subr.mxu0 0.0
        %3008 = vmatpush1.msra.mxu0 0.0
        %3009 = vmatprep.subr.mxu0 0.0
        %3010 = vmatpush1.msra.mxu0 0.0
        %3011 = vmatprep.mubr.f32.mxu0 0.0
        %3012 = vmatmul.mubr.f32.gmra.mrb[0].mxu0 %v2936
        %v3013 = vpop.f32.mrb[0].mxu0
        %v3014 = vadd.f32 0.0, %v3013
        %v3015 = vpop.f32.mrb[0].mxu0
        %3016 = vmatprep.mubr.f32.mxu0 0.0
        %3017 = vmatmul.mubr.f32.gmra.mrb[0].mxu0 %v2939
        %v3018 = vpop.f32.mrb[0].mxu0
        %v3019 = vadd.f32 0.0, %v3018
        %v3020 = vpop.f32.mrb[0].mxu0
        %3021 = vmatprep.mubr.f32.mxu0 0.0
        %3022 = vmatmul.mubr.f32.gmra.mrb[0].mxu0 %v2942
        %v3023 = vpop.f32.mrb[0].mxu0
        %v3024 = vadd.f32 0.0, %v3023
        %v3025 = vpop.f32.mrb[0].mxu0
        %3026 = vmatprep.mubr.f32.mxu0 0.0
        %3027 = vmatmul.mubr.f32.gmra.mrb[0].mxu0 %v2945
        %v3028 = vpop.f32.mrb[0].mxu0
        %v3029 = vadd.f32 0.0, %v3028
        %v3030 = vpop.f32.mrb[0].mxu0
        %3031 = vdwg.mxu0
        %v3032 = vadd.f32 %v2908, %v3014
        %v3033 = vadd.f32 %v2913, %v3019
        %v3034 = vadd.f32 %v2918, %v3024
        %v3035 = vadd.f32 %v2923, %v3029
        %s3036 = scalar_lea.vmem %s692, 32
        %v3037 = vld [vmem:[%s3036] sm:$0xff]
        %v3038 = vld [vmem:[%s3036 + $0x8] sm:$0xff]
        %v3039 = vld [vmem:[%s3036 + $0x10] sm:$0xff]
        %v3040 = vld [vmem:[%s3036 + $0x18] sm:$0xff]
        %3042 = vset.pattern.permute.xlu0 0
        %3043 = vperm.xlu0 %3042, %v3037
        %v3044 = vpop.permute.xlu0 %3043
        %3047 = vset.pattern.permute.xlu0 0
        %3048 = vperm.xlu0 %3047, %v3038
        %v3049 = vpop.permute.xlu0 %3048
        %3052 = vset.pattern.permute.xlu0 0
        %3053 = vperm.xlu0 %3052, %v3039
        %v3054 = vpop.permute.xlu0 %3053
        %3057 = vset.pattern.permute.xlu0 0
        %3058 = vperm.xlu0 %3057, %v3040
        %v3059 = vpop.permute.xlu0 %3058
        %v3061 = vadd.f32 %v3032, %v3044
        %v3062 = vadd.f32 %v3033, %v3049
        %v3063 = vadd.f32 %v3034, %v3054
        %v3064 = vadd.f32 %v3035, %v3059
        %vm3065 = vcmp.ge.f32.partialorder %v3061, 0.0
        %vm3066 = vcmp.ge.f32.partialorder %v3062, 0.0
        %vm3067 = vcmp.ge.f32.partialorder %v3063, 0.0
        %vm3068 = vcmp.ge.f32.partialorder %v3064, 0.0
        %v3069 = vstv %s2797
        %v3070 = vmul.f32 %v3069, %v3061
        %v3071 = vmul.f32 %v3069, %v3062
        %v3072 = vmul.f32 %v3069, %v3063
        %v3073 = vmul.f32 %v3069, %v3064
        %v3074 = vsel %vm3065, %v3061, %v3070
        %v3075 = vsel %vm3066, %v3062, %v3071
        %v3076 = vsel %vm3067, %v3063, %v3072
        %v3077 = vsel %vm3068, %v3064, %v3073
        %s3078 = scalar_lea.vmem %s9, 96
        %v3079 = vld [vmem:[%s3078] sm:$0xff]
        %v3080 = vld [vmem:[%s3078 + $0x8] sm:$0xff]
        %v3081 = vld [vmem:[%s3078 + $0x10] sm:$0xff]
        %v3082 = vld [vmem:[%s3078 + $0x18] sm:$0xff]
        %s3083 = scalar_lea.vmem %s10, 96
        %v3084 = vld [vmem:[%s3083] sm:$0xff]
        %v3085 = vld [vmem:[%s3083 + $0x8] sm:$0xff]
        %v3086 = vld [vmem:[%s3083 + $0x10] sm:$0xff]
        %v3087 = vld [vmem:[%s3083 + $0x18] sm:$0xff]
        %v3088 = vadd.f32 %v3074, %v3075
        %v3089 = vadd.f32 %v3088, %v3076
        %v3090 = vadd.f32 %v3089, %v3077
        %3091 = vadd.xlane.f32.xlu0 %v3090
        %v3092 = vpop.xlane.xlu0 %3091
        %v3093 = vrot.slane %v3092, 4
        %v3094 = vadd.f32 %v3092, %v3093
        %v3095 = vrot.slane %v3094, 2
        %v3096 = vadd.f32 %v3094, %v3095
        %v3097 = vrot.slane %v3096, 1
        %v3098 = vadd.f32 %v3096, %v3097
        %s3099 = vtos %v3098
        %v3100 = vrcp.pop 4096.0
        %s3101 = vtos %v3100
        %s3102 = smul.f32 %s3099, %s3101
        %v3103 = vstv %s3102
        %v3104 = vsub.f32 %v3074, %v3103
        %v3105 = vsub.f32 %v3075, %v3103
        %v3106 = vsub.f32 %v3076, %v3103
        %v3107 = vsub.f32 %v3077, %v3103
        %v3108 = vmul.f32 %v3104, %v3104
        %v3109 = vmul.f32 %v3105, %v3105
        %v3110 = vmul.f32 %v3106, %v3106
        %v3111 = vmul.f32 %v3107, %v3107
        %v3112 = vadd.f32 %v3108, %v3109
        %v3113 = vadd.f32 %v3112, %v3110
        %v3114 = vadd.f32 %v3113, %v3111
        %3115 = vadd.xlane.f32.xlu0 %v3114
        %v3116 = vpop.xlane.xlu0 %3115
        %v3117 = vrot.slane %v3116, 4
        %v3118 = vadd.f32 %v3116, %v3117
        %v3119 = vrot.slane %v3118, 2
        %v3120 = vadd.f32 %v3118, %v3119
        %v3121 = vrot.slane %v3120, 1
        %v3122 = vadd.f32 %v3120, %v3121
        %s3123 = vtos %v3122
        %v3124 = vrcp.pop 4096.0
        %s3125 = vtos %v3124
        %s3126 = smul.f32 %s3123, %s3125
        %s3127 = sadd.f32 %s3126, 1e-08
        %v3128 = vstv %s3127
        %v3129 = vrsqrt.pop %v3128
        %s3130 = vtos %v3129
        %v3131 = vstv %s3130
        %v3132 = vmul.f32 %v3104, %v3131
        %v3133 = vmul.f32 %v3105, %v3131
        %v3134 = vmul.f32 %v3106, %v3131
        %v3135 = vmul.f32 %v3107, %v3131
        %3137 = vset.pattern.permute.xlu0 0
        %3138 = vperm.xlu0 %3137, %v3079
        %v3139 = vpop.permute.xlu0 %3138
        %3142 = vset.pattern.permute.xlu0 0
        %3143 = vperm.xlu0 %3142, %v3080
        %v3144 = vpop.permute.xlu0 %3143
        %3147 = vset.pattern.permute.xlu0 0
        %3148 = vperm.xlu0 %3147, %v3081
        %v3149 = vpop.permute.xlu0 %3148
        %3152 = vset.pattern.permute.xlu0 0
        %3153 = vperm.xlu0 %3152, %v3082
        %v3154 = vpop.permute.xlu0 %3153
        %v3156 = vmul.f32 %v3132, %v3139
        %v3157 = vmul.f32 %v3133, %v3144
        %v3158 = vmul.f32 %v3134, %v3149
        %v3159 = vmul.f32 %v3135, %v3154
        %3161 = vset.pattern.permute.xlu0 0
        %3162 = vperm.xlu0 %3161, %v3084
        %v3163 = vpop.permute.xlu0 %3162
        %3166 = vset.pattern.permute.xlu0 0
        %3167 = vperm.xlu0 %3166, %v3085
        %v3168 = vpop.permute.xlu0 %3167
        %3171 = vset.pattern.permute.xlu0 0
        %3172 = vperm.xlu0 %3171, %v3086
        %v3173 = vpop.permute.xlu0 %3172
        %3176 = vset.pattern.permute.xlu0 0
        %3177 = vperm.xlu0 %3176, %v3087
        %v3178 = vpop.permute.xlu0 %3177
        %v3180 = vadd.f32 %v3156, %v3163
        %v3181 = vadd.f32 %v3157, %v3168
        %v3182 = vadd.f32 %v3158, %v3173
        %v3183 = vadd.f32 %v3159, %v3178
        %3184 = vrot.lane.b32.xlu0 %v3180, 1
        %v3185 = vpop.permute.xlu0 %3184
        %3186 = vrot.lane.b32.xlu0 %v3181, 1
        %v3187 = vpop.permute.xlu0 %3186
        %3188 = vrot.lane.b32.xlu0 %v3182, 1
        %v3189 = vpop.permute.xlu0 %3188
        %3190 = vrot.lane.b32.xlu0 %v3183, 1
        %v3191 = vpop.permute.xlu0 %3190
        %v3192 = vsel %vm1209, %v3185, 0.0
        %v3193 = vsel %vm1209, %v3187, 0.0
        %v3194 = vsel %vm1209, %v3189, 0.0
        %v3195 = vsel %vm1209, %v3191, 0.0
        %3196 = vrot.lane.b32.xlu0 %v3180, 127
        %v3197 = vpop.permute.xlu0 %3196
        %3198 = vrot.lane.b32.xlu0 %v3181, 127
        %v3199 = vpop.permute.xlu0 %3198
        %3200 = vrot.lane.b32.xlu0 %v3182, 127
        %v3201 = vpop.permute.xlu0 %3200
        %3202 = vrot.lane.b32.xlu0 %v3183, 127
        %v3203 = vpop.permute.xlu0 %3202
        %v3204 = vsel %vm1222, %v3197, 0.0
        %v3205 = vsel %vm1222, %v3199, 0.0
        %v3206 = vsel %vm1222, %v3201, 0.0
        %v3207 = vsel %vm1222, %v3203, 0.0
        %s3208 = scalar_lea.vmem %s11, 288
        %v3209 = vld [vmem:[%s3208] sm:$0xff]
        %v3210 = vld [vmem:[%s3208 + $0x8] sm:$0xff]
        %v3211 = vld [vmem:[%s3208 + $0x10] sm:$0xff]
        %v3212 = vld [vmem:[%s3208 + $0x18] sm:$0xff]
        %3214 = vset.pattern.permute.xlu0 0
        %3215 = vperm.xlu0 %3214, %v3209
        %v3216 = vpop.permute.xlu0 %3215
        %3219 = vset.pattern.permute.xlu0 0
        %3220 = vperm.xlu0 %3219, %v3210
        %v3221 = vpop.permute.xlu0 %3220
        %3224 = vset.pattern.permute.xlu0 0
        %3225 = vperm.xlu0 %3224, %v3211
        %v3226 = vpop.permute.xlu0 %3225
        %3229 = vset.pattern.permute.xlu0 0
        %3230 = vperm.xlu0 %3229, %v3212
        %v3231 = vpop.permute.xlu0 %3230
        %v3233 = vmul.f32 %v3216, %v3192
        %v3234 = vmul.f32 %v3221, %v3193
        %v3235 = vmul.f32 %v3226, %v3194
        %v3236 = vmul.f32 %v3231, %v3195
        %s3237 = scalar_lea.vmem %s11, 320
        %v3238 = vld [vmem:[%s3237] sm:$0xff]
        %v3239 = vld [vmem:[%s3237 + $0x8] sm:$0xff]
        %v3240 = vld [vmem:[%s3237 + $0x10] sm:$0xff]
        %v3241 = vld [vmem:[%s3237 + $0x18] sm:$0xff]
        %3243 = vset.pattern.permute.xlu0 0
        %3244 = vperm.xlu0 %3243, %v3238
        %v3245 = vpop.permute.xlu0 %3244
        %3248 = vset.pattern.permute.xlu0 0
        %3249 = vperm.xlu0 %3248, %v3239
        %v3250 = vpop.permute.xlu0 %3249
        %3253 = vset.pattern.permute.xlu0 0
        %3254 = vperm.xlu0 %3253, %v3240
        %v3255 = vpop.permute.xlu0 %3254
        %3258 = vset.pattern.permute.xlu0 0
        %3259 = vperm.xlu0 %3258, %v3241
        %v3260 = vpop.permute.xlu0 %3259
        %v3262 = vmul.f32 %v3245, %v3180
        %v3263 = vmul.f32 %v3250, %v3181
        %v3264 = vmul.f32 %v3255, %v3182
        %v3265 = vmul.f32 %v3260, %v3183
        %v3266 = vadd.f32 %v3233, %v3262
        %v3267 = vadd.f32 %v3234, %v3263
        %v3268 = vadd.f32 %v3235, %v3264
        %v3269 = vadd.f32 %v3236, %v3265
        %s3270 = scalar_lea.vmem %s11, 352
        %v3271 = vld [vmem:[%s3270] sm:$0xff]
        %v3272 = vld [vmem:[%s3270 + $0x8] sm:$0xff]
        %v3273 = vld [vmem:[%s3270 + $0x10] sm:$0xff]
        %v3274 = vld [vmem:[%s3270 + $0x18] sm:$0xff]
        %3276 = vset.pattern.permute.xlu0 0
        %3277 = vperm.xlu0 %3276, %v3271
        %v3278 = vpop.permute.xlu0 %3277
        %3281 = vset.pattern.permute.xlu0 0
        %3282 = vperm.xlu0 %3281, %v3272
        %v3283 = vpop.permute.xlu0 %3282
        %3286 = vset.pattern.permute.xlu0 0
        %3287 = vperm.xlu0 %3286, %v3273
        %v3288 = vpop.permute.xlu0 %3287
        %3291 = vset.pattern.permute.xlu0 0
        %3292 = vperm.xlu0 %3291, %v3274
        %v3293 = vpop.permute.xlu0 %3292
        %v3295 = vmul.f32 %v3278, %v3204
        %v3296 = vmul.f32 %v3283, %v3205
        %v3297 = vmul.f32 %v3288, %v3206
        %v3298 = vmul.f32 %v3293, %v3207
        %v3299 = vadd.f32 %v3266, %v3295
        %v3300 = vadd.f32 %v3267, %v3296
        %v3301 = vadd.f32 %v3268, %v3297
        %v3302 = vadd.f32 %v3269, %v3298
        %s3303 = scalar_lea.vmem %s12, 96
        %v3304 = vld [vmem:[%s3303] sm:$0xff]
        %v3305 = vld [vmem:[%s3303 + $0x8] sm:$0xff]
        %v3306 = vld [vmem:[%s3303 + $0x10] sm:$0xff]
        %v3307 = vld [vmem:[%s3303 + $0x18] sm:$0xff]
        %3309 = vset.pattern.permute.xlu0 0
        %3310 = vperm.xlu0 %3309, %v3304
        %v3311 = vpop.permute.xlu0 %3310
        %3314 = vset.pattern.permute.xlu0 0
        %3315 = vperm.xlu0 %3314, %v3305
        %v3316 = vpop.permute.xlu0 %3315
        %3319 = vset.pattern.permute.xlu0 0
        %3320 = vperm.xlu0 %3319, %v3306
        %v3321 = vpop.permute.xlu0 %3320
        %3324 = vset.pattern.permute.xlu0 0
        %3325 = vperm.xlu0 %3324, %v3307
        %v3326 = vpop.permute.xlu0 %3325
        %v3328 = vadd.f32 %v3299, %v3311
        %v3329 = vadd.f32 %v3300, %v3316
        %v3330 = vadd.f32 %v3301, %v3321
        %v3331 = vadd.f32 %v3302, %v3326
        %vm3332 = vcmp.ge.f32.partialorder %v3328, 0.0
        %vm3333 = vcmp.ge.f32.partialorder %v3329, 0.0
        %vm3334 = vcmp.ge.f32.partialorder %v3330, 0.0
        %vm3335 = vcmp.ge.f32.partialorder %v3331, 0.0
        %v3336 = vstv %s2798
        %v3337 = vmul.f32 %v3336, %v3328
        %v3338 = vmul.f32 %v3336, %v3329
        %v3339 = vmul.f32 %v3336, %v3330
        %v3340 = vmul.f32 %v3336, %v3331
        %v3341 = vsel %vm3332, %v3328, %v3337
        %v3342 = vsel %vm3333, %v3329, %v3338
        %v3343 = vsel %vm3334, %v3330, %v3339
        %v3344 = vsel %vm3335, %v3331, %v3340
        %s3345 = scalar_lea.vmem %s13, 96
        %v3346 = vld [vmem:[%s3345] sm:$0xff]
        %v3347 = vld [vmem:[%s3345 + $0x8] sm:$0xff]
        %v3348 = vld [vmem:[%s3345 + $0x10] sm:$0xff]
        %v3349 = vld [vmem:[%s3345 + $0x18] sm:$0xff]
        %s3350 = scalar_lea.vmem %s14, 96
        %v3351 = vld [vmem:[%s3350] sm:$0xff]
        %v3352 = vld [vmem:[%s3350 + $0x8] sm:$0xff]
        %v3353 = vld [vmem:[%s3350 + $0x10] sm:$0xff]
        %v3354 = vld [vmem:[%s3350 + $0x18] sm:$0xff]
        %v3355 = vadd.f32 %v3341, %v3342
        %v3356 = vadd.f32 %v3355, %v3343
        %v3357 = vadd.f32 %v3356, %v3344
        %3358 = vadd.xlane.f32.xlu0 %v3357
        %v3359 = vpop.xlane.xlu0 %3358
        %v3360 = vrot.slane %v3359, 4
        %v3361 = vadd.f32 %v3359, %v3360
        %v3362 = vrot.slane %v3361, 2
        %v3363 = vadd.f32 %v3361, %v3362
        %v3364 = vrot.slane %v3363, 1
        %v3365 = vadd.f32 %v3363, %v3364
        %s3366 = vtos %v3365
        %v3367 = vrcp.pop 4096.0
        %s3368 = vtos %v3367
        %s3369 = smul.f32 %s3366, %s3368
        %v3370 = vstv %s3369
        %v3371 = vsub.f32 %v3341, %v3370
        %v3372 = vsub.f32 %v3342, %v3370
        %v3373 = vsub.f32 %v3343, %v3370
        %v3374 = vsub.f32 %v3344, %v3370
        %v3375 = vmul.f32 %v3371, %v3371
        %v3376 = vmul.f32 %v3372, %v3372
        %v3377 = vmul.f32 %v3373, %v3373
        %v3378 = vmul.f32 %v3374, %v3374
        %v3379 = vadd.f32 %v3375, %v3376
        %v3380 = vadd.f32 %v3379, %v3377
        %v3381 = vadd.f32 %v3380, %v3378
        %3382 = vadd.xlane.f32.xlu0 %v3381
        %v3383 = vpop.xlane.xlu0 %3382
        %v3384 = vrot.slane %v3383, 4
        %v3385 = vadd.f32 %v3383, %v3384
        %v3386 = vrot.slane %v3385, 2
        %v3387 = vadd.f32 %v3385, %v3386
        %v3388 = vrot.slane %v3387, 1
        %v3389 = vadd.f32 %v3387, %v3388
        %s3390 = vtos %v3389
        %v3391 = vrcp.pop 4096.0
        %s3392 = vtos %v3391
        %s3393 = smul.f32 %s3390, %s3392
        %s3394 = sadd.f32 %s3393, 1e-08
        %v3395 = vstv %s3394
        %v3396 = vrsqrt.pop %v3395
        %s3397 = vtos %v3396
        %v3398 = vstv %s3397
        %v3399 = vmul.f32 %v3371, %v3398
        %v3400 = vmul.f32 %v3372, %v3398
        %v3401 = vmul.f32 %v3373, %v3398
        %v3402 = vmul.f32 %v3374, %v3398
        %3404 = vset.pattern.permute.xlu0 0
        %3405 = vperm.xlu0 %3404, %v3346
        %v3406 = vpop.permute.xlu0 %3405
        %3409 = vset.pattern.permute.xlu0 0
        %3410 = vperm.xlu0 %3409, %v3347
        %v3411 = vpop.permute.xlu0 %3410
        %3414 = vset.pattern.permute.xlu0 0
        %3415 = vperm.xlu0 %3414, %v3348
        %v3416 = vpop.permute.xlu0 %3415
        %3419 = vset.pattern.permute.xlu0 0
        %3420 = vperm.xlu0 %3419, %v3349
        %v3421 = vpop.permute.xlu0 %3420
        %v3423 = vmul.f32 %v3399, %v3406
        %v3424 = vmul.f32 %v3400, %v3411
        %v3425 = vmul.f32 %v3401, %v3416
        %v3426 = vmul.f32 %v3402, %v3421
        %3428 = vset.pattern.permute.xlu0 0
        %3429 = vperm.xlu0 %3428, %v3351
        %v3430 = vpop.permute.xlu0 %3429
        %3433 = vset.pattern.permute.xlu0 0
        %3434 = vperm.xlu0 %3433, %v3352
        %v3435 = vpop.permute.xlu0 %3434
        %3438 = vset.pattern.permute.xlu0 0
        %3439 = vperm.xlu0 %3438, %v3353
        %v3440 = vpop.permute.xlu0 %3439
        %3443 = vset.pattern.permute.xlu0 0
        %3444 = vperm.xlu0 %3443, %v3354
        %v3445 = vpop.permute.xlu0 %3444
        %v3447 = vadd.f32 %v3423, %v3430
        %v3448 = vadd.f32 %v3424, %v3435
        %v3449 = vadd.f32 %v3425, %v3440
        %v3450 = vadd.f32 %v3426, %v3445
        %s3451 = scalar_lea.vmem %s15, 48
        %v3452 = vld [vmem:[%s3451] sm:$0xff]
        %v3453 = vld [vmem:[%s3451 + $0x8] sm:$0xff]
        %s3454 = scalar_lea.vmem %s16, 48
        %v3455 = vld [vmem:[%s3454] sm:$0xff]
        %v3456 = vld [vmem:[%s3454 + $0x8] sm:$0xff]
        %3458 = vset.pattern.permute.xlu0 0
        %3459 = vperm.xlu0 %3458, %v3455
        %v3460 = vpop.permute.xlu0 %3459
        %3463 = vset.pattern.permute.xlu0 0
        %3464 = vperm.xlu0 %3463, %v3456
        %v3465 = vpop.permute.xlu0 %3464
        %v3468 = vsel %vm1480, %v3452, 0
        %v3471 = vsel %vm1480, %v3453, 0
        %3473 = vmatprep.subr.mxu0 0.0
        %3474 = vmatpush1.msra.mxu0 %v3447
        %3475 = vmatprep.subr.mxu0 0.0
        %3476 = vmatpush1.msra.mxu0 %v3448
        %3477 = vmatprep.subr.mxu0 0.0
        %3478 = vmatpush1.msra.mxu0 %v3449
        %3479 = vmatprep.subr.mxu0 0.0
        %3480 = vmatpush1.msra.mxu0 %v3450
        %3481 = vmatprep.subr.mxu0 0.0
        %3482 = vmatpush1.msra.mxu0 0.0
        %3483 = vmatprep.subr.mxu0 0.0
        %3484 = vmatpush1.msra.mxu0 0.0
        %3485 = vmatprep.subr.mxu0 0.0
        %3486 = vmatpush1.msra.mxu0 0.0
        %3487 = vmatprep.subr.mxu0 0.0
        %3488 = vmatpush1.msra.mxu0 0.0
        %3489 = vmatprep.subr.mxu0 0.0
        %3490 = vmatpush1.msra.mxu0 0.0
        %3491 = vmatprep.subr.mxu0 0.0
        %3492 = vmatpush1.msra.mxu0 0.0
        %3493 = vmatprep.subr.mxu0 0.0
        %3494 = vmatpush1.msra.mxu0 0.0
        %3495 = vmatprep.subr.mxu0 0.0
        %3496 = vmatpush1.msra.mxu0 0.0
        %3497 = vmatprep.subr.mxu0 0.0
        %3498 = vmatpush1.msra.mxu0 0.0
        %3499 = vmatprep.subr.mxu0 0.0
        %3500 = vmatpush1.msra.mxu0 0.0
        %3501 = vmatprep.subr.mxu0 0.0
        %3502 = vmatpush1.msra.mxu0 0.0
        %3503 = vmatprep.subr.mxu0 0.0
        %3504 = vmatpush1.msra.mxu0 0.0
        %3505 = vmatprep.subr.mxu0 0.0
        %3506 = vmatpush1.msra.mxu0 0.0
        %3507 = vmatprep.subr.mxu0 0.0
        %3508 = vmatpush1.msra.mxu0 0.0
        %3509 = vmatprep.subr.mxu0 0.0
        %3510 = vmatpush1.msra.mxu0 0.0
        %3511 = vmatprep.subr.mxu0 0.0
        %3512 = vmatpush1.msra.mxu0 0.0
        %3513 = vmatprep.subr.mxu0 0.0
        %3514 = vmatpush1.msra.mxu0 0.0
        %3515 = vmatprep.subr.mxu0 0.0
        %3516 = vmatpush1.msra.mxu0 0.0
        %3517 = vmatprep.subr.mxu0 0.0
        %3518 = vmatpush1.msra.mxu0 0.0
        %3519 = vmatprep.subr.mxu0 0.0
        %3520 = vmatpush1.msra.mxu0 0.0
        %3521 = vmatprep.subr.mxu0 0.0
        %3522 = vmatpush1.msra.mxu0 0.0
        %3523 = vmatprep.subr.mxu0 0.0
        %3524 = vmatpush1.msra.mxu0 0.0
        %3525 = vmatprep.subr.mxu0 0.0
        %3526 = vmatpush1.msra.mxu0 0.0
        %3527 = vmatprep.subr.mxu0 0.0
        %3528 = vmatpush1.msra.mxu0 0.0
        %3529 = vmatprep.subr.mxu0 0.0
        %3530 = vmatpush1.msra.mxu0 0.0
        %3531 = vmatprep.subr.mxu0 0.0
        %3532 = vmatpush1.msra.mxu0 0.0
        %3533 = vmatprep.subr.mxu0 0.0
        %3534 = vmatpush1.msra.mxu0 0.0
        %3535 = vmatprep.subr.mxu0 0.0
        %3536 = vmatpush1.msra.mxu0 0.0
        %3537 = vmatprep.mubr.f32.mxu0 0.0
        %3538 = vmatmul.mubr.f32.gmra.mrb[0].mxu0 %v3468
        %v3539 = vpop.f32.mrb[0].mxu0
        %v3540 = vadd.f32 %v3460, %v3539
        %v3541 = vpop.f32.mrb[0].mxu0
        %3542 = vmatprep.mubr.f32.mxu0 0.0
        %3543 = vmatmul.mubr.f32.gmra.mrb[0].mxu0 %v3471
        %v3544 = vpop.f32.mrb[0].mxu0
        %v3545 = vadd.f32 %v3465, %v3544
        %v3546 = vpop.f32.mrb[0].mxu0
        %3547 = vdwg.mxu0
        %s3548 = sld [smem:[#allocation2 + $0x8]]
        %s3549 = sld [smem:[#allocation2 + $0x9]]
        %s3550 = scalar_lea.vmem %s6, 128
        %v3551 = vld [vmem:[%s3550] sm:$0xff]
        %v3552 = vld [vmem:[%s3550 + $0x8] sm:$0xff]
        %v3553 = vld [vmem:[%s3550 + $0x10] sm:$0xff]
        %v3554 = vld [vmem:[%s3550 + $0x18] sm:$0xff]
        %s3555 = scalar_lea.vmem %s8, 128
        %v3556 = vld [vmem:[%s3555] sm:$0xff]
        %v3557 = vld [vmem:[%s3555 + $0x8] sm:$0xff]
        %v3558 = vld [vmem:[%s3555 + $0x10] sm:$0xff]
        %v3559 = vld [vmem:[%s3555 + $0x18] sm:$0xff]
        %3561 = vset.pattern.permute.xlu0 0
        %3562 = vperm.xlu0 %3561, %v3556
        %v3563 = vpop.permute.xlu0 %3562
        %3566 = vset.pattern.permute.xlu0 0
        %3567 = vperm.xlu0 %3566, %v3557
        %v3568 = vpop.permute.xlu0 %3567
        %3571 = vset.pattern.permute.xlu0 0
        %3572 = vperm.xlu0 %3571, %v3558
        %v3573 = vpop.permute.xlu0 %3572
        %3576 = vset.pattern.permute.xlu0 0
        %3577 = vperm.xlu0 %3576, %v3559
        %v3578 = vpop.permute.xlu0 %3577
        %v3581 = vsel %vm734, %v3551, 0
        %v3584 = vsel %vm734, %v3552, 0
        %v3587 = vsel %vm734, %v3553, 0
        %v3590 = vsel %vm734, %v3554, 0
        %3592 = vmatprep.subr.mxu0 0.0
        %3593 = vmatpush1.msra.mxu0 %v3540
        %3594 = vmatprep.subr.mxu0 0.0
        %3595 = vmatpush1.msra.mxu0 %v3545
        %3596 = vmatprep.subr.mxu0 0.0
        %3597 = vmatpush1.msra.mxu0 0.0
        %3598 = vmatprep.subr.mxu0 0.0
        %3599 = vmatpush1.msra.mxu0 0.0
        %3600 = vmatprep.subr.mxu0 0.0
        %3601 = vmatpush1.msra.mxu0 0.0
        %3602 = vmatprep.subr.mxu0 0.0
        %3603 = vmatpush1.msra.mxu0 0.0
        %3604 = vmatprep.subr.mxu0 0.0
        %3605 = vmatpush1.msra.mxu0 0.0
        %3606 = vmatprep.subr.mxu0 0.0
        %3607 = vmatpush1.msra.mxu0 0.0
        %3608 = vmatprep.subr.mxu0 0.0
        %3609 = vmatpush1.msra.mxu0 0.0
        %3610 = vmatprep.subr.mxu0 0.0
        %3611 = vmatpush1.msra.mxu0 0.0
        %3612 = vmatprep.subr.mxu0 0.0
        %3613 = vmatpush1.msra.mxu0 0.0
        %3614 = vmatprep.subr.mxu0 0.0
        %3615 = vmatpush1.msra.mxu0 0.0
        %3616 = vmatprep.subr.mxu0 0.0
        %3617 = vmatpush1.msra.mxu0 0.0
        %3618 = vmatprep.subr.mxu0 0.0
        %3619 = vmatpush1.msra.mxu0 0.0
        %3620 = vmatprep.subr.mxu0 0.0
        %3621 = vmatpush1.msra.mxu0 0.0
        %3622 = vmatprep.subr.mxu0 0.0
        %3623 = vmatpush1.msra.mxu0 0.0
        %3624 = vmatprep.subr.mxu0 0.0
        %3625 = vmatpush1.msra.mxu0 0.0
        %3626 = vmatprep.subr.mxu0 0.0
        %3627 = vmatpush1.msra.mxu0 0.0
        %3628 = vmatprep.subr.mxu0 0.0
        %3629 = vmatpush1.msra.mxu0 0.0
        %3630 = vmatprep.subr.mxu0 0.0
        %3631 = vmatpush1.msra.mxu0 0.0
        %3632 = vmatprep.subr.mxu0 0.0
        %3633 = vmatpush1.msra.mxu0 0.0
        %3634 = vmatprep.subr.mxu0 0.0
        %3635 = vmatpush1.msra.mxu0 0.0
        %3636 = vmatprep.subr.mxu0 0.0
        %3637 = vmatpush1.msra.mxu0 0.0
        %3638 = vmatprep.subr.mxu0 0.0
        %3639 = vmatpush1.msra.mxu0 0.0
        %3640 = vmatprep.subr.mxu0 0.0
        %3641 = vmatpush1.msra.mxu0 0.0
        %3642 = vmatprep.subr.mxu0 0.0
        %3643 = vmatpush1.msra.mxu0 0.0
        %3644 = vmatprep.subr.mxu0 0.0
        %3645 = vmatpush1.msra.mxu0 0.0
        %3646 = vmatprep.subr.mxu0 0.0
        %3647 = vmatpush1.msra.mxu0 0.0
        %3648 = vmatprep.subr.mxu0 0.0
        %3649 = vmatpush1.msra.mxu0 0.0
        %3650 = vmatprep.subr.mxu0 0.0
        %3651 = vmatpush1.msra.mxu0 0.0
        %3652 = vmatprep.subr.mxu0 0.0
        %3653 = vmatpush1.msra.mxu0 0.0
        %3654 = vmatprep.subr.mxu0 0.0
        %3655 = vmatpush1.msra.mxu0 0.0
        %3656 = vmatprep.mubr.f32.mxu0 0.0
        %3657 = vmatmul.mubr.f32.gmra.mrb[0].mxu0 %v3581
        %v3658 = vpop.f32.mrb[0].mxu0
        %v3659 = vadd.f32 %v3563, %v3658
        %v3660 = vpop.f32.mrb[0].mxu0
        %3661 = vmatprep.mubr.f32.mxu0 0.0
        %3662 = vmatmul.mubr.f32.gmra.mrb[0].mxu0 %v3584
        %v3663 = vpop.f32.mrb[0].mxu0
        %v3664 = vadd.f32 %v3568, %v3663
        %v3665 = vpop.f32.mrb[0].mxu0
        %3666 = vmatprep.mubr.f32.mxu0 0.0
        %3667 = vmatmul.mubr.f32.gmra.mrb[0].mxu0 %v3587
        %v3668 = vpop.f32.mrb[0].mxu0
        %v3669 = vadd.f32 %v3573, %v3668
        %v3670 = vpop.f32.mrb[0].mxu0
        %3671 = vmatprep.mubr.f32.mxu0 0.0
        %3672 = vmatmul.mubr.f32.gmra.mrb[0].mxu0 %v3590
        %v3673 = vpop.f32.mrb[0].mxu0
        %v3674 = vadd.f32 %v3578, %v3673
        %v3675 = vpop.f32.mrb[0].mxu0
        %3676 = vdwg.mxu0
        %vm3677 = vcmp.ge.f32.partialorder %v3659, 0.0
        %vm3678 = vcmp.ge.f32.partialorder %v3664, 0.0
        %vm3679 = vcmp.ge.f32.partialorder %v3669, 0.0
        %vm3680 = vcmp.ge.f32.partialorder %v3674, 0.0
        %v3681 = vstv %s3548
        %v3682 = vmul.f32 %v3681, %v3659
        %v3683 = vmul.f32 %v3681, %v3664
        %v3684 = vmul.f32 %v3681, %v3669
        %v3685 = vmul.f32 %v3681, %v3674
        %v3686 = vsel %vm3677, %v3659, %v3682
        %v3687 = vsel %vm3678, %v3664, %v3683
        %v3688 = vsel %vm3679, %v3669, %v3684
        %v3689 = vsel %vm3680, %v3674, %v3685
        %s3690 = scalar_lea.vmem %s9, 128
        %v3691 = vld [vmem:[%s3690] sm:$0xff]
        %v3692 = vld [vmem:[%s3690 + $0x8] sm:$0xff]
        %v3693 = vld [vmem:[%s3690 + $0x10] sm:$0xff]
        %v3694 = vld [vmem:[%s3690 + $0x18] sm:$0xff]
        %s3695 = scalar_lea.vmem %s10, 128
        %v3696 = vld [vmem:[%s3695] sm:$0xff]
        %v3697 = vld [vmem:[%s3695 + $0x8] sm:$0xff]
        %v3698 = vld [vmem:[%s3695 + $0x10] sm:$0xff]
        %v3699 = vld [vmem:[%s3695 + $0x18] sm:$0xff]
        %v3700 = vadd.f32 %v3686, %v3687
        %v3701 = vadd.f32 %v3700, %v3688
        %v3702 = vadd.f32 %v3701, %v3689
        %3703 = vadd.xlane.f32.xlu0 %v3702
        %v3704 = vpop.xlane.xlu0 %3703
        %v3705 = vrot.slane %v3704, 4
        %v3706 = vadd.f32 %v3704, %v3705
        %v3707 = vrot.slane %v3706, 2
        %v3708 = vadd.f32 %v3706, %v3707
        %v3709 = vrot.slane %v3708, 1
        %v3710 = vadd.f32 %v3708, %v3709
        %s3711 = vtos %v3710
        %v3712 = vrcp.pop 4096.0
        %s3713 = vtos %v3712
        %s3714 = smul.f32 %s3711, %s3713
        %v3715 = vstv %s3714
        %v3716 = vsub.f32 %v3686, %v3715
        %v3717 = vsub.f32 %v3687, %v3715
        %v3718 = vsub.f32 %v3688, %v3715
        %v3719 = vsub.f32 %v3689, %v3715
        %v3720 = vmul.f32 %v3716, %v3716
        %v3721 = vmul.f32 %v3717, %v3717
        %v3722 = vmul.f32 %v3718, %v3718
        %v3723 = vmul.f32 %v3719, %v3719
        %v3724 = vadd.f32 %v3720, %v3721
        %v3725 = vadd.f32 %v3724, %v3722
        %v3726 = vadd.f32 %v3725, %v3723
        %3727 = vadd.xlane.f32.xlu0 %v3726
        %v3728 = vpop.xlane.xlu0 %3727
        %v3729 = vrot.slane %v3728, 4
        %v3730 = vadd.f32 %v3728, %v3729
        %v3731 = vrot.slane %v3730, 2
        %v3732 = vadd.f32 %v3730, %v3731
        %v3733 = vrot.slane %v3732, 1
        %v3734 = vadd.f32 %v3732, %v3733
        %s3735 = vtos %v3734
        %v3736 = vrcp.pop 4096.0
        %s3737 = vtos %v3736
        %s3738 = smul.f32 %s3735, %s3737
        %s3739 = sadd.f32 %s3738, 1e-08
        %v3740 = vstv %s3739
        %v3741 = vrsqrt.pop %v3740
        %s3742 = vtos %v3741
        %v3743 = vstv %s3742
        %v3744 = vmul.f32 %v3716, %v3743
        %v3745 = vmul.f32 %v3717, %v3743
        %v3746 = vmul.f32 %v3718, %v3743
        %v3747 = vmul.f32 %v3719, %v3743
        %3749 = vset.pattern.permute.xlu0 0
        %3750 = vperm.xlu0 %3749, %v3691
        %v3751 = vpop.permute.xlu0 %3750
        %3754 = vset.pattern.permute.xlu0 0
        %3755 = vperm.xlu0 %3754, %v3692
        %v3756 = vpop.permute.xlu0 %3755
        %3759 = vset.pattern.permute.xlu0 0
        %3760 = vperm.xlu0 %3759, %v3693
        %v3761 = vpop.permute.xlu0 %3760
        %3764 = vset.pattern.permute.xlu0 0
        %3765 = vperm.xlu0 %3764, %v3694
        %v3766 = vpop.permute.xlu0 %3765
        %v3768 = vmul.f32 %v3744, %v3751
        %v3769 = vmul.f32 %v3745, %v3756
        %v3770 = vmul.f32 %v3746, %v3761
        %v3771 = vmul.f32 %v3747, %v3766
        %3773 = vset.pattern.permute.xlu0 0
        %3774 = vperm.xlu0 %3773, %v3696
        %v3775 = vpop.permute.xlu0 %3774
        %3778 = vset.pattern.permute.xlu0 0
        %3779 = vperm.xlu0 %3778, %v3697
        %v3780 = vpop.permute.xlu0 %3779
        %3783 = vset.pattern.permute.xlu0 0
        %3784 = vperm.xlu0 %3783, %v3698
        %v3785 = vpop.permute.xlu0 %3784
        %3788 = vset.pattern.permute.xlu0 0
        %3789 = vperm.xlu0 %3788, %v3699
        %v3790 = vpop.permute.xlu0 %3789
        %v3792 = vadd.f32 %v3768, %v3775
        %v3793 = vadd.f32 %v3769, %v3780
        %v3794 = vadd.f32 %v3770, %v3785
        %v3795 = vadd.f32 %v3771, %v3790
        %3796 = vrot.lane.b32.xlu0 %v3792, 2
        %v3797 = vpop.permute.xlu0 %3796
        %3798 = vrot.lane.b32.xlu0 %v3793, 2
        %v3799 = vpop.permute.xlu0 %3798
        %3800 = vrot.lane.b32.xlu0 %v3794, 2
        %v3801 = vpop.permute.xlu0 %3800
        %3802 = vrot.lane.b32.xlu0 %v3795, 2
        %v3803 = vpop.permute.xlu0 %3802
        %v3804 = vsel %vm1818, %v3797, 0.0
        %v3805 = vsel %vm1818, %v3799, 0.0
        %v3806 = vsel %vm1818, %v3801, 0.0
        %v3807 = vsel %vm1818, %v3803, 0.0
        %3808 = vrot.lane.b32.xlu0 %v3792, 126
        %v3809 = vpop.permute.xlu0 %3808
        %3810 = vrot.lane.b32.xlu0 %v3793, 126
        %v3811 = vpop.permute.xlu0 %3810
        %3812 = vrot.lane.b32.xlu0 %v3794, 126
        %v3813 = vpop.permute.xlu0 %3812
        %3814 = vrot.lane.b32.xlu0 %v3795, 126
        %v3815 = vpop.permute.xlu0 %3814
        %v3816 = vsel %vm1831, %v3809, 0.0
        %v3817 = vsel %vm1831, %v3811, 0.0
        %v3818 = vsel %vm1831, %v3813, 0.0
        %v3819 = vsel %vm1831, %v3815, 0.0
        %s3820 = scalar_lea.vmem %s11, 384
        %v3821 = vld [vmem:[%s3820] sm:$0xff]
        %v3822 = vld [vmem:[%s3820 + $0x8] sm:$0xff]
        %v3823 = vld [vmem:[%s3820 + $0x10] sm:$0xff]
        %v3824 = vld [vmem:[%s3820 + $0x18] sm:$0xff]
        %3826 = vset.pattern.permute.xlu0 0
        %3827 = vperm.xlu0 %3826, %v3821
        %v3828 = vpop.permute.xlu0 %3827
        %3831 = vset.pattern.permute.xlu0 0
        %3832 = vperm.xlu0 %3831, %v3822
        %v3833 = vpop.permute.xlu0 %3832
        %3836 = vset.pattern.permute.xlu0 0
        %3837 = vperm.xlu0 %3836, %v3823
        %v3838 = vpop.permute.xlu0 %3837
        %3841 = vset.pattern.permute.xlu0 0
        %3842 = vperm.xlu0 %3841, %v3824
        %v3843 = vpop.permute.xlu0 %3842
        %v3845 = vmul.f32 %v3828, %v3804
        %v3846 = vmul.f32 %v3833, %v3805
        %v3847 = vmul.f32 %v3838, %v3806
        %v3848 = vmul.f32 %v3843, %v3807
        %s3849 = scalar_lea.vmem %s11, 416
        %v3850 = vld [vmem:[%s3849] sm:$0xff]
        %v3851 = vld [vmem:[%s3849 + $0x8] sm:$0xff]
        %v3852 = vld [vmem:[%s3849 + $0x10] sm:$0xff]
        %v3853 = vld [vmem:[%s3849 + $0x18] sm:$0xff]
        %3855 = vset.pattern.permute.xlu0 0
        %3856 = vperm.xlu0 %3855, %v3850
        %v3857 = vpop.permute.xlu0 %3856
        %3860 = vset.pattern.permute.xlu0 0
        %3861 = vperm.xlu0 %3860, %v3851
        %v3862 = vpop.permute.xlu0 %3861
        %3865 = vset.pattern.permute.xlu0 0
        %3866 = vperm.xlu0 %3865, %v3852
        %v3867 = vpop.permute.xlu0 %3866
        %3870 = vset.pattern.permute.xlu0 0
        %3871 = vperm.xlu0 %3870, %v3853
        %v3872 = vpop.permute.xlu0 %3871
        %v3874 = vmul.f32 %v3857, %v3792
        %v3875 = vmul.f32 %v3862, %v3793
        %v3876 = vmul.f32 %v3867, %v3794
        %v3877 = vmul.f32 %v3872, %v3795
        %v3878 = vadd.f32 %v3845, %v3874
        %v3879 = vadd.f32 %v3846, %v3875
        %v3880 = vadd.f32 %v3847, %v3876
        %v3881 = vadd.f32 %v3848, %v3877
        %s3882 = scalar_lea.vmem %s11, 448
        %v3883 = vld [vmem:[%s3882] sm:$0xff]
        %v3884 = vld [vmem:[%s3882 + $0x8] sm:$0xff]
        %v3885 = vld [vmem:[%s3882 + $0x10] sm:$0xff]
        %v3886 = vld [vmem:[%s3882 + $0x18] sm:$0xff]
        %3888 = vset.pattern.permute.xlu0 0
        %3889 = vperm.xlu0 %3888, %v3883
        %v3890 = vpop.permute.xlu0 %3889
        %3893 = vset.pattern.permute.xlu0 0
        %3894 = vperm.xlu0 %3893, %v3884
        %v3895 = vpop.permute.xlu0 %3894
        %3898 = vset.pattern.permute.xlu0 0
        %3899 = vperm.xlu0 %3898, %v3885
        %v3900 = vpop.permute.xlu0 %3899
        %3903 = vset.pattern.permute.xlu0 0
        %3904 = vperm.xlu0 %3903, %v3886
        %v3905 = vpop.permute.xlu0 %3904
        %v3907 = vmul.f32 %v3890, %v3816
        %v3908 = vmul.f32 %v3895, %v3817
        %v3909 = vmul.f32 %v3900, %v3818
        %v3910 = vmul.f32 %v3905, %v3819
        %v3911 = vadd.f32 %v3878, %v3907
        %v3912 = vadd.f32 %v3879, %v3908
        %v3913 = vadd.f32 %v3880, %v3909
        %v3914 = vadd.f32 %v3881, %v3910
        %s3915 = scalar_lea.vmem %s12, 128
        %v3916 = vld [vmem:[%s3915] sm:$0xff]
        %v3917 = vld [vmem:[%s3915 + $0x8] sm:$0xff]
        %v3918 = vld [vmem:[%s3915 + $0x10] sm:$0xff]
        %v3919 = vld [vmem:[%s3915 + $0x18] sm:$0xff]
        %3921 = vset.pattern.permute.xlu0 0
        %3922 = vperm.xlu0 %3921, %v3916
        %v3923 = vpop.permute.xlu0 %3922
        %3926 = vset.pattern.permute.xlu0 0
        %3927 = vperm.xlu0 %3926, %v3917
        %v3928 = vpop.permute.xlu0 %3927
        %3931 = vset.pattern.permute.xlu0 0
        %3932 = vperm.xlu0 %3931, %v3918
        %v3933 = vpop.permute.xlu0 %3932
        %3936 = vset.pattern.permute.xlu0 0
        %3937 = vperm.xlu0 %3936, %v3919
        %v3938 = vpop.permute.xlu0 %3937
        %v3940 = vadd.f32 %v3911, %v3923
        %v3941 = vadd.f32 %v3912, %v3928
        %v3942 = vadd.f32 %v3913, %v3933
        %v3943 = vadd.f32 %v3914, %v3938
        %vm3944 = vcmp.ge.f32.partialorder %v3940, 0.0
        %vm3945 = vcmp.ge.f32.partialorder %v3941, 0.0
        %vm3946 = vcmp.ge.f32.partialorder %v3942, 0.0
        %vm3947 = vcmp.ge.f32.partialorder %v3943, 0.0
        %v3948 = vstv %s3549
        %v3949 = vmul.f32 %v3948, %v3940
        %v3950 = vmul.f32 %v3948, %v3941
        %v3951 = vmul.f32 %v3948, %v3942
        %v3952 = vmul.f32 %v3948, %v3943
        %v3953 = vsel %vm3944, %v3940, %v3949
        %v3954 = vsel %vm3945, %v3941, %v3950
        %v3955 = vsel %vm3946, %v3942, %v3951
        %v3956 = vsel %vm3947, %v3943, %v3952
        %s3957 = scalar_lea.vmem %s13, 128
        %v3958 = vld [vmem:[%s3957] sm:$0xff]
        %v3959 = vld [vmem:[%s3957 + $0x8] sm:$0xff]
        %v3960 = vld [vmem:[%s3957 + $0x10] sm:$0xff]
        %v3961 = vld [vmem:[%s3957 + $0x18] sm:$0xff]
        %s3962 = scalar_lea.vmem %s14, 128
        %v3963 = vld [vmem:[%s3962] sm:$0xff]
        %v3964 = vld [vmem:[%s3962 + $0x8] sm:$0xff]
        %v3965 = vld [vmem:[%s3962 + $0x10] sm:$0xff]
        %v3966 = vld [vmem:[%s3962 + $0x18] sm:$0xff]
        %v3967 = vadd.f32 %v3953, %v3954
        %v3968 = vadd.f32 %v3967, %v3955
        %v3969 = vadd.f32 %v3968, %v3956
        %3970 = vadd.xlane.f32.xlu0 %v3969
        %v3971 = vpop.xlane.xlu0 %3970
        %v3972 = vrot.slane %v3971, 4
        %v3973 = vadd.f32 %v3971, %v3972
        %v3974 = vrot.slane %v3973, 2
        %v3975 = vadd.f32 %v3973, %v3974
        %v3976 = vrot.slane %v3975, 1
        %v3977 = vadd.f32 %v3975, %v3976
        %s3978 = vtos %v3977
        %v3979 = vrcp.pop 4096.0
        %s3980 = vtos %v3979
        %s3981 = smul.f32 %s3978, %s3980
        %v3982 = vstv %s3981
        %v3983 = vsub.f32 %v3953, %v3982
        %v3984 = vsub.f32 %v3954, %v3982
        %v3985 = vsub.f32 %v3955, %v3982
        %v3986 = vsub.f32 %v3956, %v3982
        %v3987 = vmul.f32 %v3983, %v3983
        %v3988 = vmul.f32 %v3984, %v3984
        %v3989 = vmul.f32 %v3985, %v3985
        %v3990 = vmul.f32 %v3986, %v3986
        %v3991 = vadd.f32 %v3987, %v3988
        %v3992 = vadd.f32 %v3991, %v3989
        %v3993 = vadd.f32 %v3992, %v3990
        %3994 = vadd.xlane.f32.xlu0 %v3993
        %v3995 = vpop.xlane.xlu0 %3994
        %v3996 = vrot.slane %v3995, 4
        %v3997 = vadd.f32 %v3995, %v3996
        %v3998 = vrot.slane %v3997, 2
        %v3999 = vadd.f32 %v3997, %v3998
        %v4000 = vrot.slane %v3999, 1
        %v4001 = vadd.f32 %v3999, %v4000
        %s4002 = vtos %v4001
        %v4003 = vrcp.pop 4096.0
        %s4004 = vtos %v4003
        %s4005 = smul.f32 %s4002, %s4004
        %s4006 = sadd.f32 %s4005, 1e-08
        %v4007 = vstv %s4006
        %v4008 = vrsqrt.pop %v4007
        %s4009 = vtos %v4008
        %v4010 = vstv %s4009
        %v4011 = vmul.f32 %v3983, %v4010
        %v4012 = vmul.f32 %v3984, %v4010
        %v4013 = vmul.f32 %v3985, %v4010
        %v4014 = vmul.f32 %v3986, %v4010
        %4016 = vset.pattern.permute.xlu0 0
        %4017 = vperm.xlu0 %4016, %v3958
        %v4018 = vpop.permute.xlu0 %4017
        %4021 = vset.pattern.permute.xlu0 0
        %4022 = vperm.xlu0 %4021, %v3959
        %v4023 = vpop.permute.xlu0 %4022
        %4026 = vset.pattern.permute.xlu0 0
        %4027 = vperm.xlu0 %4026, %v3960
        %v4028 = vpop.permute.xlu0 %4027
        %4031 = vset.pattern.permute.xlu0 0
        %4032 = vperm.xlu0 %4031, %v3961
        %v4033 = vpop.permute.xlu0 %4032
        %v4035 = vmul.f32 %v4011, %v4018
        %v4036 = vmul.f32 %v4012, %v4023
        %v4037 = vmul.f32 %v4013, %v4028
        %v4038 = vmul.f32 %v4014, %v4033
        %4040 = vset.pattern.permute.xlu0 0
        %4041 = vperm.xlu0 %4040, %v3963
        %v4042 = vpop.permute.xlu0 %4041
        %4045 = vset.pattern.permute.xlu0 0
        %4046 = vperm.xlu0 %4045, %v3964
        %v4047 = vpop.permute.xlu0 %4046
        %4050 = vset.pattern.permute.xlu0 0
        %4051 = vperm.xlu0 %4050, %v3965
        %v4052 = vpop.permute.xlu0 %4051
        %4055 = vset.pattern.permute.xlu0 0
        %4056 = vperm.xlu0 %4055, %v3966
        %v4057 = vpop.permute.xlu0 %4056
        %v4059 = vadd.f32 %v4035, %v4042
        %v4060 = vadd.f32 %v4036, %v4047
        %v4061 = vadd.f32 %v4037, %v4052
        %v4062 = vadd.f32 %v4038, %v4057
        %s4063 = scalar_lea.vmem %s15, 64
        %v4064 = vld [vmem:[%s4063] sm:$0xff]
        %v4065 = vld [vmem:[%s4063 + $0x8] sm:$0xff]
        %s4066 = scalar_lea.vmem %s16, 64
        %v4067 = vld [vmem:[%s4066] sm:$0xff]
        %v4068 = vld [vmem:[%s4066 + $0x8] sm:$0xff]
        %4070 = vset.pattern.permute.xlu0 0
        %4071 = vperm.xlu0 %4070, %v4067
        %v4072 = vpop.permute.xlu0 %4071
        %4075 = vset.pattern.permute.xlu0 0
        %4076 = vperm.xlu0 %4075, %v4068
        %v4077 = vpop.permute.xlu0 %4076
        %v4080 = vsel %vm1480, %v4064, 0
        %v4083 = vsel %vm1480, %v4065, 0
        %4085 = vmatprep.subr.mxu0 0.0
        %4086 = vmatpush1.msra.mxu0 %v4059
        %4087 = vmatprep.subr.mxu0 0.0
        %4088 = vmatpush1.msra.mxu0 %v4060
        %4089 = vmatprep.subr.mxu0 0.0
        %4090 = vmatpush1.msra.mxu0 %v4061
        %4091 = vmatprep.subr.mxu0 0.0
        %4092 = vmatpush1.msra.mxu0 %v4062
        %4093 = vmatprep.subr.mxu0 0.0
        %4094 = vmatpush1.msra.mxu0 0.0
        %4095 = vmatprep.subr.mxu0 0.0
        %4096 = vmatpush1.msra.mxu0 0.0
        %4097 = vmatprep.subr.mxu0 0.0
        %4098 = vmatpush1.msra.mxu0 0.0
        %4099 = vmatprep.subr.mxu0 0.0
        %4100 = vmatpush1.msra.mxu0 0.0
        %4101 = vmatprep.subr.mxu0 0.0
        %4102 = vmatpush1.msra.mxu0 0.0
        %4103 = vmatprep.subr.mxu0 0.0
        %4104 = vmatpush1.msra.mxu0 0.0
        %4105 = vmatprep.subr.mxu0 0.0
        %4106 = vmatpush1.msra.mxu0 0.0
        %4107 = vmatprep.subr.mxu0 0.0
        %4108 = vmatpush1.msra.mxu0 0.0
        %4109 = vmatprep.subr.mxu0 0.0
        %4110 = vmatpush1.msra.mxu0 0.0
        %4111 = vmatprep.subr.mxu0 0.0
        %4112 = vmatpush1.msra.mxu0 0.0
        %4113 = vmatprep.subr.mxu0 0.0
        %4114 = vmatpush1.msra.mxu0 0.0
        %4115 = vmatprep.subr.mxu0 0.0
        %4116 = vmatpush1.msra.mxu0 0.0
        %4117 = vmatprep.subr.mxu0 0.0
        %4118 = vmatpush1.msra.mxu0 0.0
        %4119 = vmatprep.subr.mxu0 0.0
        %4120 = vmatpush1.msra.mxu0 0.0
        %4121 = vmatprep.subr.mxu0 0.0
        %4122 = vmatpush1.msra.mxu0 0.0
        %4123 = vmatprep.subr.mxu0 0.0
        %4124 = vmatpush1.msra.mxu0 0.0
        %4125 = vmatprep.subr.mxu0 0.0
        %4126 = vmatpush1.msra.mxu0 0.0
        %4127 = vmatprep.subr.mxu0 0.0
        %4128 = vmatpush1.msra.mxu0 0.0
        %4129 = vmatprep.subr.mxu0 0.0
        %4130 = vmatpush1.msra.mxu0 0.0
        %4131 = vmatprep.subr.mxu0 0.0
        %4132 = vmatpush1.msra.mxu0 0.0
        %4133 = vmatprep.subr.mxu0 0.0
        %4134 = vmatpush1.msra.mxu0 0.0
        %4135 = vmatprep.subr.mxu0 0.0
        %4136 = vmatpush1.msra.mxu0 0.0
        %4137 = vmatprep.subr.mxu0 0.0
        %4138 = vmatpush1.msra.mxu0 0.0
        %4139 = vmatprep.subr.mxu0 0.0
        %4140 = vmatpush1.msra.mxu0 0.0
        %4141 = vmatprep.subr.mxu0 0.0
        %4142 = vmatpush1.msra.mxu0 0.0
        %4143 = vmatprep.subr.mxu0 0.0
        %4144 = vmatpush1.msra.mxu0 0.0
        %4145 = vmatprep.subr.mxu0 0.0
        %4146 = vmatpush1.msra.mxu0 0.0
        %4147 = vmatprep.subr.mxu0 0.0
        %4148 = vmatpush1.msra.mxu0 0.0
        %4149 = vmatprep.mubr.f32.mxu0 0.0
        %4150 = vmatmul.mubr.f32.gmra.mrb[0].mxu0 %v4080
        %v4151 = vpop.f32.mrb[0].mxu0
        %v4152 = vadd.f32 %v4072, %v4151
        %v4153 = vpop.f32.mrb[0].mxu0
        %4154 = vmatprep.mubr.f32.mxu0 0.0
        %4155 = vmatmul.mubr.f32.gmra.mrb[0].mxu0 %v4083
        %v4156 = vpop.f32.mrb[0].mxu0
        %v4157 = vadd.f32 %v4077, %v4156
        %v4158 = vpop.f32.mrb[0].mxu0
        %4159 = vdwg.mxu0
        %v4160 = vadd.f32 %v3540, %v4152
        %v4161 = vadd.f32 %v3545, %v4157
        %s4162 = sld [smem:[#allocation2 + $0xa]]
        %s4163 = sld [smem:[#allocation2 + $0xb]]
        %s4164 = scalar_lea.vmem %s6, 160
        %v4165 = vld [vmem:[%s4164] sm:$0xff]
        %v4166 = vld [vmem:[%s4164 + $0x8] sm:$0xff]
        %v4167 = vld [vmem:[%s4164 + $0x10] sm:$0xff]
        %v4168 = vld [vmem:[%s4164 + $0x18] sm:$0xff]
        %s4169 = scalar_lea.vmem %s8, 160
        %v4170 = vld [vmem:[%s4169] sm:$0xff]
        %v4171 = vld [vmem:[%s4169 + $0x8] sm:$0xff]
        %v4172 = vld [vmem:[%s4169 + $0x10] sm:$0xff]
        %v4173 = vld [vmem:[%s4169 + $0x18] sm:$0xff]
        %4175 = vset.pattern.permute.xlu0 0
        %4176 = vperm.xlu0 %4175, %v4170
        %v4177 = vpop.permute.xlu0 %4176
        %4180 = vset.pattern.permute.xlu0 0
        %4181 = vperm.xlu0 %4180, %v4171
        %v4182 = vpop.permute.xlu0 %4181
        %4185 = vset.pattern.permute.xlu0 0
        %4186 = vperm.xlu0 %4185, %v4172
        %v4187 = vpop.permute.xlu0 %4186
        %4190 = vset.pattern.permute.xlu0 0
        %4191 = vperm.xlu0 %4190, %v4173
        %v4192 = vpop.permute.xlu0 %4191
        %v4195 = vsel %vm734, %v4165, 0
        %v4198 = vsel %vm734, %v4166, 0
        %v4201 = vsel %vm734, %v4167, 0
        %v4204 = vsel %vm734, %v4168, 0
        %4206 = vmatprep.subr.mxu0 0.0
        %4207 = vmatpush1.msra.mxu0 %v4160
        %4208 = vmatprep.subr.mxu0 0.0
        %4209 = vmatpush1.msra.mxu0 %v4161
        %4210 = vmatprep.subr.mxu0 0.0
        %4211 = vmatpush1.msra.mxu0 0.0
        %4212 = vmatprep.subr.mxu0 0.0
        %4213 = vmatpush1.msra.mxu0 0.0
        %4214 = vmatprep.subr.mxu0 0.0
        %4215 = vmatpush1.msra.mxu0 0.0
        %4216 = vmatprep.subr.mxu0 0.0
        %4217 = vmatpush1.msra.mxu0 0.0
        %4218 = vmatprep.subr.mxu0 0.0
        %4219 = vmatpush1.msra.mxu0 0.0
        %4220 = vmatprep.subr.mxu0 0.0
        %4221 = vmatpush1.msra.mxu0 0.0
        %4222 = vmatprep.subr.mxu0 0.0
        %4223 = vmatpush1.msra.mxu0 0.0
        %4224 = vmatprep.subr.mxu0 0.0
        %4225 = vmatpush1.msra.mxu0 0.0
        %4226 = vmatprep.subr.mxu0 0.0
        %4227 = vmatpush1.msra.mxu0 0.0
        %4228 = vmatprep.subr.mxu0 0.0
        %4229 = vmatpush1.msra.mxu0 0.0
        %4230 = vmatprep.subr.mxu0 0.0
        %4231 = vmatpush1.msra.mxu0 0.0
        %4232 = vmatprep.subr.mxu0 0.0
        %4233 = vmatpush1.msra.mxu0 0.0
        %4234 = vmatprep.subr.mxu0 0.0
        %4235 = vmatpush1.msra.mxu0 0.0
        %4236 = vmatprep.subr.mxu0 0.0
        %4237 = vmatpush1.msra.mxu0 0.0
        %4238 = vmatprep.subr.mxu0 0.0
        %4239 = vmatpush1.msra.mxu0 0.0
        %4240 = vmatprep.subr.mxu0 0.0
        %4241 = vmatpush1.msra.mxu0 0.0
        %4242 = vmatprep.subr.mxu0 0.0
        %4243 = vmatpush1.msra.mxu0 0.0
        %4244 = vmatprep.subr.mxu0 0.0
        %4245 = vmatpush1.msra.mxu0 0.0
        %4246 = vmatprep.subr.mxu0 0.0
        %4247 = vmatpush1.msra.mxu0 0.0
        %4248 = vmatprep.subr.mxu0 0.0
        %4249 = vmatpush1.msra.mxu0 0.0
        %4250 = vmatprep.subr.mxu0 0.0
        %4251 = vmatpush1.msra.mxu0 0.0
        %4252 = vmatprep.subr.mxu0 0.0
        %4253 = vmatpush1.msra.mxu0 0.0
        %4254 = vmatprep.subr.mxu0 0.0
        %4255 = vmatpush1.msra.mxu0 0.0
        %4256 = vmatprep.subr.mxu0 0.0
        %4257 = vmatpush1.msra.mxu0 0.0
        %4258 = vmatprep.subr.mxu0 0.0
        %4259 = vmatpush1.msra.mxu0 0.0
        %4260 = vmatprep.subr.mxu0 0.0
        %4261 = vmatpush1.msra.mxu0 0.0
        %4262 = vmatprep.subr.mxu0 0.0
        %4263 = vmatpush1.msra.mxu0 0.0
        %4264 = vmatprep.subr.mxu0 0.0
        %4265 = vmatpush1.msra.mxu0 0.0
        %4266 = vmatprep.subr.mxu0 0.0
        %4267 = vmatpush1.msra.mxu0 0.0
        %4268 = vmatprep.subr.mxu0 0.0
        %4269 = vmatpush1.msra.mxu0 0.0
        %4270 = vmatprep.mubr.f32.mxu0 0.0
        %4271 = vmatmul.mubr.f32.gmra.mrb[0].mxu0 %v4195
        %v4272 = vpop.f32.mrb[0].mxu0
        %v4273 = vadd.f32 %v4177, %v4272
        %v4274 = vpop.f32.mrb[0].mxu0
        %4275 = vmatprep.mubr.f32.mxu0 0.0
        %4276 = vmatmul.mubr.f32.gmra.mrb[0].mxu0 %v4198
        %v4277 = vpop.f32.mrb[0].mxu0
        %v4278 = vadd.f32 %v4182, %v4277
        %v4279 = vpop.f32.mrb[0].mxu0
        %4280 = vmatprep.mubr.f32.mxu0 0.0
        %4281 = vmatmul.mubr.f32.gmra.mrb[0].mxu0 %v4201
        %v4282 = vpop.f32.mrb[0].mxu0
        %v4283 = vadd.f32 %v4187, %v4282
        %v4284 = vpop.f32.mrb[0].mxu0
        %4285 = vmatprep.mubr.f32.mxu0 0.0
        %4286 = vmatmul.mubr.f32.gmra.mrb[0].mxu0 %v4204
        %v4287 = vpop.f32.mrb[0].mxu0
        %v4288 = vadd.f32 %v4192, %v4287
        %v4289 = vpop.f32.mrb[0].mxu0
        %4290 = vdwg.mxu0
        %vm4291 = vcmp.ge.f32.partialorder %v4273, 0.0
        %vm4292 = vcmp.ge.f32.partialorder %v4278, 0.0
        %vm4293 = vcmp.ge.f32.partialorder %v4283, 0.0
        %vm4294 = vcmp.ge.f32.partialorder %v4288, 0.0
        %v4295 = vstv %s4162
        %v4296 = vmul.f32 %v4295, %v4273
        %v4297 = vmul.f32 %v4295, %v4278
        %v4298 = vmul.f32 %v4295, %v4283
        %v4299 = vmul.f32 %v4295, %v4288
        %v4300 = vsel %vm4291, %v4273, %v4296
        %v4301 = vsel %vm4292, %v4278, %v4297
        %v4302 = vsel %vm4293, %v4283, %v4298
        %v4303 = vsel %vm4294, %v4288, %v4299
        %s4304 = scalar_lea.vmem %s9, 160
        %v4305 = vld [vmem:[%s4304] sm:$0xff]
        %v4306 = vld [vmem:[%s4304 + $0x8] sm:$0xff]
        %v4307 = vld [vmem:[%s4304 + $0x10] sm:$0xff]
        %v4308 = vld [vmem:[%s4304 + $0x18] sm:$0xff]
        %s4309 = scalar_lea.vmem %s10, 160
        %v4310 = vld [vmem:[%s4309] sm:$0xff]
        %v4311 = vld [vmem:[%s4309 + $0x8] sm:$0xff]
        %v4312 = vld [vmem:[%s4309 + $0x10] sm:$0xff]
        %v4313 = vld [vmem:[%s4309 + $0x18] sm:$0xff]
        %v4314 = vadd.f32 %v4300, %v4301
        %v4315 = vadd.f32 %v4314, %v4302
        %v4316 = vadd.f32 %v4315, %v4303
        %4317 = vadd.xlane.f32.xlu0 %v4316
        %v4318 = vpop.xlane.xlu0 %4317
        %v4319 = vrot.slane %v4318, 4
        %v4320 = vadd.f32 %v4318, %v4319
        %v4321 = vrot.slane %v4320, 2
        %v4322 = vadd.f32 %v4320, %v4321
        %v4323 = vrot.slane %v4322, 1
        %v4324 = vadd.f32 %v4322, %v4323
        %s4325 = vtos %v4324
        %v4326 = vrcp.pop 4096.0
        %s4327 = vtos %v4326
        %s4328 = smul.f32 %s4325, %s4327
        %v4329 = vstv %s4328
        %v4330 = vsub.f32 %v4300, %v4329
        %v4331 = vsub.f32 %v4301, %v4329
        %v4332 = vsub.f32 %v4302, %v4329
        %v4333 = vsub.f32 %v4303, %v4329
        %v4334 = vmul.f32 %v4330, %v4330
        %v4335 = vmul.f32 %v4331, %v4331
        %v4336 = vmul.f32 %v4332, %v4332
        %v4337 = vmul.f32 %v4333, %v4333
        %v4338 = vadd.f32 %v4334, %v4335
        %v4339 = vadd.f32 %v4338, %v4336
        %v4340 = vadd.f32 %v4339, %v4337
        %4341 = vadd.xlane.f32.xlu0 %v4340
        %v4342 = vpop.xlane.xlu0 %4341
        %v4343 = vrot.slane %v4342, 4
        %v4344 = vadd.f32 %v4342, %v4343
        %v4345 = vrot.slane %v4344, 2
        %v4346 = vadd.f32 %v4344, %v4345
        %v4347 = vrot.slane %v4346, 1
        %v4348 = vadd.f32 %v4346, %v4347
        %s4349 = vtos %v4348
        %v4350 = vrcp.pop 4096.0
        %s4351 = vtos %v4350
        %s4352 = smul.f32 %s4349, %s4351
        %s4353 = sadd.f32 %s4352, 1e-08
        %v4354 = vstv %s4353
        %v4355 = vrsqrt.pop %v4354
        %s4356 = vtos %v4355
        %v4357 = vstv %s4356
        %v4358 = vmul.f32 %v4330, %v4357
        %v4359 = vmul.f32 %v4331, %v4357
        %v4360 = vmul.f32 %v4332, %v4357
        %v4361 = vmul.f32 %v4333, %v4357
        %4363 = vset.pattern.permute.xlu0 0
        %4364 = vperm.xlu0 %4363, %v4305
        %v4365 = vpop.permute.xlu0 %4364
        %4368 = vset.pattern.permute.xlu0 0
        %4369 = vperm.xlu0 %4368, %v4306
        %v4370 = vpop.permute.xlu0 %4369
        %4373 = vset.pattern.permute.xlu0 0
        %4374 = vperm.xlu0 %4373, %v4307
        %v4375 = vpop.permute.xlu0 %4374
        %4378 = vset.pattern.permute.xlu0 0
        %4379 = vperm.xlu0 %4378, %v4308
        %v4380 = vpop.permute.xlu0 %4379
        %v4382 = vmul.f32 %v4358, %v4365
        %v4383 = vmul.f32 %v4359, %v4370
        %v4384 = vmul.f32 %v4360, %v4375
        %v4385 = vmul.f32 %v4361, %v4380
        %4387 = vset.pattern.permute.xlu0 0
        %4388 = vperm.xlu0 %4387, %v4310
        %v4389 = vpop.permute.xlu0 %4388
        %4392 = vset.pattern.permute.xlu0 0
        %4393 = vperm.xlu0 %4392, %v4311
        %v4394 = vpop.permute.xlu0 %4393
        %4397 = vset.pattern.permute.xlu0 0
        %4398 = vperm.xlu0 %4397, %v4312
        %v4399 = vpop.permute.xlu0 %4398
        %4402 = vset.pattern.permute.xlu0 0
        %4403 = vperm.xlu0 %4402, %v4313
        %v4404 = vpop.permute.xlu0 %4403
        %v4406 = vadd.f32 %v4382, %v4389
        %v4407 = vadd.f32 %v4383, %v4394
        %v4408 = vadd.f32 %v4384, %v4399
        %v4409 = vadd.f32 %v4385, %v4404
        %4410 = vrot.lane.b32.xlu0 %v4406, 4
        %v4411 = vpop.permute.xlu0 %4410
        %4412 = vrot.lane.b32.xlu0 %v4407, 4
        %v4413 = vpop.permute.xlu0 %4412
        %4414 = vrot.lane.b32.xlu0 %v4408, 4
        %v4415 = vpop.permute.xlu0 %4414
        %4416 = vrot.lane.b32.xlu0 %v4409, 4
        %v4417 = vpop.permute.xlu0 %4416
        %v4418 = vsel %vm2434, %v4411, 0.0
        %v4419 = vsel %vm2434, %v4413, 0.0
        %v4420 = vsel %vm2434, %v4415, 0.0
        %v4421 = vsel %vm2434, %v4417, 0.0
        %4422 = vrot.lane.b32.xlu0 %v4406, 124
        %v4423 = vpop.permute.xlu0 %4422
        %4424 = vrot.lane.b32.xlu0 %v4407, 124
        %v4425 = vpop.permute.xlu0 %4424
        %4426 = vrot.lane.b32.xlu0 %v4408, 124
        %v4427 = vpop.permute.xlu0 %4426
        %4428 = vrot.lane.b32.xlu0 %v4409, 124
        %v4429 = vpop.permute.xlu0 %4428
        %v4430 = vsel %vm2447, %v4423, 0.0
        %v4431 = vsel %vm2447, %v4425, 0.0
        %v4432 = vsel %vm2447, %v4427, 0.0
        %v4433 = vsel %vm2447, %v4429, 0.0
        %s4434 = scalar_lea.vmem %s11, 480
        %v4435 = vld [vmem:[%s4434] sm:$0xff]
        %v4436 = vld [vmem:[%s4434 + $0x8] sm:$0xff]
        %v4437 = vld [vmem:[%s4434 + $0x10] sm:$0xff]
        %v4438 = vld [vmem:[%s4434 + $0x18] sm:$0xff]
        %4440 = vset.pattern.permute.xlu0 0
        %4441 = vperm.xlu0 %4440, %v4435
        %v4442 = vpop.permute.xlu0 %4441
        %4445 = vset.pattern.permute.xlu0 0
        %4446 = vperm.xlu0 %4445, %v4436
        %v4447 = vpop.permute.xlu0 %4446
        %4450 = vset.pattern.permute.xlu0 0
        %4451 = vperm.xlu0 %4450, %v4437
        %v4452 = vpop.permute.xlu0 %4451
        %4455 = vset.pattern.permute.xlu0 0
        %4456 = vperm.xlu0 %4455, %v4438
        %v4457 = vpop.permute.xlu0 %4456
        %v4459 = vmul.f32 %v4442, %v4418
        %v4460 = vmul.f32 %v4447, %v4419
        %v4461 = vmul.f32 %v4452, %v4420
        %v4462 = vmul.f32 %v4457, %v4421
        %s4463 = scalar_lea.vmem %s11, 512
        %v4464 = vld [vmem:[%s4463] sm:$0xff]
        %v4465 = vld [vmem:[%s4463 + $0x8] sm:$0xff]
        %v4466 = vld [vmem:[%s4463 + $0x10] sm:$0xff]
        %v4467 = vld [vmem:[%s4463 + $0x18] sm:$0xff]
        %4469 = vset.pattern.permute.xlu0 0
        %4470 = vperm.xlu0 %4469, %v4464
        %v4471 = vpop.permute.xlu0 %4470
        %4474 = vset.pattern.permute.xlu0 0
        %4475 = vperm.xlu0 %4474, %v4465
        %v4476 = vpop.permute.xlu0 %4475
        %4479 = vset.pattern.permute.xlu0 0
        %4480 = vperm.xlu0 %4479, %v4466
        %v4481 = vpop.permute.xlu0 %4480
        %4484 = vset.pattern.permute.xlu0 0
        %4485 = vperm.xlu0 %4484, %v4467
        %v4486 = vpop.permute.xlu0 %4485
        %v4488 = vmul.f32 %v4471, %v4406
        %v4489 = vmul.f32 %v4476, %v4407
        %v4490 = vmul.f32 %v4481, %v4408
        %v4491 = vmul.f32 %v4486, %v4409
        %v4492 = vadd.f32 %v4459, %v4488
        %v4493 = vadd.f32 %v4460, %v4489
        %v4494 = vadd.f32 %v4461, %v4490
        %v4495 = vadd.f32 %v4462, %v4491
        %s4496 = scalar_lea.vmem %s11, 544
        %v4497 = vld [vmem:[%s4496] sm:$0xff]
        %v4498 = vld [vmem:[%s4496 + $0x8] sm:$0xff]
        %v4499 = vld [vmem:[%s4496 + $0x10] sm:$0xff]
        %v4500 = vld [vmem:[%s4496 + $0x18] sm:$0xff]
        %4502 = vset.pattern.permute.xlu0 0
        %4503 = vperm.xlu0 %4502, %v4497
        %v4504 = vpop.permute.xlu0 %4503
        %4507 = vset.pattern.permute.xlu0 0
        %4508 = vperm.xlu0 %4507, %v4498
        %v4509 = vpop.permute.xlu0 %4508
        %4512 = vset.pattern.permute.xlu0 0
        %4513 = vperm.xlu0 %4512, %v4499
        %v4514 = vpop.permute.xlu0 %4513
        %4517 = vset.pattern.permute.xlu0 0
        %4518 = vperm.xlu0 %4517, %v4500
        %v4519 = vpop.permute.xlu0 %4518
        %v4521 = vmul.f32 %v4504, %v4430
        %v4522 = vmul.f32 %v4509, %v4431
        %v4523 = vmul.f32 %v4514, %v4432
        %v4524 = vmul.f32 %v4519, %v4433
        %v4525 = vadd.f32 %v4492, %v4521
        %v4526 = vadd.f32 %v4493, %v4522
        %v4527 = vadd.f32 %v4494, %v4523
        %v4528 = vadd.f32 %v4495, %v4524
        %s4529 = scalar_lea.vmem %s12, 160
        %v4530 = vld [vmem:[%s4529] sm:$0xff]
        %v4531 = vld [vmem:[%s4529 + $0x8] sm:$0xff]
        %v4532 = vld [vmem:[%s4529 + $0x10] sm:$0xff]
        %v4533 = vld [vmem:[%s4529 + $0x18] sm:$0xff]
        %4535 = vset.pattern.permute.xlu0 0
        %4536 = vperm.xlu0 %4535, %v4530
        %v4537 = vpop.permute.xlu0 %4536
        %4540 = vset.pattern.permute.xlu0 0
        %4541 = vperm.xlu0 %4540, %v4531
        %v4542 = vpop.permute.xlu0 %4541
        %4545 = vset.pattern.permute.xlu0 0
        %4546 = vperm.xlu0 %4545, %v4532
        %v4547 = vpop.permute.xlu0 %4546
        %4550 = vset.pattern.permute.xlu0 0
        %4551 = vperm.xlu0 %4550, %v4533
        %v4552 = vpop.permute.xlu0 %4551
        %v4554 = vadd.f32 %v4525, %v4537
        %v4555 = vadd.f32 %v4526, %v4542
        %v4556 = vadd.f32 %v4527, %v4547
        %v4557 = vadd.f32 %v4528, %v4552
        %vm4558 = vcmp.ge.f32.partialorder %v4554, 0.0
        %vm4559 = vcmp.ge.f32.partialorder %v4555, 0.0
        %vm4560 = vcmp.ge.f32.partialorder %v4556, 0.0
        %vm4561 = vcmp.ge.f32.partialorder %v4557, 0.0
        %v4562 = vstv %s4163
        %v4563 = vmul.f32 %v4562, %v4554
        %v4564 = vmul.f32 %v4562, %v4555
        %v4565 = vmul.f32 %v4562, %v4556
        %v4566 = vmul.f32 %v4562, %v4557
        %v4567 = vsel %vm4558, %v4554, %v4563
        %v4568 = vsel %vm4559, %v4555, %v4564
        %v4569 = vsel %vm4560, %v4556, %v4565
        %v4570 = vsel %vm4561, %v4557, %v4566
        %s4571 = scalar_lea.vmem %s13, 160
        %v4572 = vld [vmem:[%s4571] sm:$0xff]
        %v4573 = vld [vmem:[%s4571 + $0x8] sm:$0xff]
        %v4574 = vld [vmem:[%s4571 + $0x10] sm:$0xff]
        %v4575 = vld [vmem:[%s4571 + $0x18] sm:$0xff]
        %s4576 = scalar_lea.vmem %s14, 160
        %v4577 = vld [vmem:[%s4576] sm:$0xff]
        %v4578 = vld [vmem:[%s4576 + $0x8] sm:$0xff]
        %v4579 = vld [vmem:[%s4576 + $0x10] sm:$0xff]
        %v4580 = vld [vmem:[%s4576 + $0x18] sm:$0xff]
        %v4581 = vadd.f32 %v4567, %v4568
        %v4582 = vadd.f32 %v4581, %v4569
        %v4583 = vadd.f32 %v4582, %v4570
        %4584 = vadd.xlane.f32.xlu0 %v4583
        %v4585 = vpop.xlane.xlu0 %4584
        %v4586 = vrot.slane %v4585, 4
        %v4587 = vadd.f32 %v4585, %v4586
        %v4588 = vrot.slane %v4587, 2
        %v4589 = vadd.f32 %v4587, %v4588
        %v4590 = vrot.slane %v4589, 1
        %v4591 = vadd.f32 %v4589, %v4590
        %s4592 = vtos %v4591
        %v4593 = vrcp.pop 4096.0
        %s4594 = vtos %v4593
        %s4595 = smul.f32 %s4592, %s4594
        %v4596 = vstv %s4595
        %v4597 = vsub.f32 %v4567, %v4596
        %v4598 = vsub.f32 %v4568, %v4596
        %v4599 = vsub.f32 %v4569, %v4596
        %v4600 = vsub.f32 %v4570, %v4596
        %v4601 = vmul.f32 %v4597, %v4597
        %v4602 = vmul.f32 %v4598, %v4598
        %v4603 = vmul.f32 %v4599, %v4599
        %v4604 = vmul.f32 %v4600, %v4600
        %v4605 = vadd.f32 %v4601, %v4602
        %v4606 = vadd.f32 %v4605, %v4603
        %v4607 = vadd.f32 %v4606, %v4604
        %4608 = vadd.xlane.f32.xlu0 %v4607
        %v4609 = vpop.xlane.xlu0 %4608
        %v4610 = vrot.slane %v4609, 4
        %v4611 = vadd.f32 %v4609, %v4610
        %v4612 = vrot.slane %v4611, 2
        %v4613 = vadd.f32 %v4611, %v4612
        %v4614 = vrot.slane %v4613, 1
        %v4615 = vadd.f32 %v4613, %v4614
        %s4616 = vtos %v4615
        %v4617 = vrcp.pop 4096.0
        %s4618 = vtos %v4617
        %s4619 = smul.f32 %s4616, %s4618
        %s4620 = sadd.f32 %s4619, 1e-08
        %v4621 = vstv %s4620
        %v4622 = vrsqrt.pop %v4621
        %s4623 = vtos %v4622
        %v4624 = vstv %s4623
        %v4625 = vmul.f32 %v4597, %v4624
        %v4626 = vmul.f32 %v4598, %v4624
        %v4627 = vmul.f32 %v4599, %v4624
        %v4628 = vmul.f32 %v4600, %v4624
        %4630 = vset.pattern.permute.xlu0 0
        %4631 = vperm.xlu0 %4630, %v4572
        %v4632 = vpop.permute.xlu0 %4631
        %4635 = vset.pattern.permute.xlu0 0
        %4636 = vperm.xlu0 %4635, %v4573
        %v4637 = vpop.permute.xlu0 %4636
        %4640 = vset.pattern.permute.xlu0 0
        %4641 = vperm.xlu0 %4640, %v4574
        %v4642 = vpop.permute.xlu0 %4641
        %4645 = vset.pattern.permute.xlu0 0
        %4646 = vperm.xlu0 %4645, %v4575
        %v4647 = vpop.permute.xlu0 %4646
        %v4649 = vmul.f32 %v4625, %v4632
        %v4650 = vmul.f32 %v4626, %v4637
        %v4651 = vmul.f32 %v4627, %v4642
        %v4652 = vmul.f32 %v4628, %v4647
        %4654 = vset.pattern.permute.xlu0 0
        %4655 = vperm.xlu0 %4654, %v4577
        %v4656 = vpop.permute.xlu0 %4655
        %4659 = vset.pattern.permute.xlu0 0
        %4660 = vperm.xlu0 %4659, %v4578
        %v4661 = vpop.permute.xlu0 %4660
        %4664 = vset.pattern.permute.xlu0 0
        %4665 = vperm.xlu0 %4664, %v4579
        %v4666 = vpop.permute.xlu0 %4665
        %4669 = vset.pattern.permute.xlu0 0
        %4670 = vperm.xlu0 %4669, %v4580
        %v4671 = vpop.permute.xlu0 %4670
        %v4673 = vadd.f32 %v4649, %v4656
        %v4674 = vadd.f32 %v4650, %v4661
        %v4675 = vadd.f32 %v4651, %v4666
        %v4676 = vadd.f32 %v4652, %v4671
        %s4677 = scalar_lea.vmem %s15, 80
        %v4678 = vld [vmem:[%s4677] sm:$0xff]
        %v4679 = vld [vmem:[%s4677 + $0x8] sm:$0xff]
        %s4680 = scalar_lea.vmem %s16, 80
        %v4681 = vld [vmem:[%s4680] sm:$0xff]
        %v4682 = vld [vmem:[%s4680 + $0x8] sm:$0xff]
        %4684 = vset.pattern.permute.xlu0 0
        %4685 = vperm.xlu0 %4684, %v4681
        %v4686 = vpop.permute.xlu0 %4685
        %4689 = vset.pattern.permute.xlu0 0
        %4690 = vperm.xlu0 %4689, %v4682
        %v4691 = vpop.permute.xlu0 %4690
        %v4694 = vsel %vm1480, %v4678, 0
        %v4697 = vsel %vm1480, %v4679, 0
        %4699 = vmatprep.subr.mxu0 0.0
        %4700 = vmatpush1.msra.mxu0 %v4673
        %4701 = vmatprep.subr.mxu0 0.0
        %4702 = vmatpush1.msra.mxu0 %v4674
        %4703 = vmatprep.subr.mxu0 0.0
        %4704 = vmatpush1.msra.mxu0 %v4675
        %4705 = vmatprep.subr.mxu0 0.0
        %4706 = vmatpush1.msra.mxu0 %v4676
        %4707 = vmatprep.subr.mxu0 0.0
        %4708 = vmatpush1.msra.mxu0 0.0
        %4709 = vmatprep.subr.mxu0 0.0
        %4710 = vmatpush1.msra.mxu0 0.0
        %4711 = vmatprep.subr.mxu0 0.0
        %4712 = vmatpush1.msra.mxu0 0.0
        %4713 = vmatprep.subr.mxu0 0.0
        %4714 = vmatpush1.msra.mxu0 0.0
        %4715 = vmatprep.subr.mxu0 0.0
        %4716 = vmatpush1.msra.mxu0 0.0
        %4717 = vmatprep.subr.mxu0 0.0
        %4718 = vmatpush1.msra.mxu0 0.0
        %4719 = vmatprep.subr.mxu0 0.0
        %4720 = vmatpush1.msra.mxu0 0.0
        %4721 = vmatprep.subr.mxu0 0.0
        %4722 = vmatpush1.msra.mxu0 0.0
        %4723 = vmatprep.subr.mxu0 0.0
        %4724 = vmatpush1.msra.mxu0 0.0
        %4725 = vmatprep.subr.mxu0 0.0
        %4726 = vmatpush1.msra.mxu0 0.0
        %4727 = vmatprep.subr.mxu0 0.0
        %4728 = vmatpush1.msra.mxu0 0.0
        %4729 = vmatprep.subr.mxu0 0.0
        %4730 = vmatpush1.msra.mxu0 0.0
        %4731 = vmatprep.subr.mxu0 0.0
        %4732 = vmatpush1.msra.mxu0 0.0
        %4733 = vmatprep.subr.mxu0 0.0
        %4734 = vmatpush1.msra.mxu0 0.0
        %4735 = vmatprep.subr.mxu0 0.0
        %4736 = vmatpush1.msra.mxu0 0.0
        %4737 = vmatprep.subr.mxu0 0.0
        %4738 = vmatpush1.msra.mxu0 0.0
        %4739 = vmatprep.subr.mxu0 0.0
        %4740 = vmatpush1.msra.mxu0 0.0
        %4741 = vmatprep.subr.mxu0 0.0
        %4742 = vmatpush1.msra.mxu0 0.0
        %4743 = vmatprep.subr.mxu0 0.0
        %4744 = vmatpush1.msra.mxu0 0.0
        %4745 = vmatprep.subr.mxu0 0.0
        %4746 = vmatpush1.msra.mxu0 0.0
        %4747 = vmatprep.subr.mxu0 0.0
        %4748 = vmatpush1.msra.mxu0 0.0
        %4749 = vmatprep.subr.mxu0 0.0
        %4750 = vmatpush1.msra.mxu0 0.0
        %4751 = vmatprep.subr.mxu0 0.0
        %4752 = vmatpush1.msra.mxu0 0.0
        %4753 = vmatprep.subr.mxu0 0.0
        %4754 = vmatpush1.msra.mxu0 0.0
        %4755 = vmatprep.subr.mxu0 0.0
        %4756 = vmatpush1.msra.mxu0 0.0
        %4757 = vmatprep.subr.mxu0 0.0
        %4758 = vmatpush1.msra.mxu0 0.0
        %4759 = vmatprep.subr.mxu0 0.0
        %4760 = vmatpush1.msra.mxu0 0.0
        %4761 = vmatprep.subr.mxu0 0.0
        %4762 = vmatpush1.msra.mxu0 0.0
        %4763 = vmatprep.mubr.f32.mxu0 0.0
        %4764 = vmatmul.mubr.f32.gmra.mrb[0].mxu0 %v4694
        %v4765 = vpop.f32.mrb[0].mxu0
        %v4766 = vadd.f32 %v4686, %v4765
        %v4767 = vpop.f32.mrb[0].mxu0
        %4768 = vmatprep.mubr.f32.mxu0 0.0
        %4769 = vmatmul.mubr.f32.gmra.mrb[0].mxu0 %v4697
        %v4770 = vpop.f32.mrb[0].mxu0
        %v4771 = vadd.f32 %v4691, %v4770
        %v4772 = vpop.f32.mrb[0].mxu0
        %4773 = vdwg.mxu0
        %v4774 = vadd.f32 %v4160, %v4766
        %v4775 = vadd.f32 %v4161, %v4771
        %v4776 = vld [vmem:[%s17] sm:$0xff]
        %v4777 = vld [vmem:[%s17 + $0x8] sm:$0xff]
        %v4778 = vld [vmem:[%s18] sm:$0xff]
        %v4779 = vld [vmem:[%s18 + $0x8] sm:$0xff]
        %4781 = vset.pattern.permute.xlu0 0
        %4782 = vperm.xlu0 %4781, %v4778
        %v4783 = vpop.permute.xlu0 %4782
        %4786 = vset.pattern.permute.xlu0 0
        %4787 = vperm.xlu0 %4786, %v4779
        %v4788 = vpop.permute.xlu0 %4787
        %v4791 = vsel %vm734, %v4776, 0
        %v4794 = vsel %vm734, %v4777, 0
        %4796 = vmatprep.subr.mxu0 0.0
        %4797 = vmatpush1.msra.mxu0 %v4774
        %4798 = vmatprep.subr.mxu0 0.0
        %4799 = vmatpush1.msra.mxu0 %v4775
        %4800 = vmatprep.subr.mxu0 0.0
        %4801 = vmatpush1.msra.mxu0 0.0
        %4802 = vmatprep.subr.mxu0 0.0
        %4803 = vmatpush1.msra.mxu0 0.0
        %4804 = vmatprep.subr.mxu0 0.0
        %4805 = vmatpush1.msra.mxu0 0.0
        %4806 = vmatprep.subr.mxu0 0.0
        %4807 = vmatpush1.msra.mxu0 0.0
        %4808 = vmatprep.subr.mxu0 0.0
        %4809 = vmatpush1.msra.mxu0 0.0
        %4810 = vmatprep.subr.mxu0 0.0
        %4811 = vmatpush1.msra.mxu0 0.0
        %4812 = vmatprep.subr.mxu0 0.0
        %4813 = vmatpush1.msra.mxu0 0.0
        %4814 = vmatprep.subr.mxu0 0.0
        %4815 = vmatpush1.msra.mxu0 0.0
        %4816 = vmatprep.subr.mxu0 0.0
        %4817 = vmatpush1.msra.mxu0 0.0
        %4818 = vmatprep.subr.mxu0 0.0
        %4819 = vmatpush1.msra.mxu0 0.0
        %4820 = vmatprep.subr.mxu0 0.0
        %4821 = vmatpush1.msra.mxu0 0.0
        %4822 = vmatprep.subr.mxu0 0.0
        %4823 = vmatpush1.msra.mxu0 0.0
        %4824 = vmatprep.subr.mxu0 0.0
        %4825 = vmatpush1.msra.mxu0 0.0
        %4826 = vmatprep.subr.mxu0 0.0
        %4827 = vmatpush1.msra.mxu0 0.0
        %4828 = vmatprep.subr.mxu0 0.0
        %4829 = vmatpush1.msra.mxu0 0.0
        %4830 = vmatprep.subr.mxu0 0.0
        %4831 = vmatpush1.msra.mxu0 0.0
        %4832 = vmatprep.subr.mxu0 0.0
        %4833 = vmatpush1.msra.mxu0 0.0
        %4834 = vmatprep.subr.mxu0 0.0
        %4835 = vmatpush1.msra.mxu0 0.0
        %4836 = vmatprep.subr.mxu0 0.0
        %4837 = vmatpush1.msra.mxu0 0.0
        %4838 = vmatprep.subr.mxu0 0.0
        %4839 = vmatpush1.msra.mxu0 0.0
        %4840 = vmatprep.subr.mxu0 0.0
        %4841 = vmatpush1.msra.mxu0 0.0
        %4842 = vmatprep.subr.mxu0 0.0
        %4843 = vmatpush1.msra.mxu0 0.0
        %4844 = vmatprep.subr.mxu0 0.0
        %4845 = vmatpush1.msra.mxu0 0.0
        %4846 = vmatprep.subr.mxu0 0.0
        %4847 = vmatpush1.msra.mxu0 0.0
        %4848 = vmatprep.subr.mxu0 0.0
        %4849 = vmatpush1.msra.mxu0 0.0
        %4850 = vmatprep.subr.mxu0 0.0
        %4851 = vmatpush1.msra.mxu0 0.0
        %4852 = vmatprep.subr.mxu0 0.0
        %4853 = vmatpush1.msra.mxu0 0.0
        %4854 = vmatprep.subr.mxu0 0.0
        %4855 = vmatpush1.msra.mxu0 0.0
        %4856 = vmatprep.subr.mxu0 0.0
        %4857 = vmatpush1.msra.mxu0 0.0
        %4858 = vmatprep.subr.mxu0 0.0
        %4859 = vmatpush1.msra.mxu0 0.0
        %4860 = vmatprep.mubr.f32.mxu0 0.0
        %4861 = vmatmul.mubr.f32.gmra.mrb[0].mxu0 %v4791
        %v4862 = vpop.f32.mrb[0].mxu0
        %v4863 = vadd.f32 %v4783, %v4862
        %v4864 = vpop.f32.mrb[0].mxu0
        %4865 = vmatprep.mubr.f32.mxu0 0.0
        %4866 = vmatmul.mubr.f32.gmra.mrb[0].mxu0 %v4794
        %v4867 = vpop.f32.mrb[0].mxu0
        %v4868 = vadd.f32 %v4788, %v4867
        %v4869 = vpop.f32.mrb[0].mxu0
        %4870 = vdwg.mxu0
        %v4871 = vmax.f32 %v4863, 0.0
        %v4872 = vmax.f32 %v4868, 0.0
        %v4873 = vmul.f32 %v693, %v4871
        %v4874 = vmul.f32 %v694, %v4872
        %4875 = vst [vmem:[%s670] sm:$0xff] %v4873
        %4876 = vst [vmem:[%s670 + $0x8] sm:$0xff] %v4874
        %s4877 = sand.u32 %s461, 1
        %s4878 = scalar_lea.sflag [#allocation3], %s4877
        %s4879 = sand.u32 %s461, 1
        %s4880 = smul.addr %s4879, 16
        %s4881 = scalar_lea.vmem [#allocation5], %s4880
        %s4882 = sand.u32 %s487, 1
        %s4883 = scalar_lea.sflag [#allocation7], %s4882
        %s4884 = sand.u32 %s487, 1
        %s4885 = smul.addr %s4884, 32
        %s4886 = scalar_lea.vmem [#allocation6], %s4885
        // Predicated region
        $region101: #{tpu_custom_call.1} parent=95 // pred_check
          %p4887 = pneg %p471
        $region102: #{tpu_custom_call.1} parent=95 // pred_check_branch
          %4889 = sbr.rel (%p4887) target = $region104
        $region103: #{tpu_custom_call.1} parent=95 // pred_region
          %s4891 = ssub.s32 256, 256
          %4892 = vsyncadd %s4878, %s4891
          %s4893 = smul.addr %s39, 2
          %s4894 = smul.addr %s4893, 128
          %s4895 = scalar_lea.hbm %s19, %s4894
          %s4896 = sshll.u32 %s4881, 4
          %s4897 = int_to_ptr.vmem [resolvable:$true] %s4896
          %4902 = dma.vmem_to_hbm [thread:$0]  %s4897, 256, %s4895, %s4878, 128, 128, 8
        $region104: #{tpu_custom_call.1} parent=95 // pred_fallthru
          _
        // Predicated region
        $region105: #{tpu_custom_call.1} parent=95 // pred_check
          %p4903 = pneg %p497
        $region106: #{tpu_custom_call.1} parent=95 // pred_check_branch
          %4905 = sbr.rel (%p4903) target = $region108
        $region107: #{tpu_custom_call.1} parent=95 // pred_region
          %s4907 = ssub.s32 512, 512
          %4908 = vsyncadd %s4883, %s4907
          %s4909 = smul.addr %s39, 4
          %s4910 = smul.addr %s4909, 128
          %s4911 = scalar_lea.hbm %s20, %s4910
          %s4912 = sshll.u32 %s4886, 4
          %s4913 = int_to_ptr.vmem [resolvable:$true] %s4912
          %4918 = dma.vmem_to_hbm [thread:$0]  %s4913, 512, %s4911, %s4883, 128, 128, 8
        $region108: #{tpu_custom_call.1} parent=95 // pred_fallthru
          _
      $region96: #{tpu_custom_call.1} parent=5 // pred_fallthru
        _
      %p4919 = scmp.le.s32.totalorder 2, %s34
      // Predicated region
      $region109: #{tpu_custom_call.1} parent=5 // pred_check
        %p4920 = pneg %p4919
      $region110: #{tpu_custom_call.1} parent=5 // pred_check_branch
        %4922 = sbr.rel (%p4920) target = $region112
      $region111: #{tpu_custom_call.1} parent=5 // pred_region
        %s4923 = ssub.s32 %s34, 2
        // Predicated region
        $region113: #{tpu_custom_call.1} parent=111 // pred_check
          %p4924 = pneg %p477
        $region114: #{tpu_custom_call.1} parent=111 // pred_check_branch
          %4926 = sbr.rel (%p4924) target = $region116
        $region115: #{tpu_custom_call.1} parent=111 // pred_region
          %s4927 = sand.u32 %s462, 1
          %s4928 = scalar_lea.sflag [#allocation3], %s4927
          %s4929 = sand.u32 %s462, 1
          %s4930 = smul.addr %s4929, 16
          %s4931 = scalar_lea.vmem [#allocation5], %s4930
          %4932 = dma.done %s4928, 256
        $region116: #{tpu_custom_call.1} parent=111 // pred_fallthru
          _
        // Predicated region
        $region117: #{tpu_custom_call.1} parent=111 // pred_check
          %p4933 = pneg %p503
        $region118: #{tpu_custom_call.1} parent=111 // pred_check_branch
          %4935 = sbr.rel (%p4933) target = $region120
        $region119: #{tpu_custom_call.1} parent=111 // pred_region
          %s4936 = sand.u32 %s488, 1
          %s4937 = scalar_lea.sflag [#allocation7], %s4936
          %s4938 = sand.u32 %s488, 1
          %s4939 = smul.addr %s4938, 32
          %s4940 = scalar_lea.vmem [#allocation6], %s4939
          %4941 = dma.done %s4937, 512
        $region120: #{tpu_custom_call.1} parent=111 // pred_fallthru
          _
      $region112: #{tpu_custom_call.1} parent=5 // pred_fallthru
        _
    $region6: #{tpu_custom_call.1} parent=1 // loop_footer
      %s38 = sadd.s32 1, %s34
    $region7: #{tpu_custom_call.1} parent=1 // loop_footer_branch
      %33 = sbr.rel target = $region3
    $region8: #{tpu_custom_call.1} parent=1 // loop_exit
      _
    %4942 = vsyncpa [#allocation3], 1
    %s4943 = scalar_lea.sflag [#allocation3], 1
    %4944 = vsyncpa %s4943, 1
    %4945 = vsyncpa [#allocation7], 1
    %s4946 = scalar_lea.sflag [#allocation7], 1
    %4947 = vsyncpa %s4946, 1
    %4948 = vsyncpa [#allocation4], 1
    %s4949 = scalar_lea.sflag [#allocation4], 1
    %4950 = vsyncpa %s4949, 1

</llo_original>
